<compile_context>
chip_gen: v6e
topology: v6e:2x2x1
jax: 0.10.0
libtpu: 0.0.40
codegen_flags: <defaults>
</compile_context>

<pallas_src>
import jax
import jax.numpy as jnp
from jax.experimental import pallas as pl
from jax.experimental.pallas import tpu as pltpu

LANE = 128


def _round_up(x, m):
    return ((x + m - 1) // m) * m


def _largest_aligned_divisor(n, align, cap):
    """Largest multiple of `align` that divides `n` and is <= cap (None if none)."""
    best = None
    t = align
    cap = min(cap, n)
    while t <= cap:
        if n % t == 0:
            best = t
        t += align
    return best


def _gelu_tanh(x):
    # tanh-approximation GELU (VPU + one EUP tanh per element).
    # TODO(synk): PyTorch nn.GELU() default is the exact erf-based GELU; erf has no
    # guaranteed Mosaic lowering, so the tanh approximation (<~1e-3 deviation) is used
    # here and mirrored in the pure-JAX reference.
    c = jnp.float32(0.7978845608028654)  # sqrt(2/pi)
    return 0.5 * x * (1.0 + jnp.tanh(c * (x + 0.044715 * x * x * x)))


def _sigmoid(x):
    # sigmoid via tanh: one EUP transcendental, no VALU divide sequence.
    return 0.5 * (jnp.tanh(0.5 * x) + 1.0)


# ----------------------------------------------------------------------------
# Path 1: tiny C/H -> lane-dense VPU kernel, weights as SMEM scalars.
# ----------------------------------------------------------------------------
def _mlp_c_vpu_kernel(x_ref, w1_ref, w2_ref, o_ref):
    # x_ref / o_ref: [C, tm, 128] VMEM (channel-major, lane-dense)
    # w1_ref: [C, H] SMEM scalars, w2_ref: [H, C] SMEM scalars
    C, H = w1_ref.shape
    x = x_ref[...].astype(jnp.float32)              # [C, tm, 128]
    xs = [x[c] for c in range(C)]                   # per-channel [tm, 128] slabs
    acc = [jnp.zeros_like(xs[0]) for _ in range(C)]
    for j in range(H):                              # unrolled: H is small on this path
        h = xs[0] * w1_ref[0, j]
        for c in range(1, C):
            h = h + xs[c] * w1_ref[c, j]
        h = _gelu_tanh(h)
        # Dropout(p=0.0) -> identity.
        for c in range(C):
            acc[c] = acc[c] + h * w2_ref[j, c]
    for c in range(C):
        o_ref[c, :, :] = (xs[c] * _sigmoid(acc[c])).astype(o_ref.dtype)


def _mlp_c_small(x, w1, w2, *, block_sublanes=32):
    B, T, S, C = x.shape
    M = B * T * S

    # Channel-major, lane-dense layout [C, Mr, 128].  The transpose/reshape is
    # wrapper-side layout plumbing (XLA); it buys fully dense (8,128) vregs and
    # unmasked 128-lane stores inside the kernel (the biggest lever at C=4).
    Mp = _round_up(M, LANE)
    xt = x.reshape(M, C).T                          # [C, M]
    if Mp != M:
        xt = jnp.pad(xt, ((0, 0), (0, Mp - M)))
    Mr = Mp // LANE
    xt = xt.reshape(C, Mr, LANE)

    # Sublane tile: multiple of 8 that divides Mr (no row padding / ragged tiles),
    # capped so x slabs + accumulators stay in vregs; prefer >=2 grid steps so v7x's
    # second TensorCore has work when Mr is large.  At the demo shape Mr=2 so the
    # block equals the full extent (a (8,128)-legal single-step grid).
    cap = block_sublanes if Mr < 16 else min(block_sublanes, Mr // 2)
    tm = (_largest_aligned_divisor(Mr, 8, cap)
          or _largest_aligned_divisor(Mr, 8, block_sublanes)
          or Mr)

    out = pl.pallas_call(
        _mlp_c_vpu_kernel,
        out_shape=jax.ShapeDtypeStruct((C, Mr, LANE), x.dtype),
        grid_spec=pltpu.PrefetchScalarGridSpec(
            num_scalar_prefetch=0,
            grid=(Mr // tm,),
            in_specs=[
                pl.BlockSpec((C, tm, LANE), lambda i: (0, i, 0)),
                pl.BlockSpec(memory_space=pltpu.MemorySpace.SMEM),   # W1 scalars
                pl.BlockSpec(memory_space=pltpu.MemorySpace.SMEM),   # W2 scalars
            ],
            out_specs=pl.BlockSpec((C, tm, LANE), lambda i: (0, i, 0)),
        ),
        compiler_params=pltpu.CompilerParams(
            dimension_semantics=("parallel",),
            vmem_limit_bytes=32 * 1024 * 1024,
        ),
    )(xt, w1, w2)

    return out.reshape(C, Mp)[:, :M].T.reshape(B, T, S, C)


# ----------------------------------------------------------------------------
# Path 2: lane-dense C/H -> bf16 MXU kernel with hidden-dim streaming.
# ----------------------------------------------------------------------------
def _mlp_c_mxu_kernel(x_ref, w1_ref, w2_ref, o_ref, acc_ref):
    # Grid: (rows "parallel", hidden chunks "arbitrary").
    # x_ref: [tm, C] f32 (same block every hidden step -> stays VMEM-resident),
    # w1_ref: [C, th] bf16, w2_ref: [th, C] bf16, acc_ref: [tm, C] f32 scratch.
    hk = pl.program_id(1)

    @pl.when(hk == 0)
    def _init():
        acc_ref[...] = jnp.zeros_like(acc_ref)

    xb = x_ref[...].astype(jnp.bfloat16)
    h = jnp.dot(xb, w1_ref[...], preferred_element_type=jnp.float32)   # [tm, th] f32
    h = _gelu_tanh(h)                                                  # f32 elementwise
    # Dropout(p=0.0) -> identity.
    acc_ref[...] += jnp.dot(h.astype(jnp.bfloat16), w2_ref[...],
                            preferred_element_type=jnp.float32)        # [tm, C]

    @pl.when(hk == pl.num_programs(1) - 1)
    def _finalize():
        gate = _sigmoid(acc_ref[...])
        o_ref[...] = (x_ref[...].astype(jnp.float32) * gate).astype(o_ref.dtype)


def _mlp_c_mxu(x, w1, w2, *, block_rows=512, hidden_block=512):
    B, T, S, C = x.shape
    _, H = w1.shape
    M = B * T * S
    xf = x.reshape(M, C)

    # bf16 MXU operands (f32 accumulation): higher matmul throughput on v6e/v7x and
    # half the weight DMA / VMEM footprint.
    w1b = w1.astype(jnp.bfloat16)
    w2b = w2.astype(jnp.bfloat16)

    # Row tile: multiple of 8 that divides M (avoids pad/slice HBM round trips),
    # capped so the "parallel" row axis has >=2 steps when possible (v7x megacore).
    cap = block_rows if M < 16 else min(block_rows, M // 2)
    tm = (_largest_aligned_divisor(M, 8, cap)
          or _largest_aligned_divisor(M, 8, block_rows))
    Mp = M
    if tm is None:  # ragged M: fall back to padding (one extra HBM round trip)
        tm = min(_round_up(M, 8), block_rows)
        Mp = _round_up(M, tm)
        xf = jnp.pad(xf, ((0, Mp - M), (0, 0)))

    # Hidden chunk: stream W1/W2 in 128-aligned chunks so only [tm, th] + [tm, C]
    # are live per step (no [tm, H] f32 intermediate / weight-resident VMEM blowup).
    th = _largest_aligned_divisor(H, 128, hidden_block) or H

    out = pl.pallas_call(
        _mlp_c_mxu_kernel,
        out_shape=jax.ShapeDtypeStruct((Mp, C), x.dtype),
        grid_spec=pltpu.PrefetchScalarGridSpec(
            num_scalar_prefetch=0,
            grid=(Mp // tm, H // th),
            in_specs=[
                pl.BlockSpec((tm, C), lambda i, k: (i, 0)),   # x row tile (resident over k)
                pl.BlockSpec((C, th), lambda i, k: (0, k)),   # W1 hidden chunk (bf16)
                pl.BlockSpec((th, C), lambda i, k: (k, 0)),   # W2 hidden chunk (bf16)
            ],
            out_specs=pl.BlockSpec((tm, C), lambda i, k: (i, 0)),
            scratch_shapes=[pltpu.VMEM((tm, C), jnp.float32)],
        ),
        compiler_params=pltpu.CompilerParams(
            dimension_semantics=("parallel", "arbitrary"),
            vmem_limit_bytes=32 * 1024 * 1024,
        ),
    )(xf, w1b, w2b)

    if Mp != M:
        out = out[:M]
    return out.reshape(B, T, S, C)


# ----------------------------------------------------------------------------
# Dispatcher + pure-JAX reference.
# ----------------------------------------------------------------------------
def mlp_c_pallas(x, w1, w2, *, block_rows=512, hidden_block=512, block_sublanes=32):
    """Mlp_C forward.  x: [B,T,S,C]; w1: [C,H]; w2: [H,C] (input-major, i.e. the
    transposes of the torch nn.Linear weights)."""
    B, T, S, C = x.shape
    Cw, H = w1.shape
    assert Cw == C and w2.shape == (H, C), "weights must be [C,H] and [H,C]"
    if C <= 16 and C * H <= 4096:
        return _mlp_c_small(x, w1, w2, block_sublanes=block_sublanes)
    return _mlp_c_mxu(x, w1, w2, block_rows=block_rows, hidden_block=hidden_block)


def mlp_c_ref(x, w1, w2):
    hp = jnp.einsum("btsc,ch->btsh", x, w1, precision=jax.lax.Precision.HIGHEST)
    h = _gelu_tanh(hp)
    g = jnp.einsum("btsh,hc->btsc", h, w2, precision=jax.lax.Precision.HIGHEST)
    return x * jax.nn.sigmoid(g)


if __name__ == "__main__":
    key = jax.random.PRNGKey(0)

    # Small shapes implied by the forward: x is [b, t, s, c].
    B, T, S, C, Hid = 2, 8, 16, 4, 32
    kx, k1, k2, k3, k4, k5 = jax.random.split(key, 6)

    x = jax.random.normal(kx, (B, T, S, C), dtype=jnp.float32)
    w1 = jax.random.normal(k1, (C, Hid), dtype=jnp.float32) * (1.0 / (C ** 0.5))
    w2 = jax.random.normal(k2, (Hid, C), dtype=jnp.float32) * (1.0 / (Hid ** 0.5))

    out = jax.block_until_ready(mlp_c_pallas(x, w1, w2))
    ref = mlp_c_ref(x, w1, w2)
    assert out.shape == (B, T, S, C)
    assert jnp.allclose(out, ref, atol=1e-3, rtol=1e-3), "small-channel path mismatch"

    # Also exercise the lane-dense bf16 MXU path (C, H multiples of 128).
    C2, H2 = 128, 256
    x2 = jax.random.normal(k3, (B, T, S, C2), dtype=jnp.float32)
    w1b = jax.random.normal(k4, (C2, H2), dtype=jnp.float32) * (1.0 / (C2 ** 0.5))
    w2b = jax.random.normal(k5, (H2, C2), dtype=jnp.float32) * (1.0 / (H2 ** 0.5))

    out2 = jax.block_until_ready(mlp_c_pallas(x2, w1b, w2b))
    ref2 = mlp_c_ref(x2, w1b, w2b)
    assert out2.shape == x2.shape
    assert float(jnp.max(jnp.abs(out2 - ref2))) < 5e-2, "MXU path mismatch"

    print("KERNEL_OK")
</pallas_src>

<mosaic_0001>
module attributes {stable_mosaic.version = 11 : i64} {
  func.func @_mlp_c_vpu_kernel(%arg0: i32, %arg1: memref<4x2x128xf32, #tpu.memory_space<vmem>>, %arg2: memref<4x32xf32, #tpu.memory_space<smem>>, %arg3: memref<32x4xf32, #tpu.memory_space<smem>>, %arg4: memref<4x2x128xf32, #tpu.memory_space<vmem>>) attributes {dimension_semantics = [#tpu.dimension_semantics<parallel>], iteration_bounds = array<i64: 1>, scalar_prefetch = 0 : i64, scratch_operands = 0 : i64, tpu.core_type = #tpu.core_type<tc>, window_params = [{transform_indices = @transform_0, window_bounds = array<i64: 4, 2, 128>}, {transform_indices = @transform_1, window_bounds = array<i64: 4, 32>}, {transform_indices = @transform_2, window_bounds = array<i64: 32, 4>}, {transform_indices = @transform_3, window_bounds = array<i64: 4, 2, 128>}]} {
    %c0 = arith.constant 0 : index
    %c0_0 = arith.constant 0 : index
    %c0_1 = arith.constant 0 : index
    %0 = vector.load %arg1[%c0, %c0_0, %c0_1] : memref<4x2x128xf32, #tpu.memory_space<vmem>>, vector<4x2x128xf32>
    %1 = vector.extract_strided_slice %0 {offsets = [0, 0, 0], sizes = [1, 2, 128], strides = [1, 1, 1]} : vector<4x2x128xf32> to vector<1x2x128xf32>
    %2 = vector.shape_cast %1 : vector<1x2x128xf32> to vector<2x128xf32>
    %3 = vector.extract_strided_slice %0 {offsets = [1, 0, 0], sizes = [1, 2, 128], strides = [1, 1, 1]} : vector<4x2x128xf32> to vector<1x2x128xf32>
    %4 = vector.shape_cast %3 : vector<1x2x128xf32> to vector<2x128xf32>
    %5 = vector.extract_strided_slice %0 {offsets = [2, 0, 0], sizes = [1, 2, 128], strides = [1, 1, 1]} : vector<4x2x128xf32> to vector<1x2x128xf32>
    %6 = vector.shape_cast %5 : vector<1x2x128xf32> to vector<2x128xf32>
    %7 = vector.extract_strided_slice %0 {offsets = [3, 0, 0], sizes = [1, 2, 128], strides = [1, 1, 1]} : vector<4x2x128xf32> to vector<1x2x128xf32>
    %8 = vector.shape_cast %7 : vector<1x2x128xf32> to vector<2x128xf32>
    %cst = arith.constant 0.000000e+00 : f32
    %9 = vector.broadcast %cst : f32 to vector<2x128xf32>
    %cst_2 = arith.constant 0.000000e+00 : f32
    %10 = vector.broadcast %cst_2 : f32 to vector<2x128xf32>
    %cst_3 = arith.constant 0.000000e+00 : f32
    %11 = vector.broadcast %cst_3 : f32 to vector<2x128xf32>
    %cst_4 = arith.constant 0.000000e+00 : f32
    %12 = vector.broadcast %cst_4 : f32 to vector<2x128xf32>
    %c0_5 = arith.constant 0 : index
    %c0_6 = arith.constant 0 : index
    %13 = memref.load %arg2[%c0_5, %c0_6] : memref<4x32xf32, #tpu.memory_space<smem>>
    %14 = vector.broadcast %13 : f32 to vector<2x128xf32>
    %15 = arith.mulf %2, %14 : vector<2x128xf32>
    %c1 = arith.constant 1 : index
    %c0_7 = arith.constant 0 : index
    %16 = memref.load %arg2[%c1, %c0_7] : memref<4x32xf32, #tpu.memory_space<smem>>
    %17 = vector.broadcast %16 : f32 to vector<2x128xf32>
    %18 = arith.mulf %4, %17 : vector<2x128xf32>
    %19 = arith.addf %15, %18 : vector<2x128xf32>
    %c2 = arith.constant 2 : index
    %c0_8 = arith.constant 0 : index
    %20 = memref.load %arg2[%c2, %c0_8] : memref<4x32xf32, #tpu.memory_space<smem>>
    %21 = vector.broadcast %20 : f32 to vector<2x128xf32>
    %22 = arith.mulf %6, %21 : vector<2x128xf32>
    %23 = arith.addf %19, %22 : vector<2x128xf32>
    %c3 = arith.constant 3 : index
    %c0_9 = arith.constant 0 : index
    %24 = memref.load %arg2[%c3, %c0_9] : memref<4x32xf32, #tpu.memory_space<smem>>
    %25 = vector.broadcast %24 : f32 to vector<2x128xf32>
    %26 = arith.mulf %8, %25 : vector<2x128xf32>
    %27 = arith.addf %23, %26 : vector<2x128xf32>
    %cst_10 = arith.constant 5.000000e-01 : f32
    %28 = vector.broadcast %cst_10 : f32 to vector<2x128xf32>
    %29 = arith.mulf %28, %27 : vector<2x128xf32>
    %cst_11 = arith.constant 4.471500e-02 : f32
    %30 = vector.broadcast %cst_11 : f32 to vector<2x128xf32>
    %31 = arith.mulf %30, %27 : vector<2x128xf32>
    %32 = arith.mulf %31, %27 : vector<2x128xf32>
    %33 = arith.mulf %32, %27 : vector<2x128xf32>
    %34 = arith.addf %27, %33 : vector<2x128xf32>
    %cst_12 = arith.constant 0.797884583 : f32
    %35 = vector.broadcast %cst_12 : f32 to vector<2x128xf32>
    %36 = arith.mulf %35, %34 : vector<2x128xf32>
    %37 = math.tanh %36 : vector<2x128xf32>
    %cst_13 = arith.constant 1.000000e+00 : f32
    %38 = vector.broadcast %cst_13 : f32 to vector<2x128xf32>
    %39 = arith.addf %38, %37 : vector<2x128xf32>
    %40 = arith.mulf %29, %39 : vector<2x128xf32>
    %c0_14 = arith.constant 0 : index
    %c0_15 = arith.constant 0 : index
    %41 = memref.load %arg3[%c0_14, %c0_15] : memref<32x4xf32, #tpu.memory_space<smem>>
    %42 = vector.broadcast %41 : f32 to vector<2x128xf32>
    %43 = arith.mulf %40, %42 : vector<2x128xf32>
    %44 = arith.addf %9, %43 : vector<2x128xf32>
    %c0_16 = arith.constant 0 : index
    %c1_17 = arith.constant 1 : index
    %45 = memref.load %arg3[%c0_16, %c1_17] : memref<32x4xf32, #tpu.memory_space<smem>>
    %46 = vector.broadcast %45 : f32 to vector<2x128xf32>
    %47 = arith.mulf %40, %46 : vector<2x128xf32>
    %48 = arith.addf %10, %47 : vector<2x128xf32>
    %c0_18 = arith.constant 0 : index
    %c2_19 = arith.constant 2 : index
    %49 = memref.load %arg3[%c0_18, %c2_19] : memref<32x4xf32, #tpu.memory_space<smem>>
    %50 = vector.broadcast %49 : f32 to vector<2x128xf32>
    %51 = arith.mulf %40, %50 : vector<2x128xf32>
    %52 = arith.addf %11, %51 : vector<2x128xf32>
    %c0_20 = arith.constant 0 : index
    %c3_21 = arith.constant 3 : index
    %53 = memref.load %arg3[%c0_20, %c3_21] : memref<32x4xf32, #tpu.memory_space<smem>>
    %54 = vector.broadcast %53 : f32 to vector<2x128xf32>
    %55 = arith.mulf %40, %54 : vector<2x128xf32>
    %56 = arith.addf %12, %55 : vector<2x128xf32>
    %c0_22 = arith.constant 0 : index
    %c1_23 = arith.constant 1 : index
    %57 = memref.load %arg2[%c0_22, %c1_23] : memref<4x32xf32, #tpu.memory_space<smem>>
    %58 = vector.broadcast %57 : f32 to vector<2x128xf32>
    %59 = arith.mulf %2, %58 : vector<2x128xf32>
    %c1_24 = arith.constant 1 : index
    %c1_25 = arith.constant 1 : index
    %60 = memref.load %arg2[%c1_24, %c1_25] : memref<4x32xf32, #tpu.memory_space<smem>>
    %61 = vector.broadcast %60 : f32 to vector<2x128xf32>
    %62 = arith.mulf %4, %61 : vector<2x128xf32>
    %63 = arith.addf %59, %62 : vector<2x128xf32>
    %c2_26 = arith.constant 2 : index
    %c1_27 = arith.constant 1 : index
    %64 = memref.load %arg2[%c2_26, %c1_27] : memref<4x32xf32, #tpu.memory_space<smem>>
    %65 = vector.broadcast %64 : f32 to vector<2x128xf32>
    %66 = arith.mulf %6, %65 : vector<2x128xf32>
    %67 = arith.addf %63, %66 : vector<2x128xf32>
    %c3_28 = arith.constant 3 : index
    %c1_29 = arith.constant 1 : index
    %68 = memref.load %arg2[%c3_28, %c1_29] : memref<4x32xf32, #tpu.memory_space<smem>>
    %69 = vector.broadcast %68 : f32 to vector<2x128xf32>
    %70 = arith.mulf %8, %69 : vector<2x128xf32>
    %71 = arith.addf %67, %70 : vector<2x128xf32>
    %cst_30 = arith.constant 5.000000e-01 : f32
    %72 = vector.broadcast %cst_30 : f32 to vector<2x128xf32>
    %73 = arith.mulf %72, %71 : vector<2x128xf32>
    %cst_31 = arith.constant 4.471500e-02 : f32
    %74 = vector.broadcast %cst_31 : f32 to vector<2x128xf32>
    %75 = arith.mulf %74, %71 : vector<2x128xf32>
    %76 = arith.mulf %75, %71 : vector<2x128xf32>
    %77 = arith.mulf %76, %71 : vector<2x128xf32>
    %78 = arith.addf %71, %77 : vector<2x128xf32>
    %cst_32 = arith.constant 0.797884583 : f32
    %79 = vector.broadcast %cst_32 : f32 to vector<2x128xf32>
    %80 = arith.mulf %79, %78 : vector<2x128xf32>
    %81 = math.tanh %80 : vector<2x128xf32>
    %cst_33 = arith.constant 1.000000e+00 : f32
    %82 = vector.broadcast %cst_33 : f32 to vector<2x128xf32>
    %83 = arith.addf %82, %81 : vector<2x128xf32>
    %84 = arith.mulf %73, %83 : vector<2x128xf32>
    %c1_34 = arith.constant 1 : index
    %c0_35 = arith.constant 0 : index
    %85 = memref.load %arg3[%c1_34, %c0_35] : memref<32x4xf32, #tpu.memory_space<smem>>
    %86 = vector.broadcast %85 : f32 to vector<2x128xf32>
    %87 = arith.mulf %84, %86 : vector<2x128xf32>
    %88 = arith.addf %44, %87 : vector<2x128xf32>
    %c1_36 = arith.constant 1 : index
    %c1_37 = arith.constant 1 : index
    %89 = memref.load %arg3[%c1_36, %c1_37] : memref<32x4xf32, #tpu.memory_space<smem>>
    %90 = vector.broadcast %89 : f32 to vector<2x128xf32>
    %91 = arith.mulf %84, %90 : vector<2x128xf32>
    %92 = arith.addf %48, %91 : vector<2x128xf32>
    %c1_38 = arith.constant 1 : index
    %c2_39 = arith.constant 2 : index
    %93 = memref.load %arg3[%c1_38, %c2_39] : memref<32x4xf32, #tpu.memory_space<smem>>
    %94 = vector.broadcast %93 : f32 to vector<2x128xf32>
    %95 = arith.mulf %84, %94 : vector<2x128xf32>
    %96 = arith.addf %52, %95 : vector<2x128xf32>
    %c1_40 = arith.constant 1 : index
    %c3_41 = arith.constant 3 : index
    %97 = memref.load %arg3[%c1_40, %c3_41] : memref<32x4xf32, #tpu.memory_space<smem>>
    %98 = vector.broadcast %97 : f32 to vector<2x128xf32>
    %99 = arith.mulf %84, %98 : vector<2x128xf32>
    %100 = arith.addf %56, %99 : vector<2x128xf32>
    %c0_42 = arith.constant 0 : index
    %c2_43 = arith.constant 2 : index
    %101 = memref.load %arg2[%c0_42, %c2_43] : memref<4x32xf32, #tpu.memory_space<smem>>
    %102 = vector.broadcast %101 : f32 to vector<2x128xf32>
    %103 = arith.mulf %2, %102 : vector<2x128xf32>
    %c1_44 = arith.constant 1 : index
    %c2_45 = arith.constant 2 : index
    %104 = memref.load %arg2[%c1_44, %c2_45] : memref<4x32xf32, #tpu.memory_space<smem>>
    %105 = vector.broadcast %104 : f32 to vector<2x128xf32>
    %106 = arith.mulf %4, %105 : vector<2x128xf32>
    %107 = arith.addf %103, %106 : vector<2x128xf32>
    %c2_46 = arith.constant 2 : index
    %c2_47 = arith.constant 2 : index
    %108 = memref.load %arg2[%c2_46, %c2_47] : memref<4x32xf32, #tpu.memory_space<smem>>
    %109 = vector.broadcast %108 : f32 to vector<2x128xf32>
    %110 = arith.mulf %6, %109 : vector<2x128xf32>
    %111 = arith.addf %107, %110 : vector<2x128xf32>
    %c3_48 = arith.constant 3 : index
    %c2_49 = arith.constant 2 : index
    %112 = memref.load %arg2[%c3_48, %c2_49] : memref<4x32xf32, #tpu.memory_space<smem>>
    %113 = vector.broadcast %112 : f32 to vector<2x128xf32>
    %114 = arith.mulf %8, %113 : vector<2x128xf32>
    %115 = arith.addf %111, %114 : vector<2x128xf32>
    %cst_50 = arith.constant 5.000000e-01 : f32
    %116 = vector.broadcast %cst_50 : f32 to vector<2x128xf32>
    %117 = arith.mulf %116, %115 : vector<2x128xf32>
    %cst_51 = arith.constant 4.471500e-02 : f32
    %118 = vector.broadcast %cst_51 : f32 to vector<2x128xf32>
    %119 = arith.mulf %118, %115 : vector<2x128xf32>
    %120 = arith.mulf %119, %115 : vector<2x128xf32>
    %121 = arith.mulf %120, %115 : vector<2x128xf32>
    %122 = arith.addf %115, %121 : vector<2x128xf32>
    %cst_52 = arith.constant 0.797884583 : f32
    %123 = vector.broadcast %cst_52 : f32 to vector<2x128xf32>
    %124 = arith.mulf %123, %122 : vector<2x128xf32>
    %125 = math.tanh %124 : vector<2x128xf32>
    %cst_53 = arith.constant 1.000000e+00 : f32
    %126 = vector.broadcast %cst_53 : f32 to vector<2x128xf32>
    %127 = arith.addf %126, %125 : vector<2x128xf32>
    %128 = arith.mulf %117, %127 : vector<2x128xf32>
    %c2_54 = arith.constant 2 : index
    %c0_55 = arith.constant 0 : index
    %129 = memref.load %arg3[%c2_54, %c0_55] : memref<32x4xf32, #tpu.memory_space<smem>>
    %130 = vector.broadcast %129 : f32 to vector<2x128xf32>
    %131 = arith.mulf %128, %130 : vector<2x128xf32>
    %132 = arith.addf %88, %131 : vector<2x128xf32>
    %c2_56 = arith.constant 2 : index
    %c1_57 = arith.constant 1 : index
    %133 = memref.load %arg3[%c2_56, %c1_57] : memref<32x4xf32, #tpu.memory_space<smem>>
    %134 = vector.broadcast %133 : f32 to vector<2x128xf32>
    %135 = arith.mulf %128, %134 : vector<2x128xf32>
    %136 = arith.addf %92, %135 : vector<2x128xf32>
    %c2_58 = arith.constant 2 : index
    %c2_59 = arith.constant 2 : index
    %137 = memref.load %arg3[%c2_58, %c2_59] : memref<32x4xf32, #tpu.memory_space<smem>>
    %138 = vector.broadcast %137 : f32 to vector<2x128xf32>
    %139 = arith.mulf %128, %138 : vector<2x128xf32>
    %140 = arith.addf %96, %139 : vector<2x128xf32>
    %c2_60 = arith.constant 2 : index
    %c3_61 = arith.constant 3 : index
    %141 = memref.load %arg3[%c2_60, %c3_61] : memref<32x4xf32, #tpu.memory_space<smem>>
    %142 = vector.broadcast %141 : f32 to vector<2x128xf32>
    %143 = arith.mulf %128, %142 : vector<2x128xf32>
    %144 = arith.addf %100, %143 : vector<2x128xf32>
    %c0_62 = arith.constant 0 : index
    %c3_63 = arith.constant 3 : index
    %145 = memref.load %arg2[%c0_62, %c3_63] : memref<4x32xf32, #tpu.memory_space<smem>>
    %146 = vector.broadcast %145 : f32 to vector<2x128xf32>
    %147 = arith.mulf %2, %146 : vector<2x128xf32>
    %c1_64 = arith.constant 1 : index
    %c3_65 = arith.constant 3 : index
    %148 = memref.load %arg2[%c1_64, %c3_65] : memref<4x32xf32, #tpu.memory_space<smem>>
    %149 = vector.broadcast %148 : f32 to vector<2x128xf32>
    %150 = arith.mulf %4, %149 : vector<2x128xf32>
    %151 = arith.addf %147, %150 : vector<2x128xf32>
    %c2_66 = arith.constant 2 : index
    %c3_67 = arith.constant 3 : index
    %152 = memref.load %arg2[%c2_66, %c3_67] : memref<4x32xf32, #tpu.memory_space<smem>>
    %153 = vector.broadcast %152 : f32 to vector<2x128xf32>
    %154 = arith.mulf %6, %153 : vector<2x128xf32>
    %155 = arith.addf %151, %154 : vector<2x128xf32>
    %c3_68 = arith.constant 3 : index
    %c3_69 = arith.constant 3 : index
    %156 = memref.load %arg2[%c3_68, %c3_69] : memref<4x32xf32, #tpu.memory_space<smem>>
    %157 = vector.broadcast %156 : f32 to vector<2x128xf32>
    %158 = arith.mulf %8, %157 : vector<2x128xf32>
    %159 = arith.addf %155, %158 : vector<2x128xf32>
    %cst_70 = arith.constant 5.000000e-01 : f32
    %160 = vector.broadcast %cst_70 : f32 to vector<2x128xf32>
    %161 = arith.mulf %160, %159 : vector<2x128xf32>
    %cst_71 = arith.constant 4.471500e-02 : f32
    %162 = vector.broadcast %cst_71 : f32 to vector<2x128xf32>
    %163 = arith.mulf %162, %159 : vector<2x128xf32>
    %164 = arith.mulf %163, %159 : vector<2x128xf32>
    %165 = arith.mulf %164, %159 : vector<2x128xf32>
    %166 = arith.addf %159, %165 : vector<2x128xf32>
    %cst_72 = arith.constant 0.797884583 : f32
    %167 = vector.broadcast %cst_72 : f32 to vector<2x128xf32>
    %168 = arith.mulf %167, %166 : vector<2x128xf32>
    %169 = math.tanh %168 : vector<2x128xf32>
    %cst_73 = arith.constant 1.000000e+00 : f32
    %170 = vector.broadcast %cst_73 : f32 to vector<2x128xf32>
    %171 = arith.addf %170, %169 : vector<2x128xf32>
    %172 = arith.mulf %161, %171 : vector<2x128xf32>
    %c3_74 = arith.constant 3 : index
    %c0_75 = arith.constant 0 : index
    %173 = memref.load %arg3[%c3_74, %c0_75] : memref<32x4xf32, #tpu.memory_space<smem>>
    %174 = vector.broadcast %173 : f32 to vector<2x128xf32>
    %175 = arith.mulf %172, %174 : vector<2x128xf32>
    %176 = arith.addf %132, %175 : vector<2x128xf32>
    %c3_76 = arith.constant 3 : index
    %c1_77 = arith.constant 1 : index
    %177 = memref.load %arg3[%c3_76, %c1_77] : memref<32x4xf32, #tpu.memory_space<smem>>
    %178 = vector.broadcast %177 : f32 to vector<2x128xf32>
    %179 = arith.mulf %172, %178 : vector<2x128xf32>
    %180 = arith.addf %136, %179 : vector<2x128xf32>
    %c3_78 = arith.constant 3 : index
    %c2_79 = arith.constant 2 : index
    %181 = memref.load %arg3[%c3_78, %c2_79] : memref<32x4xf32, #tpu.memory_space<smem>>
    %182 = vector.broadcast %181 : f32 to vector<2x128xf32>
    %183 = arith.mulf %172, %182 : vector<2x128xf32>
    %184 = arith.addf %140, %183 : vector<2x128xf32>
    %c3_80 = arith.constant 3 : index
    %c3_81 = arith.constant 3 : index
    %185 = memref.load %arg3[%c3_80, %c3_81] : memref<32x4xf32, #tpu.memory_space<smem>>
    %186 = vector.broadcast %185 : f32 to vector<2x128xf32>
    %187 = arith.mulf %172, %186 : vector<2x128xf32>
    %188 = arith.addf %144, %187 : vector<2x128xf32>
    %c0_82 = arith.constant 0 : index
    %c4 = arith.constant 4 : index
    %189 = memref.load %arg2[%c0_82, %c4] : memref<4x32xf32, #tpu.memory_space<smem>>
    %190 = vector.broadcast %189 : f32 to vector<2x128xf32>
    %191 = arith.mulf %2, %190 : vector<2x128xf32>
    %c1_83 = arith.constant 1 : index
    %c4_84 = arith.constant 4 : index
    %192 = memref.load %arg2[%c1_83, %c4_84] : memref<4x32xf32, #tpu.memory_space<smem>>
    %193 = vector.broadcast %192 : f32 to vector<2x128xf32>
    %194 = arith.mulf %4, %193 : vector<2x128xf32>
    %195 = arith.addf %191, %194 : vector<2x128xf32>
    %c2_85 = arith.constant 2 : index
    %c4_86 = arith.constant 4 : index
    %196 = memref.load %arg2[%c2_85, %c4_86] : memref<4x32xf32, #tpu.memory_space<smem>>
    %197 = vector.broadcast %196 : f32 to vector<2x128xf32>
    %198 = arith.mulf %6, %197 : vector<2x128xf32>
    %199 = arith.addf %195, %198 : vector<2x128xf32>
    %c3_87 = arith.constant 3 : index
    %c4_88 = arith.constant 4 : index
    %200 = memref.load %arg2[%c3_87, %c4_88] : memref<4x32xf32, #tpu.memory_space<smem>>
    %201 = vector.broadcast %200 : f32 to vector<2x128xf32>
    %202 = arith.mulf %8, %201 : vector<2x128xf32>
    %203 = arith.addf %199, %202 : vector<2x128xf32>
    %cst_89 = arith.constant 5.000000e-01 : f32
    %204 = vector.broadcast %cst_89 : f32 to vector<2x128xf32>
    %205 = arith.mulf %204, %203 : vector<2x128xf32>
    %cst_90 = arith.constant 4.471500e-02 : f32
    %206 = vector.broadcast %cst_90 : f32 to vector<2x128xf32>
    %207 = arith.mulf %206, %203 : vector<2x128xf32>
    %208 = arith.mulf %207, %203 : vector<2x128xf32>
    %209 = arith.mulf %208, %203 : vector<2x128xf32>
    %210 = arith.addf %203, %209 : vector<2x128xf32>
    %cst_91 = arith.constant 0.797884583 : f32
    %211 = vector.broadcast %cst_91 : f32 to vector<2x128xf32>
    %212 = arith.mulf %211, %210 : vector<2x128xf32>
    %213 = math.tanh %212 : vector<2x128xf32>
    %cst_92 = arith.constant 1.000000e+00 : f32
    %214 = vector.broadcast %cst_92 : f32 to vector<2x128xf32>
    %215 = arith.addf %214, %213 : vector<2x128xf32>
    %216 = arith.mulf %205, %215 : vector<2x128xf32>
    %c4_93 = arith.constant 4 : index
    %c0_94 = arith.constant 0 : index
    %217 = memref.load %arg3[%c4_93, %c0_94] : memref<32x4xf32, #tpu.memory_space<smem>>
    %218 = vector.broadcast %217 : f32 to vector<2x128xf32>
    %219 = arith.mulf %216, %218 : vector<2x128xf32>
    %220 = arith.addf %176, %219 : vector<2x128xf32>
    %c4_95 = arith.constant 4 : index
    %c1_96 = arith.constant 1 : index
    %221 = memref.load %arg3[%c4_95, %c1_96] : memref<32x4xf32, #tpu.memory_space<smem>>
    %222 = vector.broadcast %221 : f32 to vector<2x128xf32>
    %223 = arith.mulf %216, %222 : vector<2x128xf32>
    %224 = arith.addf %180, %223 : vector<2x128xf32>
    %c4_97 = arith.constant 4 : index
    %c2_98 = arith.constant 2 : index
    %225 = memref.load %arg3[%c4_97, %c2_98] : memref<32x4xf32, #tpu.memory_space<smem>>
    %226 = vector.broadcast %225 : f32 to vector<2x128xf32>
    %227 = arith.mulf %216, %226 : vector<2x128xf32>
    %228 = arith.addf %184, %227 : vector<2x128xf32>
    %c4_99 = arith.constant 4 : index
    %c3_100 = arith.constant 3 : index
    %229 = memref.load %arg3[%c4_99, %c3_100] : memref<32x4xf32, #tpu.memory_space<smem>>
    %230 = vector.broadcast %229 : f32 to vector<2x128xf32>
    %231 = arith.mulf %216, %230 : vector<2x128xf32>
    %232 = arith.addf %188, %231 : vector<2x128xf32>
    %c0_101 = arith.constant 0 : index
    %c5 = arith.constant 5 : index
    %233 = memref.load %arg2[%c0_101, %c5] : memref<4x32xf32, #tpu.memory_space<smem>>
    %234 = vector.broadcast %233 : f32 to vector<2x128xf32>
    %235 = arith.mulf %2, %234 : vector<2x128xf32>
    %c1_102 = arith.constant 1 : index
    %c5_103 = arith.constant 5 : index
    %236 = memref.load %arg2[%c1_102, %c5_103] : memref<4x32xf32, #tpu.memory_space<smem>>
    %237 = vector.broadcast %236 : f32 to vector<2x128xf32>
    %238 = arith.mulf %4, %237 : vector<2x128xf32>
    %239 = arith.addf %235, %238 : vector<2x128xf32>
    %c2_104 = arith.constant 2 : index
    %c5_105 = arith.constant 5 : index
    %240 = memref.load %arg2[%c2_104, %c5_105] : memref<4x32xf32, #tpu.memory_space<smem>>
    %241 = vector.broadcast %240 : f32 to vector<2x128xf32>
    %242 = arith.mulf %6, %241 : vector<2x128xf32>
    %243 = arith.addf %239, %242 : vector<2x128xf32>
    %c3_106 = arith.constant 3 : index
    %c5_107 = arith.constant 5 : index
    %244 = memref.load %arg2[%c3_106, %c5_107] : memref<4x32xf32, #tpu.memory_space<smem>>
    %245 = vector.broadcast %244 : f32 to vector<2x128xf32>
    %246 = arith.mulf %8, %245 : vector<2x128xf32>
    %247 = arith.addf %243, %246 : vector<2x128xf32>
    %cst_108 = arith.constant 5.000000e-01 : f32
    %248 = vector.broadcast %cst_108 : f32 to vector<2x128xf32>
    %249 = arith.mulf %248, %247 : vector<2x128xf32>
    %cst_109 = arith.constant 4.471500e-02 : f32
    %250 = vector.broadcast %cst_109 : f32 to vector<2x128xf32>
    %251 = arith.mulf %250, %247 : vector<2x128xf32>
    %252 = arith.mulf %251, %247 : vector<2x128xf32>
    %253 = arith.mulf %252, %247 : vector<2x128xf32>
    %254 = arith.addf %247, %253 : vector<2x128xf32>
    %cst_110 = arith.constant 0.797884583 : f32
    %255 = vector.broadcast %cst_110 : f32 to vector<2x128xf32>
    %256 = arith.mulf %255, %254 : vector<2x128xf32>
    %257 = math.tanh %256 : vector<2x128xf32>
    %cst_111 = arith.constant 1.000000e+00 : f32
    %258 = vector.broadcast %cst_111 : f32 to vector<2x128xf32>
    %259 = arith.addf %258, %257 : vector<2x128xf32>
    %260 = arith.mulf %249, %259 : vector<2x128xf32>
    %c5_112 = arith.constant 5 : index
    %c0_113 = arith.constant 0 : index
    %261 = memref.load %arg3[%c5_112, %c0_113] : memref<32x4xf32, #tpu.memory_space<smem>>
    %262 = vector.broadcast %261 : f32 to vector<2x128xf32>
    %263 = arith.mulf %260, %262 : vector<2x128xf32>
    %264 = arith.addf %220, %263 : vector<2x128xf32>
    %c5_114 = arith.constant 5 : index
    %c1_115 = arith.constant 1 : index
    %265 = memref.load %arg3[%c5_114, %c1_115] : memref<32x4xf32, #tpu.memory_space<smem>>
    %266 = vector.broadcast %265 : f32 to vector<2x128xf32>
    %267 = arith.mulf %260, %266 : vector<2x128xf32>
    %268 = arith.addf %224, %267 : vector<2x128xf32>
    %c5_116 = arith.constant 5 : index
    %c2_117 = arith.constant 2 : index
    %269 = memref.load %arg3[%c5_116, %c2_117] : memref<32x4xf32, #tpu.memory_space<smem>>
    %270 = vector.broadcast %269 : f32 to vector<2x128xf32>
    %271 = arith.mulf %260, %270 : vector<2x128xf32>
    %272 = arith.addf %228, %271 : vector<2x128xf32>
    %c5_118 = arith.constant 5 : index
    %c3_119 = arith.constant 3 : index
    %273 = memref.load %arg3[%c5_118, %c3_119] : memref<32x4xf32, #tpu.memory_space<smem>>
    %274 = vector.broadcast %273 : f32 to vector<2x128xf32>
    %275 = arith.mulf %260, %274 : vector<2x128xf32>
    %276 = arith.addf %232, %275 : vector<2x128xf32>
    %c0_120 = arith.constant 0 : index
    %c6 = arith.constant 6 : index
    %277 = memref.load %arg2[%c0_120, %c6] : memref<4x32xf32, #tpu.memory_space<smem>>
    %278 = vector.broadcast %277 : f32 to vector<2x128xf32>
    %279 = arith.mulf %2, %278 : vector<2x128xf32>
    %c1_121 = arith.constant 1 : index
    %c6_122 = arith.constant 6 : index
    %280 = memref.load %arg2[%c1_121, %c6_122] : memref<4x32xf32, #tpu.memory_space<smem>>
    %281 = vector.broadcast %280 : f32 to vector<2x128xf32>
    %282 = arith.mulf %4, %281 : vector<2x128xf32>
    %283 = arith.addf %279, %282 : vector<2x128xf32>
    %c2_123 = arith.constant 2 : index
    %c6_124 = arith.constant 6 : index
    %284 = memref.load %arg2[%c2_123, %c6_124] : memref<4x32xf32, #tpu.memory_space<smem>>
    %285 = vector.broadcast %284 : f32 to vector<2x128xf32>
    %286 = arith.mulf %6, %285 : vector<2x128xf32>
    %287 = arith.addf %283, %286 : vector<2x128xf32>
    %c3_125 = arith.constant 3 : index
    %c6_126 = arith.constant 6 : index
    %288 = memref.load %arg2[%c3_125, %c6_126] : memref<4x32xf32, #tpu.memory_space<smem>>
    %289 = vector.broadcast %288 : f32 to vector<2x128xf32>
    %290 = arith.mulf %8, %289 : vector<2x128xf32>
    %291 = arith.addf %287, %290 : vector<2x128xf32>
    %cst_127 = arith.constant 5.000000e-01 : f32
    %292 = vector.broadcast %cst_127 : f32 to vector<2x128xf32>
    %293 = arith.mulf %292, %291 : vector<2x128xf32>
    %cst_128 = arith.constant 4.471500e-02 : f32
    %294 = vector.broadcast %cst_128 : f32 to vector<2x128xf32>
    %295 = arith.mulf %294, %291 : vector<2x128xf32>
    %296 = arith.mulf %295, %291 : vector<2x128xf32>
    %297 = arith.mulf %296, %291 : vector<2x128xf32>
    %298 = arith.addf %291, %297 : vector<2x128xf32>
    %cst_129 = arith.constant 0.797884583 : f32
    %299 = vector.broadcast %cst_129 : f32 to vector<2x128xf32>
    %300 = arith.mulf %299, %298 : vector<2x128xf32>
    %301 = math.tanh %300 : vector<2x128xf32>
    %cst_130 = arith.constant 1.000000e+00 : f32
    %302 = vector.broadcast %cst_130 : f32 to vector<2x128xf32>
    %303 = arith.addf %302, %301 : vector<2x128xf32>
    %304 = arith.mulf %293, %303 : vector<2x128xf32>
    %c6_131 = arith.constant 6 : index
    %c0_132 = arith.constant 0 : index
    %305 = memref.load %arg3[%c6_131, %c0_132] : memref<32x4xf32, #tpu.memory_space<smem>>
    %306 = vector.broadcast %305 : f32 to vector<2x128xf32>
    %307 = arith.mulf %304, %306 : vector<2x128xf32>
    %308 = arith.addf %264, %307 : vector<2x128xf32>
    %c6_133 = arith.constant 6 : index
    %c1_134 = arith.constant 1 : index
    %309 = memref.load %arg3[%c6_133, %c1_134] : memref<32x4xf32, #tpu.memory_space<smem>>
    %310 = vector.broadcast %309 : f32 to vector<2x128xf32>
    %311 = arith.mulf %304, %310 : vector<2x128xf32>
    %312 = arith.addf %268, %311 : vector<2x128xf32>
    %c6_135 = arith.constant 6 : index
    %c2_136 = arith.constant 2 : index
    %313 = memref.load %arg3[%c6_135, %c2_136] : memref<32x4xf32, #tpu.memory_space<smem>>
    %314 = vector.broadcast %313 : f32 to vector<2x128xf32>
    %315 = arith.mulf %304, %314 : vector<2x128xf32>
    %316 = arith.addf %272, %315 : vector<2x128xf32>
    %c6_137 = arith.constant 6 : index
    %c3_138 = arith.constant 3 : index
    %317 = memref.load %arg3[%c6_137, %c3_138] : memref<32x4xf32, #tpu.memory_space<smem>>
    %318 = vector.broadcast %317 : f32 to vector<2x128xf32>
    %319 = arith.mulf %304, %318 : vector<2x128xf32>
    %320 = arith.addf %276, %319 : vector<2x128xf32>
    %c0_139 = arith.constant 0 : index
    %c7 = arith.constant 7 : index
    %321 = memref.load %arg2[%c0_139, %c7] : memref<4x32xf32, #tpu.memory_space<smem>>
    %322 = vector.broadcast %321 : f32 to vector<2x128xf32>
    %323 = arith.mulf %2, %322 : vector<2x128xf32>
    %c1_140 = arith.constant 1 : index
    %c7_141 = arith.constant 7 : index
    %324 = memref.load %arg2[%c1_140, %c7_141] : memref<4x32xf32, #tpu.memory_space<smem>>
    %325 = vector.broadcast %324 : f32 to vector<2x128xf32>
    %326 = arith.mulf %4, %325 : vector<2x128xf32>
    %327 = arith.addf %323, %326 : vector<2x128xf32>
    %c2_142 = arith.constant 2 : index
    %c7_143 = arith.constant 7 : index
    %328 = memref.load %arg2[%c2_142, %c7_143] : memref<4x32xf32, #tpu.memory_space<smem>>
    %329 = vector.broadcast %328 : f32 to vector<2x128xf32>
    %330 = arith.mulf %6, %329 : vector<2x128xf32>
    %331 = arith.addf %327, %330 : vector<2x128xf32>
    %c3_144 = arith.constant 3 : index
    %c7_145 = arith.constant 7 : index
    %332 = memref.load %arg2[%c3_144, %c7_145] : memref<4x32xf32, #tpu.memory_space<smem>>
    %333 = vector.broadcast %332 : f32 to vector<2x128xf32>
    %334 = arith.mulf %8, %333 : vector<2x128xf32>
    %335 = arith.addf %331, %334 : vector<2x128xf32>
    %cst_146 = arith.constant 5.000000e-01 : f32
    %336 = vector.broadcast %cst_146 : f32 to vector<2x128xf32>
    %337 = arith.mulf %336, %335 : vector<2x128xf32>
    %cst_147 = arith.constant 4.471500e-02 : f32
    %338 = vector.broadcast %cst_147 : f32 to vector<2x128xf32>
    %339 = arith.mulf %338, %335 : vector<2x128xf32>
    %340 = arith.mulf %339, %335 : vector<2x128xf32>
    %341 = arith.mulf %340, %335 : vector<2x128xf32>
    %342 = arith.addf %335, %341 : vector<2x128xf32>
    %cst_148 = arith.constant 0.797884583 : f32
    %343 = vector.broadcast %cst_148 : f32 to vector<2x128xf32>
    %344 = arith.mulf %343, %342 : vector<2x128xf32>
    %345 = math.tanh %344 : vector<2x128xf32>
    %cst_149 = arith.constant 1.000000e+00 : f32
    %346 = vector.broadcast %cst_149 : f32 to vector<2x128xf32>
    %347 = arith.addf %346, %345 : vector<2x128xf32>
    %348 = arith.mulf %337, %347 : vector<2x128xf32>
    %c7_150 = arith.constant 7 : index
    %c0_151 = arith.constant 0 : index
    %349 = memref.load %arg3[%c7_150, %c0_151] : memref<32x4xf32, #tpu.memory_space<smem>>
    %350 = vector.broadcast %349 : f32 to vector<2x128xf32>
    %351 = arith.mulf %348, %350 : vector<2x128xf32>
    %352 = arith.addf %308, %351 : vector<2x128xf32>
    %c7_152 = arith.constant 7 : index
    %c1_153 = arith.constant 1 : index
    %353 = memref.load %arg3[%c7_152, %c1_153] : memref<32x4xf32, #tpu.memory_space<smem>>
    %354 = vector.broadcast %353 : f32 to vector<2x128xf32>
    %355 = arith.mulf %348, %354 : vector<2x128xf32>
    %356 = arith.addf %312, %355 : vector<2x128xf32>
    %c7_154 = arith.constant 7 : index
    %c2_155 = arith.constant 2 : index
    %357 = memref.load %arg3[%c7_154, %c2_155] : memref<32x4xf32, #tpu.memory_space<smem>>
    %358 = vector.broadcast %357 : f32 to vector<2x128xf32>
    %359 = arith.mulf %348, %358 : vector<2x128xf32>
    %360 = arith.addf %316, %359 : vector<2x128xf32>
    %c7_156 = arith.constant 7 : index
    %c3_157 = arith.constant 3 : index
    %361 = memref.load %arg3[%c7_156, %c3_157] : memref<32x4xf32, #tpu.memory_space<smem>>
    %362 = vector.broadcast %361 : f32 to vector<2x128xf32>
    %363 = arith.mulf %348, %362 : vector<2x128xf32>
    %364 = arith.addf %320, %363 : vector<2x128xf32>
    %c0_158 = arith.constant 0 : index
    %c8 = arith.constant 8 : index
    %365 = memref.load %arg2[%c0_158, %c8] : memref<4x32xf32, #tpu.memory_space<smem>>
    %366 = vector.broadcast %365 : f32 to vector<2x128xf32>
    %367 = arith.mulf %2, %366 : vector<2x128xf32>
    %c1_159 = arith.constant 1 : index
    %c8_160 = arith.constant 8 : index
    %368 = memref.load %arg2[%c1_159, %c8_160] : memref<4x32xf32, #tpu.memory_space<smem>>
    %369 = vector.broadcast %368 : f32 to vector<2x128xf32>
    %370 = arith.mulf %4, %369 : vector<2x128xf32>
    %371 = arith.addf %367, %370 : vector<2x128xf32>
    %c2_161 = arith.constant 2 : index
    %c8_162 = arith.constant 8 : index
    %372 = memref.load %arg2[%c2_161, %c8_162] : memref<4x32xf32, #tpu.memory_space<smem>>
    %373 = vector.broadcast %372 : f32 to vector<2x128xf32>
    %374 = arith.mulf %6, %373 : vector<2x128xf32>
    %375 = arith.addf %371, %374 : vector<2x128xf32>
    %c3_163 = arith.constant 3 : index
    %c8_164 = arith.constant 8 : index
    %376 = memref.load %arg2[%c3_163, %c8_164] : memref<4x32xf32, #tpu.memory_space<smem>>
    %377 = vector.broadcast %376 : f32 to vector<2x128xf32>
    %378 = arith.mulf %8, %377 : vector<2x128xf32>
    %379 = arith.addf %375, %378 : vector<2x128xf32>
    %cst_165 = arith.constant 5.000000e-01 : f32
    %380 = vector.broadcast %cst_165 : f32 to vector<2x128xf32>
    %381 = arith.mulf %380, %379 : vector<2x128xf32>
    %cst_166 = arith.constant 4.471500e-02 : f32
    %382 = vector.broadcast %cst_166 : f32 to vector<2x128xf32>
    %383 = arith.mulf %382, %379 : vector<2x128xf32>
    %384 = arith.mulf %383, %379 : vector<2x128xf32>
    %385 = arith.mulf %384, %379 : vector<2x128xf32>
    %386 = arith.addf %379, %385 : vector<2x128xf32>
    %cst_167 = arith.constant 0.797884583 : f32
    %387 = vector.broadcast %cst_167 : f32 to vector<2x128xf32>
    %388 = arith.mulf %387, %386 : vector<2x128xf32>
    %389 = math.tanh %388 : vector<2x128xf32>
    %cst_168 = arith.constant 1.000000e+00 : f32
    %390 = vector.broadcast %cst_168 : f32 to vector<2x128xf32>
    %391 = arith.addf %390, %389 : vector<2x128xf32>
    %392 = arith.mulf %381, %391 : vector<2x128xf32>
    %c8_169 = arith.constant 8 : index
    %c0_170 = arith.constant 0 : index
    %393 = memref.load %arg3[%c8_169, %c0_170] : memref<32x4xf32, #tpu.memory_space<smem>>
    %394 = vector.broadcast %393 : f32 to vector<2x128xf32>
    %395 = arith.mulf %392, %394 : vector<2x128xf32>
    %396 = arith.addf %352, %395 : vector<2x128xf32>
    %c8_171 = arith.constant 8 : index
    %c1_172 = arith.constant 1 : index
    %397 = memref.load %arg3[%c8_171, %c1_172] : memref<32x4xf32, #tpu.memory_space<smem>>
    %398 = vector.broadcast %397 : f32 to vector<2x128xf32>
    %399 = arith.mulf %392, %398 : vector<2x128xf32>
    %400 = arith.addf %356, %399 : vector<2x128xf32>
    %c8_173 = arith.constant 8 : index
    %c2_174 = arith.constant 2 : index
    %401 = memref.load %arg3[%c8_173, %c2_174] : memref<32x4xf32, #tpu.memory_space<smem>>
    %402 = vector.broadcast %401 : f32 to vector<2x128xf32>
    %403 = arith.mulf %392, %402 : vector<2x128xf32>
    %404 = arith.addf %360, %403 : vector<2x128xf32>
    %c8_175 = arith.constant 8 : index
    %c3_176 = arith.constant 3 : index
    %405 = memref.load %arg3[%c8_175, %c3_176] : memref<32x4xf32, #tpu.memory_space<smem>>
    %406 = vector.broadcast %405 : f32 to vector<2x128xf32>
    %407 = arith.mulf %392, %406 : vector<2x128xf32>
    %408 = arith.addf %364, %407 : vector<2x128xf32>
    %c0_177 = arith.constant 0 : index
    %c9 = arith.constant 9 : index
    %409 = memref.load %arg2[%c0_177, %c9] : memref<4x32xf32, #tpu.memory_space<smem>>
    %410 = vector.broadcast %409 : f32 to vector<2x128xf32>
    %411 = arith.mulf %2, %410 : vector<2x128xf32>
    %c1_178 = arith.constant 1 : index
    %c9_179 = arith.constant 9 : index
    %412 = memref.load %arg2[%c1_178, %c9_179] : memref<4x32xf32, #tpu.memory_space<smem>>
    %413 = vector.broadcast %412 : f32 to vector<2x128xf32>
    %414 = arith.mulf %4, %413 : vector<2x128xf32>
    %415 = arith.addf %411, %414 : vector<2x128xf32>
    %c2_180 = arith.constant 2 : index
    %c9_181 = arith.constant 9 : index
    %416 = memref.load %arg2[%c2_180, %c9_181] : memref<4x32xf32, #tpu.memory_space<smem>>
    %417 = vector.broadcast %416 : f32 to vector<2x128xf32>
    %418 = arith.mulf %6, %417 : vector<2x128xf32>
    %419 = arith.addf %415, %418 : vector<2x128xf32>
    %c3_182 = arith.constant 3 : index
    %c9_183 = arith.constant 9 : index
    %420 = memref.load %arg2[%c3_182, %c9_183] : memref<4x32xf32, #tpu.memory_space<smem>>
    %421 = vector.broadcast %420 : f32 to vector<2x128xf32>
    %422 = arith.mulf %8, %421 : vector<2x128xf32>
    %423 = arith.addf %419, %422 : vector<2x128xf32>
    %cst_184 = arith.constant 5.000000e-01 : f32
    %424 = vector.broadcast %cst_184 : f32 to vector<2x128xf32>
    %425 = arith.mulf %424, %423 : vector<2x128xf32>
    %cst_185 = arith.constant 4.471500e-02 : f32
    %426 = vector.broadcast %cst_185 : f32 to vector<2x128xf32>
    %427 = arith.mulf %426, %423 : vector<2x128xf32>
    %428 = arith.mulf %427, %423 : vector<2x128xf32>
    %429 = arith.mulf %428, %423 : vector<2x128xf32>
    %430 = arith.addf %423, %429 : vector<2x128xf32>
    %cst_186 = arith.constant 0.797884583 : f32
    %431 = vector.broadcast %cst_186 : f32 to vector<2x128xf32>
    %432 = arith.mulf %431, %430 : vector<2x128xf32>
    %433 = math.tanh %432 : vector<2x128xf32>
    %cst_187 = arith.constant 1.000000e+00 : f32
    %434 = vector.broadcast %cst_187 : f32 to vector<2x128xf32>
    %435 = arith.addf %434, %433 : vector<2x128xf32>
    %436 = arith.mulf %425, %435 : vector<2x128xf32>
    %c9_188 = arith.constant 9 : index
    %c0_189 = arith.constant 0 : index
    %437 = memref.load %arg3[%c9_188, %c0_189] : memref<32x4xf32, #tpu.memory_space<smem>>
    %438 = vector.broadcast %437 : f32 to vector<2x128xf32>
    %439 = arith.mulf %436, %438 : vector<2x128xf32>
    %440 = arith.addf %396, %439 : vector<2x128xf32>
    %c9_190 = arith.constant 9 : index
    %c1_191 = arith.constant 1 : index
    %441 = memref.load %arg3[%c9_190, %c1_191] : memref<32x4xf32, #tpu.memory_space<smem>>
    %442 = vector.broadcast %441 : f32 to vector<2x128xf32>
    %443 = arith.mulf %436, %442 : vector<2x128xf32>
    %444 = arith.addf %400, %443 : vector<2x128xf32>
    %c9_192 = arith.constant 9 : index
    %c2_193 = arith.constant 2 : index
    %445 = memref.load %arg3[%c9_192, %c2_193] : memref<32x4xf32, #tpu.memory_space<smem>>
    %446 = vector.broadcast %445 : f32 to vector<2x128xf32>
    %447 = arith.mulf %436, %446 : vector<2x128xf32>
    %448 = arith.addf %404, %447 : vector<2x128xf32>
    %c9_194 = arith.constant 9 : index
    %c3_195 = arith.constant 3 : index
    %449 = memref.load %arg3[%c9_194, %c3_195] : memref<32x4xf32, #tpu.memory_space<smem>>
    %450 = vector.broadcast %449 : f32 to vector<2x128xf32>
    %451 = arith.mulf %436, %450 : vector<2x128xf32>
    %452 = arith.addf %408, %451 : vector<2x128xf32>
    %c0_196 = arith.constant 0 : index
    %c10 = arith.constant 10 : index
    %453 = memref.load %arg2[%c0_196, %c10] : memref<4x32xf32, #tpu.memory_space<smem>>
    %454 = vector.broadcast %453 : f32 to vector<2x128xf32>
    %455 = arith.mulf %2, %454 : vector<2x128xf32>
    %c1_197 = arith.constant 1 : index
    %c10_198 = arith.constant 10 : index
    %456 = memref.load %arg2[%c1_197, %c10_198] : memref<4x32xf32, #tpu.memory_space<smem>>
    %457 = vector.broadcast %456 : f32 to vector<2x128xf32>
    %458 = arith.mulf %4, %457 : vector<2x128xf32>
    %459 = arith.addf %455, %458 : vector<2x128xf32>
    %c2_199 = arith.constant 2 : index
    %c10_200 = arith.constant 10 : index
    %460 = memref.load %arg2[%c2_199, %c10_200] : memref<4x32xf32, #tpu.memory_space<smem>>
    %461 = vector.broadcast %460 : f32 to vector<2x128xf32>
    %462 = arith.mulf %6, %461 : vector<2x128xf32>
    %463 = arith.addf %459, %462 : vector<2x128xf32>
    %c3_201 = arith.constant 3 : index
    %c10_202 = arith.constant 10 : index
    %464 = memref.load %arg2[%c3_201, %c10_202] : memref<4x32xf32, #tpu.memory_space<smem>>
    %465 = vector.broadcast %464 : f32 to vector<2x128xf32>
    %466 = arith.mulf %8, %465 : vector<2x128xf32>
    %467 = arith.addf %463, %466 : vector<2x128xf32>
    %cst_203 = arith.constant 5.000000e-01 : f32
    %468 = vector.broadcast %cst_203 : f32 to vector<2x128xf32>
    %469 = arith.mulf %468, %467 : vector<2x128xf32>
    %cst_204 = arith.constant 4.471500e-02 : f32
    %470 = vector.broadcast %cst_204 : f32 to vector<2x128xf32>
    %471 = arith.mulf %470, %467 : vector<2x128xf32>
    %472 = arith.mulf %471, %467 : vector<2x128xf32>
    %473 = arith.mulf %472, %467 : vector<2x128xf32>
    %474 = arith.addf %467, %473 : vector<2x128xf32>
    %cst_205 = arith.constant 0.797884583 : f32
    %475 = vector.broadcast %cst_205 : f32 to vector<2x128xf32>
    %476 = arith.mulf %475, %474 : vector<2x128xf32>
    %477 = math.tanh %476 : vector<2x128xf32>
    %cst_206 = arith.constant 1.000000e+00 : f32
    %478 = vector.broadcast %cst_206 : f32 to vector<2x128xf32>
    %479 = arith.addf %478, %477 : vector<2x128xf32>
    %480 = arith.mulf %469, %479 : vector<2x128xf32>
    %c10_207 = arith.constant 10 : index
    %c0_208 = arith.constant 0 : index
    %481 = memref.load %arg3[%c10_207, %c0_208] : memref<32x4xf32, #tpu.memory_space<smem>>
    %482 = vector.broadcast %481 : f32 to vector<2x128xf32>
    %483 = arith.mulf %480, %482 : vector<2x128xf32>
    %484 = arith.addf %440, %483 : vector<2x128xf32>
    %c10_209 = arith.constant 10 : index
    %c1_210 = arith.constant 1 : index
    %485 = memref.load %arg3[%c10_209, %c1_210] : memref<32x4xf32, #tpu.memory_space<smem>>
    %486 = vector.broadcast %485 : f32 to vector<2x128xf32>
    %487 = arith.mulf %480, %486 : vector<2x128xf32>
    %488 = arith.addf %444, %487 : vector<2x128xf32>
    %c10_211 = arith.constant 10 : index
    %c2_212 = arith.constant 2 : index
    %489 = memref.load %arg3[%c10_211, %c2_212] : memref<32x4xf32, #tpu.memory_space<smem>>
    %490 = vector.broadcast %489 : f32 to vector<2x128xf32>
    %491 = arith.mulf %480, %490 : vector<2x128xf32>
    %492 = arith.addf %448, %491 : vector<2x128xf32>
    %c10_213 = arith.constant 10 : index
    %c3_214 = arith.constant 3 : index
    %493 = memref.load %arg3[%c10_213, %c3_214] : memref<32x4xf32, #tpu.memory_space<smem>>
    %494 = vector.broadcast %493 : f32 to vector<2x128xf32>
    %495 = arith.mulf %480, %494 : vector<2x128xf32>
    %496 = arith.addf %452, %495 : vector<2x128xf32>
    %c0_215 = arith.constant 0 : index
    %c11 = arith.constant 11 : index
    %497 = memref.load %arg2[%c0_215, %c11] : memref<4x32xf32, #tpu.memory_space<smem>>
    %498 = vector.broadcast %497 : f32 to vector<2x128xf32>
    %499 = arith.mulf %2, %498 : vector<2x128xf32>
    %c1_216 = arith.constant 1 : index
    %c11_217 = arith.constant 11 : index
    %500 = memref.load %arg2[%c1_216, %c11_217] : memref<4x32xf32, #tpu.memory_space<smem>>
    %501 = vector.broadcast %500 : f32 to vector<2x128xf32>
    %502 = arith.mulf %4, %501 : vector<2x128xf32>
    %503 = arith.addf %499, %502 : vector<2x128xf32>
    %c2_218 = arith.constant 2 : index
    %c11_219 = arith.constant 11 : index
    %504 = memref.load %arg2[%c2_218, %c11_219] : memref<4x32xf32, #tpu.memory_space<smem>>
    %505 = vector.broadcast %504 : f32 to vector<2x128xf32>
    %506 = arith.mulf %6, %505 : vector<2x128xf32>
    %507 = arith.addf %503, %506 : vector<2x128xf32>
    %c3_220 = arith.constant 3 : index
    %c11_221 = arith.constant 11 : index
    %508 = memref.load %arg2[%c3_220, %c11_221] : memref<4x32xf32, #tpu.memory_space<smem>>
    %509 = vector.broadcast %508 : f32 to vector<2x128xf32>
    %510 = arith.mulf %8, %509 : vector<2x128xf32>
    %511 = arith.addf %507, %510 : vector<2x128xf32>
    %cst_222 = arith.constant 5.000000e-01 : f32
    %512 = vector.broadcast %cst_222 : f32 to vector<2x128xf32>
    %513 = arith.mulf %512, %511 : vector<2x128xf32>
    %cst_223 = arith.constant 4.471500e-02 : f32
    %514 = vector.broadcast %cst_223 : f32 to vector<2x128xf32>
    %515 = arith.mulf %514, %511 : vector<2x128xf32>
    %516 = arith.mulf %515, %511 : vector<2x128xf32>
    %517 = arith.mulf %516, %511 : vector<2x128xf32>
    %518 = arith.addf %511, %517 : vector<2x128xf32>
    %cst_224 = arith.constant 0.797884583 : f32
    %519 = vector.broadcast %cst_224 : f32 to vector<2x128xf32>
    %520 = arith.mulf %519, %518 : vector<2x128xf32>
    %521 = math.tanh %520 : vector<2x128xf32>
    %cst_225 = arith.constant 1.000000e+00 : f32
    %522 = vector.broadcast %cst_225 : f32 to vector<2x128xf32>
    %523 = arith.addf %522, %521 : vector<2x128xf32>
    %524 = arith.mulf %513, %523 : vector<2x128xf32>
    %c11_226 = arith.constant 11 : index
    %c0_227 = arith.constant 0 : index
    %525 = memref.load %arg3[%c11_226, %c0_227] : memref<32x4xf32, #tpu.memory_space<smem>>
    %526 = vector.broadcast %525 : f32 to vector<2x128xf32>
    %527 = arith.mulf %524, %526 : vector<2x128xf32>
    %528 = arith.addf %484, %527 : vector<2x128xf32>
    %c11_228 = arith.constant 11 : index
    %c1_229 = arith.constant 1 : index
    %529 = memref.load %arg3[%c11_228, %c1_229] : memref<32x4xf32, #tpu.memory_space<smem>>
    %530 = vector.broadcast %529 : f32 to vector<2x128xf32>
    %531 = arith.mulf %524, %530 : vector<2x128xf32>
    %532 = arith.addf %488, %531 : vector<2x128xf32>
    %c11_230 = arith.constant 11 : index
    %c2_231 = arith.constant 2 : index
    %533 = memref.load %arg3[%c11_230, %c2_231] : memref<32x4xf32, #tpu.memory_space<smem>>
    %534 = vector.broadcast %533 : f32 to vector<2x128xf32>
    %535 = arith.mulf %524, %534 : vector<2x128xf32>
    %536 = arith.addf %492, %535 : vector<2x128xf32>
    %c11_232 = arith.constant 11 : index
    %c3_233 = arith.constant 3 : index
    %537 = memref.load %arg3[%c11_232, %c3_233] : memref<32x4xf32, #tpu.memory_space<smem>>
    %538 = vector.broadcast %537 : f32 to vector<2x128xf32>
    %539 = arith.mulf %524, %538 : vector<2x128xf32>
    %540 = arith.addf %496, %539 : vector<2x128xf32>
    %c0_234 = arith.constant 0 : index
    %c12 = arith.constant 12 : index
    %541 = memref.load %arg2[%c0_234, %c12] : memref<4x32xf32, #tpu.memory_space<smem>>
    %542 = vector.broadcast %541 : f32 to vector<2x128xf32>
    %543 = arith.mulf %2, %542 : vector<2x128xf32>
    %c1_235 = arith.constant 1 : index
    %c12_236 = arith.constant 12 : index
    %544 = memref.load %arg2[%c1_235, %c12_236] : memref<4x32xf32, #tpu.memory_space<smem>>
    %545 = vector.broadcast %544 : f32 to vector<2x128xf32>
    %546 = arith.mulf %4, %545 : vector<2x128xf32>
    %547 = arith.addf %543, %546 : vector<2x128xf32>
    %c2_237 = arith.constant 2 : index
    %c12_238 = arith.constant 12 : index
    %548 = memref.load %arg2[%c2_237, %c12_238] : memref<4x32xf32, #tpu.memory_space<smem>>
    %549 = vector.broadcast %548 : f32 to vector<2x128xf32>
    %550 = arith.mulf %6, %549 : vector<2x128xf32>
    %551 = arith.addf %547, %550 : vector<2x128xf32>
    %c3_239 = arith.constant 3 : index
    %c12_240 = arith.constant 12 : index
    %552 = memref.load %arg2[%c3_239, %c12_240] : memref<4x32xf32, #tpu.memory_space<smem>>
    %553 = vector.broadcast %552 : f32 to vector<2x128xf32>
    %554 = arith.mulf %8, %553 : vector<2x128xf32>
    %555 = arith.addf %551, %554 : vector<2x128xf32>
    %cst_241 = arith.constant 5.000000e-01 : f32
    %556 = vector.broadcast %cst_241 : f32 to vector<2x128xf32>
    %557 = arith.mulf %556, %555 : vector<2x128xf32>
    %cst_242 = arith.constant 4.471500e-02 : f32
    %558 = vector.broadcast %cst_242 : f32 to vector<2x128xf32>
    %559 = arith.mulf %558, %555 : vector<2x128xf32>
    %560 = arith.mulf %559, %555 : vector<2x128xf32>
    %561 = arith.mulf %560, %555 : vector<2x128xf32>
    %562 = arith.addf %555, %561 : vector<2x128xf32>
    %cst_243 = arith.constant 0.797884583 : f32
    %563 = vector.broadcast %cst_243 : f32 to vector<2x128xf32>
    %564 = arith.mulf %563, %562 : vector<2x128xf32>
    %565 = math.tanh %564 : vector<2x128xf32>
    %cst_244 = arith.constant 1.000000e+00 : f32
    %566 = vector.broadcast %cst_244 : f32 to vector<2x128xf32>
    %567 = arith.addf %566, %565 : vector<2x128xf32>
    %568 = arith.mulf %557, %567 : vector<2x128xf32>
    %c12_245 = arith.constant 12 : index
    %c0_246 = arith.constant 0 : index
    %569 = memref.load %arg3[%c12_245, %c0_246] : memref<32x4xf32, #tpu.memory_space<smem>>
    %570 = vector.broadcast %569 : f32 to vector<2x128xf32>
    %571 = arith.mulf %568, %570 : vector<2x128xf32>
    %572 = arith.addf %528, %571 : vector<2x128xf32>
    %c12_247 = arith.constant 12 : index
    %c1_248 = arith.constant 1 : index
    %573 = memref.load %arg3[%c12_247, %c1_248] : memref<32x4xf32, #tpu.memory_space<smem>>
    %574 = vector.broadcast %573 : f32 to vector<2x128xf32>
    %575 = arith.mulf %568, %574 : vector<2x128xf32>
    %576 = arith.addf %532, %575 : vector<2x128xf32>
    %c12_249 = arith.constant 12 : index
    %c2_250 = arith.constant 2 : index
    %577 = memref.load %arg3[%c12_249, %c2_250] : memref<32x4xf32, #tpu.memory_space<smem>>
    %578 = vector.broadcast %577 : f32 to vector<2x128xf32>
    %579 = arith.mulf %568, %578 : vector<2x128xf32>
    %580 = arith.addf %536, %579 : vector<2x128xf32>
    %c12_251 = arith.constant 12 : index
    %c3_252 = arith.constant 3 : index
    %581 = memref.load %arg3[%c12_251, %c3_252] : memref<32x4xf32, #tpu.memory_space<smem>>
    %582 = vector.broadcast %581 : f32 to vector<2x128xf32>
    %583 = arith.mulf %568, %582 : vector<2x128xf32>
    %584 = arith.addf %540, %583 : vector<2x128xf32>
    %c0_253 = arith.constant 0 : index
    %c13 = arith.constant 13 : index
    %585 = memref.load %arg2[%c0_253, %c13] : memref<4x32xf32, #tpu.memory_space<smem>>
    %586 = vector.broadcast %585 : f32 to vector<2x128xf32>
    %587 = arith.mulf %2, %586 : vector<2x128xf32>
    %c1_254 = arith.constant 1 : index
    %c13_255 = arith.constant 13 : index
    %588 = memref.load %arg2[%c1_254, %c13_255] : memref<4x32xf32, #tpu.memory_space<smem>>
    %589 = vector.broadcast %588 : f32 to vector<2x128xf32>
    %590 = arith.mulf %4, %589 : vector<2x128xf32>
    %591 = arith.addf %587, %590 : vector<2x128xf32>
    %c2_256 = arith.constant 2 : index
    %c13_257 = arith.constant 13 : index
    %592 = memref.load %arg2[%c2_256, %c13_257] : memref<4x32xf32, #tpu.memory_space<smem>>
    %593 = vector.broadcast %592 : f32 to vector<2x128xf32>
    %594 = arith.mulf %6, %593 : vector<2x128xf32>
    %595 = arith.addf %591, %594 : vector<2x128xf32>
    %c3_258 = arith.constant 3 : index
    %c13_259 = arith.constant 13 : index
    %596 = memref.load %arg2[%c3_258, %c13_259] : memref<4x32xf32, #tpu.memory_space<smem>>
    %597 = vector.broadcast %596 : f32 to vector<2x128xf32>
    %598 = arith.mulf %8, %597 : vector<2x128xf32>
    %599 = arith.addf %595, %598 : vector<2x128xf32>
    %cst_260 = arith.constant 5.000000e-01 : f32
    %600 = vector.broadcast %cst_260 : f32 to vector<2x128xf32>
    %601 = arith.mulf %600, %599 : vector<2x128xf32>
    %cst_261 = arith.constant 4.471500e-02 : f32
    %602 = vector.broadcast %cst_261 : f32 to vector<2x128xf32>
    %603 = arith.mulf %602, %599 : vector<2x128xf32>
    %604 = arith.mulf %603, %599 : vector<2x128xf32>
    %605 = arith.mulf %604, %599 : vector<2x128xf32>
    %606 = arith.addf %599, %605 : vector<2x128xf32>
    %cst_262 = arith.constant 0.797884583 : f32
    %607 = vector.broadcast %cst_262 : f32 to vector<2x128xf32>
    %608 = arith.mulf %607, %606 : vector<2x128xf32>
    %609 = math.tanh %608 : vector<2x128xf32>
    %cst_263 = arith.constant 1.000000e+00 : f32
    %610 = vector.broadcast %cst_263 : f32 to vector<2x128xf32>
    %611 = arith.addf %610, %609 : vector<2x128xf32>
    %612 = arith.mulf %601, %611 : vector<2x128xf32>
    %c13_264 = arith.constant 13 : index
    %c0_265 = arith.constant 0 : index
    %613 = memref.load %arg3[%c13_264, %c0_265] : memref<32x4xf32, #tpu.memory_space<smem>>
    %614 = vector.broadcast %613 : f32 to vector<2x128xf32>
    %615 = arith.mulf %612, %614 : vector<2x128xf32>
    %616 = arith.addf %572, %615 : vector<2x128xf32>
    %c13_266 = arith.constant 13 : index
    %c1_267 = arith.constant 1 : index
    %617 = memref.load %arg3[%c13_266, %c1_267] : memref<32x4xf32, #tpu.memory_space<smem>>
    %618 = vector.broadcast %617 : f32 to vector<2x128xf32>
    %619 = arith.mulf %612, %618 : vector<2x128xf32>
    %620 = arith.addf %576, %619 : vector<2x128xf32>
    %c13_268 = arith.constant 13 : index
    %c2_269 = arith.constant 2 : index
    %621 = memref.load %arg3[%c13_268, %c2_269] : memref<32x4xf32, #tpu.memory_space<smem>>
    %622 = vector.broadcast %621 : f32 to vector<2x128xf32>
    %623 = arith.mulf %612, %622 : vector<2x128xf32>
    %624 = arith.addf %580, %623 : vector<2x128xf32>
    %c13_270 = arith.constant 13 : index
    %c3_271 = arith.constant 3 : index
    %625 = memref.load %arg3[%c13_270, %c3_271] : memref<32x4xf32, #tpu.memory_space<smem>>
    %626 = vector.broadcast %625 : f32 to vector<2x128xf32>
    %627 = arith.mulf %612, %626 : vector<2x128xf32>
    %628 = arith.addf %584, %627 : vector<2x128xf32>
    %c0_272 = arith.constant 0 : index
    %c14 = arith.constant 14 : index
    %629 = memref.load %arg2[%c0_272, %c14] : memref<4x32xf32, #tpu.memory_space<smem>>
    %630 = vector.broadcast %629 : f32 to vector<2x128xf32>
    %631 = arith.mulf %2, %630 : vector<2x128xf32>
    %c1_273 = arith.constant 1 : index
    %c14_274 = arith.constant 14 : index
    %632 = memref.load %arg2[%c1_273, %c14_274] : memref<4x32xf32, #tpu.memory_space<smem>>
    %633 = vector.broadcast %632 : f32 to vector<2x128xf32>
    %634 = arith.mulf %4, %633 : vector<2x128xf32>
    %635 = arith.addf %631, %634 : vector<2x128xf32>
    %c2_275 = arith.constant 2 : index
    %c14_276 = arith.constant 14 : index
    %636 = memref.load %arg2[%c2_275, %c14_276] : memref<4x32xf32, #tpu.memory_space<smem>>
    %637 = vector.broadcast %636 : f32 to vector<2x128xf32>
    %638 = arith.mulf %6, %637 : vector<2x128xf32>
    %639 = arith.addf %635, %638 : vector<2x128xf32>
    %c3_277 = arith.constant 3 : index
    %c14_278 = arith.constant 14 : index
    %640 = memref.load %arg2[%c3_277, %c14_278] : memref<4x32xf32, #tpu.memory_space<smem>>
    %641 = vector.broadcast %640 : f32 to vector<2x128xf32>
    %642 = arith.mulf %8, %641 : vector<2x128xf32>
    %643 = arith.addf %639, %642 : vector<2x128xf32>
    %cst_279 = arith.constant 5.000000e-01 : f32
    %644 = vector.broadcast %cst_279 : f32 to vector<2x128xf32>
    %645 = arith.mulf %644, %643 : vector<2x128xf32>
    %cst_280 = arith.constant 4.471500e-02 : f32
    %646 = vector.broadcast %cst_280 : f32 to vector<2x128xf32>
    %647 = arith.mulf %646, %643 : vector<2x128xf32>
    %648 = arith.mulf %647, %643 : vector<2x128xf32>
    %649 = arith.mulf %648, %643 : vector<2x128xf32>
    %650 = arith.addf %643, %649 : vector<2x128xf32>
    %cst_281 = arith.constant 0.797884583 : f32
    %651 = vector.broadcast %cst_281 : f32 to vector<2x128xf32>
    %652 = arith.mulf %651, %650 : vector<2x128xf32>
    %653 = math.tanh %652 : vector<2x128xf32>
    %cst_282 = arith.constant 1.000000e+00 : f32
    %654 = vector.broadcast %cst_282 : f32 to vector<2x128xf32>
    %655 = arith.addf %654, %653 : vector<2x128xf32>
    %656 = arith.mulf %645, %655 : vector<2x128xf32>
    %c14_283 = arith.constant 14 : index
    %c0_284 = arith.constant 0 : index
    %657 = memref.load %arg3[%c14_283, %c0_284] : memref<32x4xf32, #tpu.memory_space<smem>>
    %658 = vector.broadcast %657 : f32 to vector<2x128xf32>
    %659 = arith.mulf %656, %658 : vector<2x128xf32>
    %660 = arith.addf %616, %659 : vector<2x128xf32>
    %c14_285 = arith.constant 14 : index
    %c1_286 = arith.constant 1 : index
    %661 = memref.load %arg3[%c14_285, %c1_286] : memref<32x4xf32, #tpu.memory_space<smem>>
    %662 = vector.broadcast %661 : f32 to vector<2x128xf32>
    %663 = arith.mulf %656, %662 : vector<2x128xf32>
    %664 = arith.addf %620, %663 : vector<2x128xf32>
    %c14_287 = arith.constant 14 : index
    %c2_288 = arith.constant 2 : index
    %665 = memref.load %arg3[%c14_287, %c2_288] : memref<32x4xf32, #tpu.memory_space<smem>>
    %666 = vector.broadcast %665 : f32 to vector<2x128xf32>
    %667 = arith.mulf %656, %666 : vector<2x128xf32>
    %668 = arith.addf %624, %667 : vector<2x128xf32>
    %c14_289 = arith.constant 14 : index
    %c3_290 = arith.constant 3 : index
    %669 = memref.load %arg3[%c14_289, %c3_290] : memref<32x4xf32, #tpu.memory_space<smem>>
    %670 = vector.broadcast %669 : f32 to vector<2x128xf32>
    %671 = arith.mulf %656, %670 : vector<2x128xf32>
    %672 = arith.addf %628, %671 : vector<2x128xf32>
    %c0_291 = arith.constant 0 : index
    %c15 = arith.constant 15 : index
    %673 = memref.load %arg2[%c0_291, %c15] : memref<4x32xf32, #tpu.memory_space<smem>>
    %674 = vector.broadcast %673 : f32 to vector<2x128xf32>
    %675 = arith.mulf %2, %674 : vector<2x128xf32>
    %c1_292 = arith.constant 1 : index
    %c15_293 = arith.constant 15 : index
    %676 = memref.load %arg2[%c1_292, %c15_293] : memref<4x32xf32, #tpu.memory_space<smem>>
    %677 = vector.broadcast %676 : f32 to vector<2x128xf32>
    %678 = arith.mulf %4, %677 : vector<2x128xf32>
    %679 = arith.addf %675, %678 : vector<2x128xf32>
    %c2_294 = arith.constant 2 : index
    %c15_295 = arith.constant 15 : index
    %680 = memref.load %arg2[%c2_294, %c15_295] : memref<4x32xf32, #tpu.memory_space<smem>>
    %681 = vector.broadcast %680 : f32 to vector<2x128xf32>
    %682 = arith.mulf %6, %681 : vector<2x128xf32>
    %683 = arith.addf %679, %682 : vector<2x128xf32>
    %c3_296 = arith.constant 3 : index
    %c15_297 = arith.constant 15 : index
    %684 = memref.load %arg2[%c3_296, %c15_297] : memref<4x32xf32, #tpu.memory_space<smem>>
    %685 = vector.broadcast %684 : f32 to vector<2x128xf32>
    %686 = arith.mulf %8, %685 : vector<2x128xf32>
    %687 = arith.addf %683, %686 : vector<2x128xf32>
    %cst_298 = arith.constant 5.000000e-01 : f32
    %688 = vector.broadcast %cst_298 : f32 to vector<2x128xf32>
    %689 = arith.mulf %688, %687 : vector<2x128xf32>
    %cst_299 = arith.constant 4.471500e-02 : f32
    %690 = vector.broadcast %cst_299 : f32 to vector<2x128xf32>
    %691 = arith.mulf %690, %687 : vector<2x128xf32>
    %692 = arith.mulf %691, %687 : vector<2x128xf32>
    %693 = arith.mulf %692, %687 : vector<2x128xf32>
    %694 = arith.addf %687, %693 : vector<2x128xf32>
    %cst_300 = arith.constant 0.797884583 : f32
    %695 = vector.broadcast %cst_300 : f32 to vector<2x128xf32>
    %696 = arith.mulf %695, %694 : vector<2x128xf32>
    %697 = math.tanh %696 : vector<2x128xf32>
    %cst_301 = arith.constant 1.000000e+00 : f32
    %698 = vector.broadcast %cst_301 : f32 to vector<2x128xf32>
    %699 = arith.addf %698, %697 : vector<2x128xf32>
    %700 = arith.mulf %689, %699 : vector<2x128xf32>
    %c15_302 = arith.constant 15 : index
    %c0_303 = arith.constant 0 : index
    %701 = memref.load %arg3[%c15_302, %c0_303] : memref<32x4xf32, #tpu.memory_space<smem>>
    %702 = vector.broadcast %701 : f32 to vector<2x128xf32>
    %703 = arith.mulf %700, %702 : vector<2x128xf32>
    %704 = arith.addf %660, %703 : vector<2x128xf32>
    %c15_304 = arith.constant 15 : index
    %c1_305 = arith.constant 1 : index
    %705 = memref.load %arg3[%c15_304, %c1_305] : memref<32x4xf32, #tpu.memory_space<smem>>
    %706 = vector.broadcast %705 : f32 to vector<2x128xf32>
    %707 = arith.mulf %700, %706 : vector<2x128xf32>
    %708 = arith.addf %664, %707 : vector<2x128xf32>
    %c15_306 = arith.constant 15 : index
    %c2_307 = arith.constant 2 : index
    %709 = memref.load %arg3[%c15_306, %c2_307] : memref<32x4xf32, #tpu.memory_space<smem>>
    %710 = vector.broadcast %709 : f32 to vector<2x128xf32>
    %711 = arith.mulf %700, %710 : vector<2x128xf32>
    %712 = arith.addf %668, %711 : vector<2x128xf32>
    %c15_308 = arith.constant 15 : index
    %c3_309 = arith.constant 3 : index
    %713 = memref.load %arg3[%c15_308, %c3_309] : memref<32x4xf32, #tpu.memory_space<smem>>
    %714 = vector.broadcast %713 : f32 to vector<2x128xf32>
    %715 = arith.mulf %700, %714 : vector<2x128xf32>
    %716 = arith.addf %672, %715 : vector<2x128xf32>
    %c0_310 = arith.constant 0 : index
    %c16 = arith.constant 16 : index
    %717 = memref.load %arg2[%c0_310, %c16] : memref<4x32xf32, #tpu.memory_space<smem>>
    %718 = vector.broadcast %717 : f32 to vector<2x128xf32>
    %719 = arith.mulf %2, %718 : vector<2x128xf32>
    %c1_311 = arith.constant 1 : index
    %c16_312 = arith.constant 16 : index
    %720 = memref.load %arg2[%c1_311, %c16_312] : memref<4x32xf32, #tpu.memory_space<smem>>
    %721 = vector.broadcast %720 : f32 to vector<2x128xf32>
    %722 = arith.mulf %4, %721 : vector<2x128xf32>
    %723 = arith.addf %719, %722 : vector<2x128xf32>
    %c2_313 = arith.constant 2 : index
    %c16_314 = arith.constant 16 : index
    %724 = memref.load %arg2[%c2_313, %c16_314] : memref<4x32xf32, #tpu.memory_space<smem>>
    %725 = vector.broadcast %724 : f32 to vector<2x128xf32>
    %726 = arith.mulf %6, %725 : vector<2x128xf32>
    %727 = arith.addf %723, %726 : vector<2x128xf32>
    %c3_315 = arith.constant 3 : index
    %c16_316 = arith.constant 16 : index
    %728 = memref.load %arg2[%c3_315, %c16_316] : memref<4x32xf32, #tpu.memory_space<smem>>
    %729 = vector.broadcast %728 : f32 to vector<2x128xf32>
    %730 = arith.mulf %8, %729 : vector<2x128xf32>
    %731 = arith.addf %727, %730 : vector<2x128xf32>
    %cst_317 = arith.constant 5.000000e-01 : f32
    %732 = vector.broadcast %cst_317 : f32 to vector<2x128xf32>
    %733 = arith.mulf %732, %731 : vector<2x128xf32>
    %cst_318 = arith.constant 4.471500e-02 : f32
    %734 = vector.broadcast %cst_318 : f32 to vector<2x128xf32>
    %735 = arith.mulf %734, %731 : vector<2x128xf32>
    %736 = arith.mulf %735, %731 : vector<2x128xf32>
    %737 = arith.mulf %736, %731 : vector<2x128xf32>
    %738 = arith.addf %731, %737 : vector<2x128xf32>
    %cst_319 = arith.constant 0.797884583 : f32
    %739 = vector.broadcast %cst_319 : f32 to vector<2x128xf32>
    %740 = arith.mulf %739, %738 : vector<2x128xf32>
    %741 = math.tanh %740 : vector<2x128xf32>
    %cst_320 = arith.constant 1.000000e+00 : f32
    %742 = vector.broadcast %cst_320 : f32 to vector<2x128xf32>
    %743 = arith.addf %742, %741 : vector<2x128xf32>
    %744 = arith.mulf %733, %743 : vector<2x128xf32>
    %c16_321 = arith.constant 16 : index
    %c0_322 = arith.constant 0 : index
    %745 = memref.load %arg3[%c16_321, %c0_322] : memref<32x4xf32, #tpu.memory_space<smem>>
    %746 = vector.broadcast %745 : f32 to vector<2x128xf32>
    %747 = arith.mulf %744, %746 : vector<2x128xf32>
    %748 = arith.addf %704, %747 : vector<2x128xf32>
    %c16_323 = arith.constant 16 : index
    %c1_324 = arith.constant 1 : index
    %749 = memref.load %arg3[%c16_323, %c1_324] : memref<32x4xf32, #tpu.memory_space<smem>>
    %750 = vector.broadcast %749 : f32 to vector<2x128xf32>
    %751 = arith.mulf %744, %750 : vector<2x128xf32>
    %752 = arith.addf %708, %751 : vector<2x128xf32>
    %c16_325 = arith.constant 16 : index
    %c2_326 = arith.constant 2 : index
    %753 = memref.load %arg3[%c16_325, %c2_326] : memref<32x4xf32, #tpu.memory_space<smem>>
    %754 = vector.broadcast %753 : f32 to vector<2x128xf32>
    %755 = arith.mulf %744, %754 : vector<2x128xf32>
    %756 = arith.addf %712, %755 : vector<2x128xf32>
    %c16_327 = arith.constant 16 : index
    %c3_328 = arith.constant 3 : index
    %757 = memref.load %arg3[%c16_327, %c3_328] : memref<32x4xf32, #tpu.memory_space<smem>>
    %758 = vector.broadcast %757 : f32 to vector<2x128xf32>
    %759 = arith.mulf %744, %758 : vector<2x128xf32>
    %760 = arith.addf %716, %759 : vector<2x128xf32>
    %c0_329 = arith.constant 0 : index
    %c17 = arith.constant 17 : index
    %761 = memref.load %arg2[%c0_329, %c17] : memref<4x32xf32, #tpu.memory_space<smem>>
    %762 = vector.broadcast %761 : f32 to vector<2x128xf32>
    %763 = arith.mulf %2, %762 : vector<2x128xf32>
    %c1_330 = arith.constant 1 : index
    %c17_331 = arith.constant 17 : index
    %764 = memref.load %arg2[%c1_330, %c17_331] : memref<4x32xf32, #tpu.memory_space<smem>>
    %765 = vector.broadcast %764 : f32 to vector<2x128xf32>
    %766 = arith.mulf %4, %765 : vector<2x128xf32>
    %767 = arith.addf %763, %766 : vector<2x128xf32>
    %c2_332 = arith.constant 2 : index
    %c17_333 = arith.constant 17 : index
    %768 = memref.load %arg2[%c2_332, %c17_333] : memref<4x32xf32, #tpu.memory_space<smem>>
    %769 = vector.broadcast %768 : f32 to vector<2x128xf32>
    %770 = arith.mulf %6, %769 : vector<2x128xf32>
    %771 = arith.addf %767, %770 : vector<2x128xf32>
    %c3_334 = arith.constant 3 : index
    %c17_335 = arith.constant 17 : index
    %772 = memref.load %arg2[%c3_334, %c17_335] : memref<4x32xf32, #tpu.memory_space<smem>>
    %773 = vector.broadcast %772 : f32 to vector<2x128xf32>
    %774 = arith.mulf %8, %773 : vector<2x128xf32>
    %775 = arith.addf %771, %774 : vector<2x128xf32>
    %cst_336 = arith.constant 5.000000e-01 : f32
    %776 = vector.broadcast %cst_336 : f32 to vector<2x128xf32>
    %777 = arith.mulf %776, %775 : vector<2x128xf32>
    %cst_337 = arith.constant 4.471500e-02 : f32
    %778 = vector.broadcast %cst_337 : f32 to vector<2x128xf32>
    %779 = arith.mulf %778, %775 : vector<2x128xf32>
    %780 = arith.mulf %779, %775 : vector<2x128xf32>
    %781 = arith.mulf %780, %775 : vector<2x128xf32>
    %782 = arith.addf %775, %781 : vector<2x128xf32>
    %cst_338 = arith.constant 0.797884583 : f32
    %783 = vector.broadcast %cst_338 : f32 to vector<2x128xf32>
    %784 = arith.mulf %783, %782 : vector<2x128xf32>
    %785 = math.tanh %784 : vector<2x128xf32>
    %cst_339 = arith.constant 1.000000e+00 : f32
    %786 = vector.broadcast %cst_339 : f32 to vector<2x128xf32>
    %787 = arith.addf %786, %785 : vector<2x128xf32>
    %788 = arith.mulf %777, %787 : vector<2x128xf32>
    %c17_340 = arith.constant 17 : index
    %c0_341 = arith.constant 0 : index
    %789 = memref.load %arg3[%c17_340, %c0_341] : memref<32x4xf32, #tpu.memory_space<smem>>
    %790 = vector.broadcast %789 : f32 to vector<2x128xf32>
    %791 = arith.mulf %788, %790 : vector<2x128xf32>
    %792 = arith.addf %748, %791 : vector<2x128xf32>
    %c17_342 = arith.constant 17 : index
    %c1_343 = arith.constant 1 : index
    %793 = memref.load %arg3[%c17_342, %c1_343] : memref<32x4xf32, #tpu.memory_space<smem>>
    %794 = vector.broadcast %793 : f32 to vector<2x128xf32>
    %795 = arith.mulf %788, %794 : vector<2x128xf32>
    %796 = arith.addf %752, %795 : vector<2x128xf32>
    %c17_344 = arith.constant 17 : index
    %c2_345 = arith.constant 2 : index
    %797 = memref.load %arg3[%c17_344, %c2_345] : memref<32x4xf32, #tpu.memory_space<smem>>
    %798 = vector.broadcast %797 : f32 to vector<2x128xf32>
    %799 = arith.mulf %788, %798 : vector<2x128xf32>
    %800 = arith.addf %756, %799 : vector<2x128xf32>
    %c17_346 = arith.constant 17 : index
    %c3_347 = arith.constant 3 : index
    %801 = memref.load %arg3[%c17_346, %c3_347] : memref<32x4xf32, #tpu.memory_space<smem>>
    %802 = vector.broadcast %801 : f32 to vector<2x128xf32>
    %803 = arith.mulf %788, %802 : vector<2x128xf32>
    %804 = arith.addf %760, %803 : vector<2x128xf32>
    %c0_348 = arith.constant 0 : index
    %c18 = arith.constant 18 : index
    %805 = memref.load %arg2[%c0_348, %c18] : memref<4x32xf32, #tpu.memory_space<smem>>
    %806 = vector.broadcast %805 : f32 to vector<2x128xf32>
    %807 = arith.mulf %2, %806 : vector<2x128xf32>
    %c1_349 = arith.constant 1 : index
    %c18_350 = arith.constant 18 : index
    %808 = memref.load %arg2[%c1_349, %c18_350] : memref<4x32xf32, #tpu.memory_space<smem>>
    %809 = vector.broadcast %808 : f32 to vector<2x128xf32>
    %810 = arith.mulf %4, %809 : vector<2x128xf32>
    %811 = arith.addf %807, %810 : vector<2x128xf32>
    %c2_351 = arith.constant 2 : index
    %c18_352 = arith.constant 18 : index
    %812 = memref.load %arg2[%c2_351, %c18_352] : memref<4x32xf32, #tpu.memory_space<smem>>
    %813 = vector.broadcast %812 : f32 to vector<2x128xf32>
    %814 = arith.mulf %6, %813 : vector<2x128xf32>
    %815 = arith.addf %811, %814 : vector<2x128xf32>
    %c3_353 = arith.constant 3 : index
    %c18_354 = arith.constant 18 : index
    %816 = memref.load %arg2[%c3_353, %c18_354] : memref<4x32xf32, #tpu.memory_space<smem>>
    %817 = vector.broadcast %816 : f32 to vector<2x128xf32>
    %818 = arith.mulf %8, %817 : vector<2x128xf32>
    %819 = arith.addf %815, %818 : vector<2x128xf32>
    %cst_355 = arith.constant 5.000000e-01 : f32
    %820 = vector.broadcast %cst_355 : f32 to vector<2x128xf32>
    %821 = arith.mulf %820, %819 : vector<2x128xf32>
    %cst_356 = arith.constant 4.471500e-02 : f32
    %822 = vector.broadcast %cst_356 : f32 to vector<2x128xf32>
    %823 = arith.mulf %822, %819 : vector<2x128xf32>
    %824 = arith.mulf %823, %819 : vector<2x128xf32>
    %825 = arith.mulf %824, %819 : vector<2x128xf32>
    %826 = arith.addf %819, %825 : vector<2x128xf32>
    %cst_357 = arith.constant 0.797884583 : f32
    %827 = vector.broadcast %cst_357 : f32 to vector<2x128xf32>
    %828 = arith.mulf %827, %826 : vector<2x128xf32>
    %829 = math.tanh %828 : vector<2x128xf32>
    %cst_358 = arith.constant 1.000000e+00 : f32
    %830 = vector.broadcast %cst_358 : f32 to vector<2x128xf32>
    %831 = arith.addf %830, %829 : vector<2x128xf32>
    %832 = arith.mulf %821, %831 : vector<2x128xf32>
    %c18_359 = arith.constant 18 : index
    %c0_360 = arith.constant 0 : index
    %833 = memref.load %arg3[%c18_359, %c0_360] : memref<32x4xf32, #tpu.memory_space<smem>>
    %834 = vector.broadcast %833 : f32 to vector<2x128xf32>
    %835 = arith.mulf %832, %834 : vector<2x128xf32>
    %836 = arith.addf %792, %835 : vector<2x128xf32>
    %c18_361 = arith.constant 18 : index
    %c1_362 = arith.constant 1 : index
    %837 = memref.load %arg3[%c18_361, %c1_362] : memref<32x4xf32, #tpu.memory_space<smem>>
    %838 = vector.broadcast %837 : f32 to vector<2x128xf32>
    %839 = arith.mulf %832, %838 : vector<2x128xf32>
    %840 = arith.addf %796, %839 : vector<2x128xf32>
    %c18_363 = arith.constant 18 : index
    %c2_364 = arith.constant 2 : index
    %841 = memref.load %arg3[%c18_363, %c2_364] : memref<32x4xf32, #tpu.memory_space<smem>>
    %842 = vector.broadcast %841 : f32 to vector<2x128xf32>
    %843 = arith.mulf %832, %842 : vector<2x128xf32>
    %844 = arith.addf %800, %843 : vector<2x128xf32>
    %c18_365 = arith.constant 18 : index
    %c3_366 = arith.constant 3 : index
    %845 = memref.load %arg3[%c18_365, %c3_366] : memref<32x4xf32, #tpu.memory_space<smem>>
    %846 = vector.broadcast %845 : f32 to vector<2x128xf32>
    %847 = arith.mulf %832, %846 : vector<2x128xf32>
    %848 = arith.addf %804, %847 : vector<2x128xf32>
    %c0_367 = arith.constant 0 : index
    %c19 = arith.constant 19 : index
    %849 = memref.load %arg2[%c0_367, %c19] : memref<4x32xf32, #tpu.memory_space<smem>>
    %850 = vector.broadcast %849 : f32 to vector<2x128xf32>
    %851 = arith.mulf %2, %850 : vector<2x128xf32>
    %c1_368 = arith.constant 1 : index
    %c19_369 = arith.constant 19 : index
    %852 = memref.load %arg2[%c1_368, %c19_369] : memref<4x32xf32, #tpu.memory_space<smem>>
    %853 = vector.broadcast %852 : f32 to vector<2x128xf32>
    %854 = arith.mulf %4, %853 : vector<2x128xf32>
    %855 = arith.addf %851, %854 : vector<2x128xf32>
    %c2_370 = arith.constant 2 : index
    %c19_371 = arith.constant 19 : index
    %856 = memref.load %arg2[%c2_370, %c19_371] : memref<4x32xf32, #tpu.memory_space<smem>>
    %857 = vector.broadcast %856 : f32 to vector<2x128xf32>
    %858 = arith.mulf %6, %857 : vector<2x128xf32>
    %859 = arith.addf %855, %858 : vector<2x128xf32>
    %c3_372 = arith.constant 3 : index
    %c19_373 = arith.constant 19 : index
    %860 = memref.load %arg2[%c3_372, %c19_373] : memref<4x32xf32, #tpu.memory_space<smem>>
    %861 = vector.broadcast %860 : f32 to vector<2x128xf32>
    %862 = arith.mulf %8, %861 : vector<2x128xf32>
    %863 = arith.addf %859, %862 : vector<2x128xf32>
    %cst_374 = arith.constant 5.000000e-01 : f32
    %864 = vector.broadcast %cst_374 : f32 to vector<2x128xf32>
    %865 = arith.mulf %864, %863 : vector<2x128xf32>
    %cst_375 = arith.constant 4.471500e-02 : f32
    %866 = vector.broadcast %cst_375 : f32 to vector<2x128xf32>
    %867 = arith.mulf %866, %863 : vector<2x128xf32>
    %868 = arith.mulf %867, %863 : vector<2x128xf32>
    %869 = arith.mulf %868, %863 : vector<2x128xf32>
    %870 = arith.addf %863, %869 : vector<2x128xf32>
    %cst_376 = arith.constant 0.797884583 : f32
    %871 = vector.broadcast %cst_376 : f32 to vector<2x128xf32>
    %872 = arith.mulf %871, %870 : vector<2x128xf32>
    %873 = math.tanh %872 : vector<2x128xf32>
    %cst_377 = arith.constant 1.000000e+00 : f32
    %874 = vector.broadcast %cst_377 : f32 to vector<2x128xf32>
    %875 = arith.addf %874, %873 : vector<2x128xf32>
    %876 = arith.mulf %865, %875 : vector<2x128xf32>
    %c19_378 = arith.constant 19 : index
    %c0_379 = arith.constant 0 : index
    %877 = memref.load %arg3[%c19_378, %c0_379] : memref<32x4xf32, #tpu.memory_space<smem>>
    %878 = vector.broadcast %877 : f32 to vector<2x128xf32>
    %879 = arith.mulf %876, %878 : vector<2x128xf32>
    %880 = arith.addf %836, %879 : vector<2x128xf32>
    %c19_380 = arith.constant 19 : index
    %c1_381 = arith.constant 1 : index
    %881 = memref.load %arg3[%c19_380, %c1_381] : memref<32x4xf32, #tpu.memory_space<smem>>
    %882 = vector.broadcast %881 : f32 to vector<2x128xf32>
    %883 = arith.mulf %876, %882 : vector<2x128xf32>
    %884 = arith.addf %840, %883 : vector<2x128xf32>
    %c19_382 = arith.constant 19 : index
    %c2_383 = arith.constant 2 : index
    %885 = memref.load %arg3[%c19_382, %c2_383] : memref<32x4xf32, #tpu.memory_space<smem>>
    %886 = vector.broadcast %885 : f32 to vector<2x128xf32>
    %887 = arith.mulf %876, %886 : vector<2x128xf32>
    %888 = arith.addf %844, %887 : vector<2x128xf32>
    %c19_384 = arith.constant 19 : index
    %c3_385 = arith.constant 3 : index
    %889 = memref.load %arg3[%c19_384, %c3_385] : memref<32x4xf32, #tpu.memory_space<smem>>
    %890 = vector.broadcast %889 : f32 to vector<2x128xf32>
    %891 = arith.mulf %876, %890 : vector<2x128xf32>
    %892 = arith.addf %848, %891 : vector<2x128xf32>
    %c0_386 = arith.constant 0 : index
    %c20 = arith.constant 20 : index
    %893 = memref.load %arg2[%c0_386, %c20] : memref<4x32xf32, #tpu.memory_space<smem>>
    %894 = vector.broadcast %893 : f32 to vector<2x128xf32>
    %895 = arith.mulf %2, %894 : vector<2x128xf32>
    %c1_387 = arith.constant 1 : index
    %c20_388 = arith.constant 20 : index
    %896 = memref.load %arg2[%c1_387, %c20_388] : memref<4x32xf32, #tpu.memory_space<smem>>
    %897 = vector.broadcast %896 : f32 to vector<2x128xf32>
    %898 = arith.mulf %4, %897 : vector<2x128xf32>
    %899 = arith.addf %895, %898 : vector<2x128xf32>
    %c2_389 = arith.constant 2 : index
    %c20_390 = arith.constant 20 : index
    %900 = memref.load %arg2[%c2_389, %c20_390] : memref<4x32xf32, #tpu.memory_space<smem>>
    %901 = vector.broadcast %900 : f32 to vector<2x128xf32>
    %902 = arith.mulf %6, %901 : vector<2x128xf32>
    %903 = arith.addf %899, %902 : vector<2x128xf32>
    %c3_391 = arith.constant 3 : index
    %c20_392 = arith.constant 20 : index
    %904 = memref.load %arg2[%c3_391, %c20_392] : memref<4x32xf32, #tpu.memory_space<smem>>
    %905 = vector.broadcast %904 : f32 to vector<2x128xf32>
    %906 = arith.mulf %8, %905 : vector<2x128xf32>
    %907 = arith.addf %903, %906 : vector<2x128xf32>
    %cst_393 = arith.constant 5.000000e-01 : f32
    %908 = vector.broadcast %cst_393 : f32 to vector<2x128xf32>
    %909 = arith.mulf %908, %907 : vector<2x128xf32>
    %cst_394 = arith.constant 4.471500e-02 : f32
    %910 = vector.broadcast %cst_394 : f32 to vector<2x128xf32>
    %911 = arith.mulf %910, %907 : vector<2x128xf32>
    %912 = arith.mulf %911, %907 : vector<2x128xf32>
    %913 = arith.mulf %912, %907 : vector<2x128xf32>
    %914 = arith.addf %907, %913 : vector<2x128xf32>
    %cst_395 = arith.constant 0.797884583 : f32
    %915 = vector.broadcast %cst_395 : f32 to vector<2x128xf32>
    %916 = arith.mulf %915, %914 : vector<2x128xf32>
    %917 = math.tanh %916 : vector<2x128xf32>
    %cst_396 = arith.constant 1.000000e+00 : f32
    %918 = vector.broadcast %cst_396 : f32 to vector<2x128xf32>
    %919 = arith.addf %918, %917 : vector<2x128xf32>
    %920 = arith.mulf %909, %919 : vector<2x128xf32>
    %c20_397 = arith.constant 20 : index
    %c0_398 = arith.constant 0 : index
    %921 = memref.load %arg3[%c20_397, %c0_398] : memref<32x4xf32, #tpu.memory_space<smem>>
    %922 = vector.broadcast %921 : f32 to vector<2x128xf32>
    %923 = arith.mulf %920, %922 : vector<2x128xf32>
    %924 = arith.addf %880, %923 : vector<2x128xf32>
    %c20_399 = arith.constant 20 : index
    %c1_400 = arith.constant 1 : index
    %925 = memref.load %arg3[%c20_399, %c1_400] : memref<32x4xf32, #tpu.memory_space<smem>>
    %926 = vector.broadcast %925 : f32 to vector<2x128xf32>
    %927 = arith.mulf %920, %926 : vector<2x128xf32>
    %928 = arith.addf %884, %927 : vector<2x128xf32>
    %c20_401 = arith.constant 20 : index
    %c2_402 = arith.constant 2 : index
    %929 = memref.load %arg3[%c20_401, %c2_402] : memref<32x4xf32, #tpu.memory_space<smem>>
    %930 = vector.broadcast %929 : f32 to vector<2x128xf32>
    %931 = arith.mulf %920, %930 : vector<2x128xf32>
    %932 = arith.addf %888, %931 : vector<2x128xf32>
    %c20_403 = arith.constant 20 : index
    %c3_404 = arith.constant 3 : index
    %933 = memref.load %arg3[%c20_403, %c3_404] : memref<32x4xf32, #tpu.memory_space<smem>>
    %934 = vector.broadcast %933 : f32 to vector<2x128xf32>
    %935 = arith.mulf %920, %934 : vector<2x128xf32>
    %936 = arith.addf %892, %935 : vector<2x128xf32>
    %c0_405 = arith.constant 0 : index
    %c21 = arith.constant 21 : index
    %937 = memref.load %arg2[%c0_405, %c21] : memref<4x32xf32, #tpu.memory_space<smem>>
    %938 = vector.broadcast %937 : f32 to vector<2x128xf32>
    %939 = arith.mulf %2, %938 : vector<2x128xf32>
    %c1_406 = arith.constant 1 : index
    %c21_407 = arith.constant 21 : index
    %940 = memref.load %arg2[%c1_406, %c21_407] : memref<4x32xf32, #tpu.memory_space<smem>>
    %941 = vector.broadcast %940 : f32 to vector<2x128xf32>
    %942 = arith.mulf %4, %941 : vector<2x128xf32>
    %943 = arith.addf %939, %942 : vector<2x128xf32>
    %c2_408 = arith.constant 2 : index
    %c21_409 = arith.constant 21 : index
    %944 = memref.load %arg2[%c2_408, %c21_409] : memref<4x32xf32, #tpu.memory_space<smem>>
    %945 = vector.broadcast %944 : f32 to vector<2x128xf32>
    %946 = arith.mulf %6, %945 : vector<2x128xf32>
    %947 = arith.addf %943, %946 : vector<2x128xf32>
    %c3_410 = arith.constant 3 : index
    %c21_411 = arith.constant 21 : index
    %948 = memref.load %arg2[%c3_410, %c21_411] : memref<4x32xf32, #tpu.memory_space<smem>>
    %949 = vector.broadcast %948 : f32 to vector<2x128xf32>
    %950 = arith.mulf %8, %949 : vector<2x128xf32>
    %951 = arith.addf %947, %950 : vector<2x128xf32>
    %cst_412 = arith.constant 5.000000e-01 : f32
    %952 = vector.broadcast %cst_412 : f32 to vector<2x128xf32>
    %953 = arith.mulf %952, %951 : vector<2x128xf32>
    %cst_413 = arith.constant 4.471500e-02 : f32
    %954 = vector.broadcast %cst_413 : f32 to vector<2x128xf32>
    %955 = arith.mulf %954, %951 : vector<2x128xf32>
    %956 = arith.mulf %955, %951 : vector<2x128xf32>
    %957 = arith.mulf %956, %951 : vector<2x128xf32>
    %958 = arith.addf %951, %957 : vector<2x128xf32>
    %cst_414 = arith.constant 0.797884583 : f32
    %959 = vector.broadcast %cst_414 : f32 to vector<2x128xf32>
    %960 = arith.mulf %959, %958 : vector<2x128xf32>
    %961 = math.tanh %960 : vector<2x128xf32>
    %cst_415 = arith.constant 1.000000e+00 : f32
    %962 = vector.broadcast %cst_415 : f32 to vector<2x128xf32>
    %963 = arith.addf %962, %961 : vector<2x128xf32>
    %964 = arith.mulf %953, %963 : vector<2x128xf32>
    %c21_416 = arith.constant 21 : index
    %c0_417 = arith.constant 0 : index
    %965 = memref.load %arg3[%c21_416, %c0_417] : memref<32x4xf32, #tpu.memory_space<smem>>
    %966 = vector.broadcast %965 : f32 to vector<2x128xf32>
    %967 = arith.mulf %964, %966 : vector<2x128xf32>
    %968 = arith.addf %924, %967 : vector<2x128xf32>
    %c21_418 = arith.constant 21 : index
    %c1_419 = arith.constant 1 : index
    %969 = memref.load %arg3[%c21_418, %c1_419] : memref<32x4xf32, #tpu.memory_space<smem>>
    %970 = vector.broadcast %969 : f32 to vector<2x128xf32>
    %971 = arith.mulf %964, %970 : vector<2x128xf32>
    %972 = arith.addf %928, %971 : vector<2x128xf32>
    %c21_420 = arith.constant 21 : index
    %c2_421 = arith.constant 2 : index
    %973 = memref.load %arg3[%c21_420, %c2_421] : memref<32x4xf32, #tpu.memory_space<smem>>
    %974 = vector.broadcast %973 : f32 to vector<2x128xf32>
    %975 = arith.mulf %964, %974 : vector<2x128xf32>
    %976 = arith.addf %932, %975 : vector<2x128xf32>
    %c21_422 = arith.constant 21 : index
    %c3_423 = arith.constant 3 : index
    %977 = memref.load %arg3[%c21_422, %c3_423] : memref<32x4xf32, #tpu.memory_space<smem>>
    %978 = vector.broadcast %977 : f32 to vector<2x128xf32>
    %979 = arith.mulf %964, %978 : vector<2x128xf32>
    %980 = arith.addf %936, %979 : vector<2x128xf32>
    %c0_424 = arith.constant 0 : index
    %c22 = arith.constant 22 : index
    %981 = memref.load %arg2[%c0_424, %c22] : memref<4x32xf32, #tpu.memory_space<smem>>
    %982 = vector.broadcast %981 : f32 to vector<2x128xf32>
    %983 = arith.mulf %2, %982 : vector<2x128xf32>
    %c1_425 = arith.constant 1 : index
    %c22_426 = arith.constant 22 : index
    %984 = memref.load %arg2[%c1_425, %c22_426] : memref<4x32xf32, #tpu.memory_space<smem>>
    %985 = vector.broadcast %984 : f32 to vector<2x128xf32>
    %986 = arith.mulf %4, %985 : vector<2x128xf32>
    %987 = arith.addf %983, %986 : vector<2x128xf32>
    %c2_427 = arith.constant 2 : index
    %c22_428 = arith.constant 22 : index
    %988 = memref.load %arg2[%c2_427, %c22_428] : memref<4x32xf32, #tpu.memory_space<smem>>
    %989 = vector.broadcast %988 : f32 to vector<2x128xf32>
    %990 = arith.mulf %6, %989 : vector<2x128xf32>
    %991 = arith.addf %987, %990 : vector<2x128xf32>
    %c3_429 = arith.constant 3 : index
    %c22_430 = arith.constant 22 : index
    %992 = memref.load %arg2[%c3_429, %c22_430] : memref<4x32xf32, #tpu.memory_space<smem>>
    %993 = vector.broadcast %992 : f32 to vector<2x128xf32>
    %994 = arith.mulf %8, %993 : vector<2x128xf32>
    %995 = arith.addf %991, %994 : vector<2x128xf32>
    %cst_431 = arith.constant 5.000000e-01 : f32
    %996 = vector.broadcast %cst_431 : f32 to vector<2x128xf32>
    %997 = arith.mulf %996, %995 : vector<2x128xf32>
    %cst_432 = arith.constant 4.471500e-02 : f32
    %998 = vector.broadcast %cst_432 : f32 to vector<2x128xf32>
    %999 = arith.mulf %998, %995 : vector<2x128xf32>
    %1000 = arith.mulf %999, %995 : vector<2x128xf32>
    %1001 = arith.mulf %1000, %995 : vector<2x128xf32>
    %1002 = arith.addf %995, %1001 : vector<2x128xf32>
    %cst_433 = arith.constant 0.797884583 : f32
    %1003 = vector.broadcast %cst_433 : f32 to vector<2x128xf32>
    %1004 = arith.mulf %1003, %1002 : vector<2x128xf32>
    %1005 = math.tanh %1004 : vector<2x128xf32>
    %cst_434 = arith.constant 1.000000e+00 : f32
    %1006 = vector.broadcast %cst_434 : f32 to vector<2x128xf32>
    %1007 = arith.addf %1006, %1005 : vector<2x128xf32>
    %1008 = arith.mulf %997, %1007 : vector<2x128xf32>
    %c22_435 = arith.constant 22 : index
    %c0_436 = arith.constant 0 : index
    %1009 = memref.load %arg3[%c22_435, %c0_436] : memref<32x4xf32, #tpu.memory_space<smem>>
    %1010 = vector.broadcast %1009 : f32 to vector<2x128xf32>
    %1011 = arith.mulf %1008, %1010 : vector<2x128xf32>
    %1012 = arith.addf %968, %1011 : vector<2x128xf32>
    %c22_437 = arith.constant 22 : index
    %c1_438 = arith.constant 1 : index
    %1013 = memref.load %arg3[%c22_437, %c1_438] : memref<32x4xf32, #tpu.memory_space<smem>>
    %1014 = vector.broadcast %1013 : f32 to vector<2x128xf32>
    %1015 = arith.mulf %1008, %1014 : vector<2x128xf32>
    %1016 = arith.addf %972, %1015 : vector<2x128xf32>
    %c22_439 = arith.constant 22 : index
    %c2_440 = arith.constant 2 : index
    %1017 = memref.load %arg3[%c22_439, %c2_440] : memref<32x4xf32, #tpu.memory_space<smem>>
    %1018 = vector.broadcast %1017 : f32 to vector<2x128xf32>
    %1019 = arith.mulf %1008, %1018 : vector<2x128xf32>
    %1020 = arith.addf %976, %1019 : vector<2x128xf32>
    %c22_441 = arith.constant 22 : index
    %c3_442 = arith.constant 3 : index
    %1021 = memref.load %arg3[%c22_441, %c3_442] : memref<32x4xf32, #tpu.memory_space<smem>>
    %1022 = vector.broadcast %1021 : f32 to vector<2x128xf32>
    %1023 = arith.mulf %1008, %1022 : vector<2x128xf32>
    %1024 = arith.addf %980, %1023 : vector<2x128xf32>
    %c0_443 = arith.constant 0 : index
    %c23 = arith.constant 23 : index
    %1025 = memref.load %arg2[%c0_443, %c23] : memref<4x32xf32, #tpu.memory_space<smem>>
    %1026 = vector.broadcast %1025 : f32 to vector<2x128xf32>
    %1027 = arith.mulf %2, %1026 : vector<2x128xf32>
    %c1_444 = arith.constant 1 : index
    %c23_445 = arith.constant 23 : index
    %1028 = memref.load %arg2[%c1_444, %c23_445] : memref<4x32xf32, #tpu.memory_space<smem>>
    %1029 = vector.broadcast %1028 : f32 to vector<2x128xf32>
    %1030 = arith.mulf %4, %1029 : vector<2x128xf32>
    %1031 = arith.addf %1027, %1030 : vector<2x128xf32>
    %c2_446 = arith.constant 2 : index
    %c23_447 = arith.constant 23 : index
    %1032 = memref.load %arg2[%c2_446, %c23_447] : memref<4x32xf32, #tpu.memory_space<smem>>
    %1033 = vector.broadcast %1032 : f32 to vector<2x128xf32>
    %1034 = arith.mulf %6, %1033 : vector<2x128xf32>
    %1035 = arith.addf %1031, %1034 : vector<2x128xf32>
    %c3_448 = arith.constant 3 : index
    %c23_449 = arith.constant 23 : index
    %1036 = memref.load %arg2[%c3_448, %c23_449] : memref<4x32xf32, #tpu.memory_space<smem>>
    %1037 = vector.broadcast %1036 : f32 to vector<2x128xf32>
    %1038 = arith.mulf %8, %1037 : vector<2x128xf32>
    %1039 = arith.addf %1035, %1038 : vector<2x128xf32>
    %cst_450 = arith.constant 5.000000e-01 : f32
    %1040 = vector.broadcast %cst_450 : f32 to vector<2x128xf32>
    %1041 = arith.mulf %1040, %1039 : vector<2x128xf32>
    %cst_451 = arith.constant 4.471500e-02 : f32
    %1042 = vector.broadcast %cst_451 : f32 to vector<2x128xf32>
    %1043 = arith.mulf %1042, %1039 : vector<2x128xf32>
    %1044 = arith.mulf %1043, %1039 : vector<2x128xf32>
    %1045 = arith.mulf %1044, %1039 : vector<2x128xf32>
    %1046 = arith.addf %1039, %1045 : vector<2x128xf32>
    %cst_452 = arith.constant 0.797884583 : f32
    %1047 = vector.broadcast %cst_452 : f32 to vector<2x128xf32>
    %1048 = arith.mulf %1047, %1046 : vector<2x128xf32>
    %1049 = math.tanh %1048 : vector<2x128xf32>
    %cst_453 = arith.constant 1.000000e+00 : f32
    %1050 = vector.broadcast %cst_453 : f32 to vector<2x128xf32>
    %1051 = arith.addf %1050, %1049 : vector<2x128xf32>
    %1052 = arith.mulf %1041, %1051 : vector<2x128xf32>
    %c23_454 = arith.constant 23 : index
    %c0_455 = arith.constant 0 : index
    %1053 = memref.load %arg3[%c23_454, %c0_455] : memref<32x4xf32, #tpu.memory_space<smem>>
    %1054 = vector.broadcast %1053 : f32 to vector<2x128xf32>
    %1055 = arith.mulf %1052, %1054 : vector<2x128xf32>
    %1056 = arith.addf %1012, %1055 : vector<2x128xf32>
    %c23_456 = arith.constant 23 : index
    %c1_457 = arith.constant 1 : index
    %1057 = memref.load %arg3[%c23_456, %c1_457] : memref<32x4xf32, #tpu.memory_space<smem>>
    %1058 = vector.broadcast %1057 : f32 to vector<2x128xf32>
    %1059 = arith.mulf %1052, %1058 : vector<2x128xf32>
    %1060 = arith.addf %1016, %1059 : vector<2x128xf32>
    %c23_458 = arith.constant 23 : index
    %c2_459 = arith.constant 2 : index
    %1061 = memref.load %arg3[%c23_458, %c2_459] : memref<32x4xf32, #tpu.memory_space<smem>>
    %1062 = vector.broadcast %1061 : f32 to vector<2x128xf32>
    %1063 = arith.mulf %1052, %1062 : vector<2x128xf32>
    %1064 = arith.addf %1020, %1063 : vector<2x128xf32>
    %c23_460 = arith.constant 23 : index
    %c3_461 = arith.constant 3 : index
    %1065 = memref.load %arg3[%c23_460, %c3_461] : memref<32x4xf32, #tpu.memory_space<smem>>
    %1066 = vector.broadcast %1065 : f32 to vector<2x128xf32>
    %1067 = arith.mulf %1052, %1066 : vector<2x128xf32>
    %1068 = arith.addf %1024, %1067 : vector<2x128xf32>
    %c0_462 = arith.constant 0 : index
    %c24 = arith.constant 24 : index
    %1069 = memref.load %arg2[%c0_462, %c24] : memref<4x32xf32, #tpu.memory_space<smem>>
    %1070 = vector.broadcast %1069 : f32 to vector<2x128xf32>
    %1071 = arith.mulf %2, %1070 : vector<2x128xf32>
    %c1_463 = arith.constant 1 : index
    %c24_464 = arith.constant 24 : index
    %1072 = memref.load %arg2[%c1_463, %c24_464] : memref<4x32xf32, #tpu.memory_space<smem>>
    %1073 = vector.broadcast %1072 : f32 to vector<2x128xf32>
    %1074 = arith.mulf %4, %1073 : vector<2x128xf32>
    %1075 = arith.addf %1071, %1074 : vector<2x128xf32>
    %c2_465 = arith.constant 2 : index
    %c24_466 = arith.constant 24 : index
    %1076 = memref.load %arg2[%c2_465, %c24_466] : memref<4x32xf32, #tpu.memory_space<smem>>
    %1077 = vector.broadcast %1076 : f32 to vector<2x128xf32>
    %1078 = arith.mulf %6, %1077 : vector<2x128xf32>
    %1079 = arith.addf %1075, %1078 : vector<2x128xf32>
    %c3_467 = arith.constant 3 : index
    %c24_468 = arith.constant 24 : index
    %1080 = memref.load %arg2[%c3_467, %c24_468] : memref<4x32xf32, #tpu.memory_space<smem>>
    %1081 = vector.broadcast %1080 : f32 to vector<2x128xf32>
    %1082 = arith.mulf %8, %1081 : vector<2x128xf32>
    %1083 = arith.addf %1079, %1082 : vector<2x128xf32>
    %cst_469 = arith.constant 5.000000e-01 : f32
    %1084 = vector.broadcast %cst_469 : f32 to vector<2x128xf32>
    %1085 = arith.mulf %1084, %1083 : vector<2x128xf32>
    %cst_470 = arith.constant 4.471500e-02 : f32
    %1086 = vector.broadcast %cst_470 : f32 to vector<2x128xf32>
    %1087 = arith.mulf %1086, %1083 : vector<2x128xf32>
    %1088 = arith.mulf %1087, %1083 : vector<2x128xf32>
    %1089 = arith.mulf %1088, %1083 : vector<2x128xf32>
    %1090 = arith.addf %1083, %1089 : vector<2x128xf32>
    %cst_471 = arith.constant 0.797884583 : f32
    %1091 = vector.broadcast %cst_471 : f32 to vector<2x128xf32>
    %1092 = arith.mulf %1091, %1090 : vector<2x128xf32>
    %1093 = math.tanh %1092 : vector<2x128xf32>
    %cst_472 = arith.constant 1.000000e+00 : f32
    %1094 = vector.broadcast %cst_472 : f32 to vector<2x128xf32>
    %1095 = arith.addf %1094, %1093 : vector<2x128xf32>
    %1096 = arith.mulf %1085, %1095 : vector<2x128xf32>
    %c24_473 = arith.constant 24 : index
    %c0_474 = arith.constant 0 : index
    %1097 = memref.load %arg3[%c24_473, %c0_474] : memref<32x4xf32, #tpu.memory_space<smem>>
    %1098 = vector.broadcast %1097 : f32 to vector<2x128xf32>
    %1099 = arith.mulf %1096, %1098 : vector<2x128xf32>
    %1100 = arith.addf %1056, %1099 : vector<2x128xf32>
    %c24_475 = arith.constant 24 : index
    %c1_476 = arith.constant 1 : index
    %1101 = memref.load %arg3[%c24_475, %c1_476] : memref<32x4xf32, #tpu.memory_space<smem>>
    %1102 = vector.broadcast %1101 : f32 to vector<2x128xf32>
    %1103 = arith.mulf %1096, %1102 : vector<2x128xf32>
    %1104 = arith.addf %1060, %1103 : vector<2x128xf32>
    %c24_477 = arith.constant 24 : index
    %c2_478 = arith.constant 2 : index
    %1105 = memref.load %arg3[%c24_477, %c2_478] : memref<32x4xf32, #tpu.memory_space<smem>>
    %1106 = vector.broadcast %1105 : f32 to vector<2x128xf32>
    %1107 = arith.mulf %1096, %1106 : vector<2x128xf32>
    %1108 = arith.addf %1064, %1107 : vector<2x128xf32>
    %c24_479 = arith.constant 24 : index
    %c3_480 = arith.constant 3 : index
    %1109 = memref.load %arg3[%c24_479, %c3_480] : memref<32x4xf32, #tpu.memory_space<smem>>
    %1110 = vector.broadcast %1109 : f32 to vector<2x128xf32>
    %1111 = arith.mulf %1096, %1110 : vector<2x128xf32>
    %1112 = arith.addf %1068, %1111 : vector<2x128xf32>
    %c0_481 = arith.constant 0 : index
    %c25 = arith.constant 25 : index
    %1113 = memref.load %arg2[%c0_481, %c25] : memref<4x32xf32, #tpu.memory_space<smem>>
    %1114 = vector.broadcast %1113 : f32 to vector<2x128xf32>
    %1115 = arith.mulf %2, %1114 : vector<2x128xf32>
    %c1_482 = arith.constant 1 : index
    %c25_483 = arith.constant 25 : index
    %1116 = memref.load %arg2[%c1_482, %c25_483] : memref<4x32xf32, #tpu.memory_space<smem>>
    %1117 = vector.broadcast %1116 : f32 to vector<2x128xf32>
    %1118 = arith.mulf %4, %1117 : vector<2x128xf32>
    %1119 = arith.addf %1115, %1118 : vector<2x128xf32>
    %c2_484 = arith.constant 2 : index
    %c25_485 = arith.constant 25 : index
    %1120 = memref.load %arg2[%c2_484, %c25_485] : memref<4x32xf32, #tpu.memory_space<smem>>
    %1121 = vector.broadcast %1120 : f32 to vector<2x128xf32>
    %1122 = arith.mulf %6, %1121 : vector<2x128xf32>
    %1123 = arith.addf %1119, %1122 : vector<2x128xf32>
    %c3_486 = arith.constant 3 : index
    %c25_487 = arith.constant 25 : index
    %1124 = memref.load %arg2[%c3_486, %c25_487] : memref<4x32xf32, #tpu.memory_space<smem>>
    %1125 = vector.broadcast %1124 : f32 to vector<2x128xf32>
    %1126 = arith.mulf %8, %1125 : vector<2x128xf32>
    %1127 = arith.addf %1123, %1126 : vector<2x128xf32>
    %cst_488 = arith.constant 5.000000e-01 : f32
    %1128 = vector.broadcast %cst_488 : f32 to vector<2x128xf32>
    %1129 = arith.mulf %1128, %1127 : vector<2x128xf32>
    %cst_489 = arith.constant 4.471500e-02 : f32
    %1130 = vector.broadcast %cst_489 : f32 to vector<2x128xf32>
    %1131 = arith.mulf %1130, %1127 : vector<2x128xf32>
    %1132 = arith.mulf %1131, %1127 : vector<2x128xf32>
    %1133 = arith.mulf %1132, %1127 : vector<2x128xf32>
    %1134 = arith.addf %1127, %1133 : vector<2x128xf32>
    %cst_490 = arith.constant 0.797884583 : f32
    %1135 = vector.broadcast %cst_490 : f32 to vector<2x128xf32>
    %1136 = arith.mulf %1135, %1134 : vector<2x128xf32>
    %1137 = math.tanh %1136 : vector<2x128xf32>
    %cst_491 = arith.constant 1.000000e+00 : f32
    %1138 = vector.broadcast %cst_491 : f32 to vector<2x128xf32>
    %1139 = arith.addf %1138, %1137 : vector<2x128xf32>
    %1140 = arith.mulf %1129, %1139 : vector<2x128xf32>
    %c25_492 = arith.constant 25 : index
    %c0_493 = arith.constant 0 : index
    %1141 = memref.load %arg3[%c25_492, %c0_493] : memref<32x4xf32, #tpu.memory_space<smem>>
    %1142 = vector.broadcast %1141 : f32 to vector<2x128xf32>
    %1143 = arith.mulf %1140, %1142 : vector<2x128xf32>
    %1144 = arith.addf %1100, %1143 : vector<2x128xf32>
    %c25_494 = arith.constant 25 : index
    %c1_495 = arith.constant 1 : index
    %1145 = memref.load %arg3[%c25_494, %c1_495] : memref<32x4xf32, #tpu.memory_space<smem>>
    %1146 = vector.broadcast %1145 : f32 to vector<2x128xf32>
    %1147 = arith.mulf %1140, %1146 : vector<2x128xf32>
    %1148 = arith.addf %1104, %1147 : vector<2x128xf32>
    %c25_496 = arith.constant 25 : index
    %c2_497 = arith.constant 2 : index
    %1149 = memref.load %arg3[%c25_496, %c2_497] : memref<32x4xf32, #tpu.memory_space<smem>>
    %1150 = vector.broadcast %1149 : f32 to vector<2x128xf32>
    %1151 = arith.mulf %1140, %1150 : vector<2x128xf32>
    %1152 = arith.addf %1108, %1151 : vector<2x128xf32>
    %c25_498 = arith.constant 25 : index
    %c3_499 = arith.constant 3 : index
    %1153 = memref.load %arg3[%c25_498, %c3_499] : memref<32x4xf32, #tpu.memory_space<smem>>
    %1154 = vector.broadcast %1153 : f32 to vector<2x128xf32>
    %1155 = arith.mulf %1140, %1154 : vector<2x128xf32>
    %1156 = arith.addf %1112, %1155 : vector<2x128xf32>
    %c0_500 = arith.constant 0 : index
    %c26 = arith.constant 26 : index
    %1157 = memref.load %arg2[%c0_500, %c26] : memref<4x32xf32, #tpu.memory_space<smem>>
    %1158 = vector.broadcast %1157 : f32 to vector<2x128xf32>
    %1159 = arith.mulf %2, %1158 : vector<2x128xf32>
    %c1_501 = arith.constant 1 : index
    %c26_502 = arith.constant 26 : index
    %1160 = memref.load %arg2[%c1_501, %c26_502] : memref<4x32xf32, #tpu.memory_space<smem>>
    %1161 = vector.broadcast %1160 : f32 to vector<2x128xf32>
    %1162 = arith.mulf %4, %1161 : vector<2x128xf32>
    %1163 = arith.addf %1159, %1162 : vector<2x128xf32>
    %c2_503 = arith.constant 2 : index
    %c26_504 = arith.constant 26 : index
    %1164 = memref.load %arg2[%c2_503, %c26_504] : memref<4x32xf32, #tpu.memory_space<smem>>
    %1165 = vector.broadcast %1164 : f32 to vector<2x128xf32>
    %1166 = arith.mulf %6, %1165 : vector<2x128xf32>
    %1167 = arith.addf %1163, %1166 : vector<2x128xf32>
    %c3_505 = arith.constant 3 : index
    %c26_506 = arith.constant 26 : index
    %1168 = memref.load %arg2[%c3_505, %c26_506] : memref<4x32xf32, #tpu.memory_space<smem>>
    %1169 = vector.broadcast %1168 : f32 to vector<2x128xf32>
    %1170 = arith.mulf %8, %1169 : vector<2x128xf32>
    %1171 = arith.addf %1167, %1170 : vector<2x128xf32>
    %cst_507 = arith.constant 5.000000e-01 : f32
    %1172 = vector.broadcast %cst_507 : f32 to vector<2x128xf32>
    %1173 = arith.mulf %1172, %1171 : vector<2x128xf32>
    %cst_508 = arith.constant 4.471500e-02 : f32
    %1174 = vector.broadcast %cst_508 : f32 to vector<2x128xf32>
    %1175 = arith.mulf %1174, %1171 : vector<2x128xf32>
    %1176 = arith.mulf %1175, %1171 : vector<2x128xf32>
    %1177 = arith.mulf %1176, %1171 : vector<2x128xf32>
    %1178 = arith.addf %1171, %1177 : vector<2x128xf32>
    %cst_509 = arith.constant 0.797884583 : f32
    %1179 = vector.broadcast %cst_509 : f32 to vector<2x128xf32>
    %1180 = arith.mulf %1179, %1178 : vector<2x128xf32>
    %1181 = math.tanh %1180 : vector<2x128xf32>
    %cst_510 = arith.constant 1.000000e+00 : f32
    %1182 = vector.broadcast %cst_510 : f32 to vector<2x128xf32>
    %1183 = arith.addf %1182, %1181 : vector<2x128xf32>
    %1184 = arith.mulf %1173, %1183 : vector<2x128xf32>
    %c26_511 = arith.constant 26 : index
    %c0_512 = arith.constant 0 : index
    %1185 = memref.load %arg3[%c26_511, %c0_512] : memref<32x4xf32, #tpu.memory_space<smem>>
    %1186 = vector.broadcast %1185 : f32 to vector<2x128xf32>
    %1187 = arith.mulf %1184, %1186 : vector<2x128xf32>
    %1188 = arith.addf %1144, %1187 : vector<2x128xf32>
    %c26_513 = arith.constant 26 : index
    %c1_514 = arith.constant 1 : index
    %1189 = memref.load %arg3[%c26_513, %c1_514] : memref<32x4xf32, #tpu.memory_space<smem>>
    %1190 = vector.broadcast %1189 : f32 to vector<2x128xf32>
    %1191 = arith.mulf %1184, %1190 : vector<2x128xf32>
    %1192 = arith.addf %1148, %1191 : vector<2x128xf32>
    %c26_515 = arith.constant 26 : index
    %c2_516 = arith.constant 2 : index
    %1193 = memref.load %arg3[%c26_515, %c2_516] : memref<32x4xf32, #tpu.memory_space<smem>>
    %1194 = vector.broadcast %1193 : f32 to vector<2x128xf32>
    %1195 = arith.mulf %1184, %1194 : vector<2x128xf32>
    %1196 = arith.addf %1152, %1195 : vector<2x128xf32>
    %c26_517 = arith.constant 26 : index
    %c3_518 = arith.constant 3 : index
    %1197 = memref.load %arg3[%c26_517, %c3_518] : memref<32x4xf32, #tpu.memory_space<smem>>
    %1198 = vector.broadcast %1197 : f32 to vector<2x128xf32>
    %1199 = arith.mulf %1184, %1198 : vector<2x128xf32>
    %1200 = arith.addf %1156, %1199 : vector<2x128xf32>
    %c0_519 = arith.constant 0 : index
    %c27 = arith.constant 27 : index
    %1201 = memref.load %arg2[%c0_519, %c27] : memref<4x32xf32, #tpu.memory_space<smem>>
    %1202 = vector.broadcast %1201 : f32 to vector<2x128xf32>
    %1203 = arith.mulf %2, %1202 : vector<2x128xf32>
    %c1_520 = arith.constant 1 : index
    %c27_521 = arith.constant 27 : index
    %1204 = memref.load %arg2[%c1_520, %c27_521] : memref<4x32xf32, #tpu.memory_space<smem>>
    %1205 = vector.broadcast %1204 : f32 to vector<2x128xf32>
    %1206 = arith.mulf %4, %1205 : vector<2x128xf32>
    %1207 = arith.addf %1203, %1206 : vector<2x128xf32>
    %c2_522 = arith.constant 2 : index
    %c27_523 = arith.constant 27 : index
    %1208 = memref.load %arg2[%c2_522, %c27_523] : memref<4x32xf32, #tpu.memory_space<smem>>
    %1209 = vector.broadcast %1208 : f32 to vector<2x128xf32>
    %1210 = arith.mulf %6, %1209 : vector<2x128xf32>
    %1211 = arith.addf %1207, %1210 : vector<2x128xf32>
    %c3_524 = arith.constant 3 : index
    %c27_525 = arith.constant 27 : index
    %1212 = memref.load %arg2[%c3_524, %c27_525] : memref<4x32xf32, #tpu.memory_space<smem>>
    %1213 = vector.broadcast %1212 : f32 to vector<2x128xf32>
    %1214 = arith.mulf %8, %1213 : vector<2x128xf32>
    %1215 = arith.addf %1211, %1214 : vector<2x128xf32>
    %cst_526 = arith.constant 5.000000e-01 : f32
    %1216 = vector.broadcast %cst_526 : f32 to vector<2x128xf32>
    %1217 = arith.mulf %1216, %1215 : vector<2x128xf32>
    %cst_527 = arith.constant 4.471500e-02 : f32
    %1218 = vector.broadcast %cst_527 : f32 to vector<2x128xf32>
    %1219 = arith.mulf %1218, %1215 : vector<2x128xf32>
    %1220 = arith.mulf %1219, %1215 : vector<2x128xf32>
    %1221 = arith.mulf %1220, %1215 : vector<2x128xf32>
    %1222 = arith.addf %1215, %1221 : vector<2x128xf32>
    %cst_528 = arith.constant 0.797884583 : f32
    %1223 = vector.broadcast %cst_528 : f32 to vector<2x128xf32>
    %1224 = arith.mulf %1223, %1222 : vector<2x128xf32>
    %1225 = math.tanh %1224 : vector<2x128xf32>
    %cst_529 = arith.constant 1.000000e+00 : f32
    %1226 = vector.broadcast %cst_529 : f32 to vector<2x128xf32>
    %1227 = arith.addf %1226, %1225 : vector<2x128xf32>
    %1228 = arith.mulf %1217, %1227 : vector<2x128xf32>
    %c27_530 = arith.constant 27 : index
    %c0_531 = arith.constant 0 : index
    %1229 = memref.load %arg3[%c27_530, %c0_531] : memref<32x4xf32, #tpu.memory_space<smem>>
    %1230 = vector.broadcast %1229 : f32 to vector<2x128xf32>
    %1231 = arith.mulf %1228, %1230 : vector<2x128xf32>
    %1232 = arith.addf %1188, %1231 : vector<2x128xf32>
    %c27_532 = arith.constant 27 : index
    %c1_533 = arith.constant 1 : index
    %1233 = memref.load %arg3[%c27_532, %c1_533] : memref<32x4xf32, #tpu.memory_space<smem>>
    %1234 = vector.broadcast %1233 : f32 to vector<2x128xf32>
    %1235 = arith.mulf %1228, %1234 : vector<2x128xf32>
    %1236 = arith.addf %1192, %1235 : vector<2x128xf32>
    %c27_534 = arith.constant 27 : index
    %c2_535 = arith.constant 2 : index
    %1237 = memref.load %arg3[%c27_534, %c2_535] : memref<32x4xf32, #tpu.memory_space<smem>>
    %1238 = vector.broadcast %1237 : f32 to vector<2x128xf32>
    %1239 = arith.mulf %1228, %1238 : vector<2x128xf32>
    %1240 = arith.addf %1196, %1239 : vector<2x128xf32>
    %c27_536 = arith.constant 27 : index
    %c3_537 = arith.constant 3 : index
    %1241 = memref.load %arg3[%c27_536, %c3_537] : memref<32x4xf32, #tpu.memory_space<smem>>
    %1242 = vector.broadcast %1241 : f32 to vector<2x128xf32>
    %1243 = arith.mulf %1228, %1242 : vector<2x128xf32>
    %1244 = arith.addf %1200, %1243 : vector<2x128xf32>
    %c0_538 = arith.constant 0 : index
    %c28 = arith.constant 28 : index
    %1245 = memref.load %arg2[%c0_538, %c28] : memref<4x32xf32, #tpu.memory_space<smem>>
    %1246 = vector.broadcast %1245 : f32 to vector<2x128xf32>
    %1247 = arith.mulf %2, %1246 : vector<2x128xf32>
    %c1_539 = arith.constant 1 : index
    %c28_540 = arith.constant 28 : index
    %1248 = memref.load %arg2[%c1_539, %c28_540] : memref<4x32xf32, #tpu.memory_space<smem>>
    %1249 = vector.broadcast %1248 : f32 to vector<2x128xf32>
    %1250 = arith.mulf %4, %1249 : vector<2x128xf32>
    %1251 = arith.addf %1247, %1250 : vector<2x128xf32>
    %c2_541 = arith.constant 2 : index
    %c28_542 = arith.constant 28 : index
    %1252 = memref.load %arg2[%c2_541, %c28_542] : memref<4x32xf32, #tpu.memory_space<smem>>
    %1253 = vector.broadcast %1252 : f32 to vector<2x128xf32>
    %1254 = arith.mulf %6, %1253 : vector<2x128xf32>
    %1255 = arith.addf %1251, %1254 : vector<2x128xf32>
    %c3_543 = arith.constant 3 : index
    %c28_544 = arith.constant 28 : index
    %1256 = memref.load %arg2[%c3_543, %c28_544] : memref<4x32xf32, #tpu.memory_space<smem>>
    %1257 = vector.broadcast %1256 : f32 to vector<2x128xf32>
    %1258 = arith.mulf %8, %1257 : vector<2x128xf32>
    %1259 = arith.addf %1255, %1258 : vector<2x128xf32>
    %cst_545 = arith.constant 5.000000e-01 : f32
    %1260 = vector.broadcast %cst_545 : f32 to vector<2x128xf32>
    %1261 = arith.mulf %1260, %1259 : vector<2x128xf32>
    %cst_546 = arith.constant 4.471500e-02 : f32
    %1262 = vector.broadcast %cst_546 : f32 to vector<2x128xf32>
    %1263 = arith.mulf %1262, %1259 : vector<2x128xf32>
    %1264 = arith.mulf %1263, %1259 : vector<2x128xf32>
    %1265 = arith.mulf %1264, %1259 : vector<2x128xf32>
    %1266 = arith.addf %1259, %1265 : vector<2x128xf32>
    %cst_547 = arith.constant 0.797884583 : f32
    %1267 = vector.broadcast %cst_547 : f32 to vector<2x128xf32>
    %1268 = arith.mulf %1267, %1266 : vector<2x128xf32>
    %1269 = math.tanh %1268 : vector<2x128xf32>
    %cst_548 = arith.constant 1.000000e+00 : f32
    %1270 = vector.broadcast %cst_548 : f32 to vector<2x128xf32>
    %1271 = arith.addf %1270, %1269 : vector<2x128xf32>
    %1272 = arith.mulf %1261, %1271 : vector<2x128xf32>
    %c28_549 = arith.constant 28 : index
    %c0_550 = arith.constant 0 : index
    %1273 = memref.load %arg3[%c28_549, %c0_550] : memref<32x4xf32, #tpu.memory_space<smem>>
    %1274 = vector.broadcast %1273 : f32 to vector<2x128xf32>
    %1275 = arith.mulf %1272, %1274 : vector<2x128xf32>
    %1276 = arith.addf %1232, %1275 : vector<2x128xf32>
    %c28_551 = arith.constant 28 : index
    %c1_552 = arith.constant 1 : index
    %1277 = memref.load %arg3[%c28_551, %c1_552] : memref<32x4xf32, #tpu.memory_space<smem>>
    %1278 = vector.broadcast %1277 : f32 to vector<2x128xf32>
    %1279 = arith.mulf %1272, %1278 : vector<2x128xf32>
    %1280 = arith.addf %1236, %1279 : vector<2x128xf32>
    %c28_553 = arith.constant 28 : index
    %c2_554 = arith.constant 2 : index
    %1281 = memref.load %arg3[%c28_553, %c2_554] : memref<32x4xf32, #tpu.memory_space<smem>>
    %1282 = vector.broadcast %1281 : f32 to vector<2x128xf32>
    %1283 = arith.mulf %1272, %1282 : vector<2x128xf32>
    %1284 = arith.addf %1240, %1283 : vector<2x128xf32>
    %c28_555 = arith.constant 28 : index
    %c3_556 = arith.constant 3 : index
    %1285 = memref.load %arg3[%c28_555, %c3_556] : memref<32x4xf32, #tpu.memory_space<smem>>
    %1286 = vector.broadcast %1285 : f32 to vector<2x128xf32>
    %1287 = arith.mulf %1272, %1286 : vector<2x128xf32>
    %1288 = arith.addf %1244, %1287 : vector<2x128xf32>
    %c0_557 = arith.constant 0 : index
    %c29 = arith.constant 29 : index
    %1289 = memref.load %arg2[%c0_557, %c29] : memref<4x32xf32, #tpu.memory_space<smem>>
    %1290 = vector.broadcast %1289 : f32 to vector<2x128xf32>
    %1291 = arith.mulf %2, %1290 : vector<2x128xf32>
    %c1_558 = arith.constant 1 : index
    %c29_559 = arith.constant 29 : index
    %1292 = memref.load %arg2[%c1_558, %c29_559] : memref<4x32xf32, #tpu.memory_space<smem>>
    %1293 = vector.broadcast %1292 : f32 to vector<2x128xf32>
    %1294 = arith.mulf %4, %1293 : vector<2x128xf32>
    %1295 = arith.addf %1291, %1294 : vector<2x128xf32>
    %c2_560 = arith.constant 2 : index
    %c29_561 = arith.constant 29 : index
    %1296 = memref.load %arg2[%c2_560, %c29_561] : memref<4x32xf32, #tpu.memory_space<smem>>
    %1297 = vector.broadcast %1296 : f32 to vector<2x128xf32>
    %1298 = arith.mulf %6, %1297 : vector<2x128xf32>
    %1299 = arith.addf %1295, %1298 : vector<2x128xf32>
    %c3_562 = arith.constant 3 : index
    %c29_563 = arith.constant 29 : index
    %1300 = memref.load %arg2[%c3_562, %c29_563] : memref<4x32xf32, #tpu.memory_space<smem>>
    %1301 = vector.broadcast %1300 : f32 to vector<2x128xf32>
    %1302 = arith.mulf %8, %1301 : vector<2x128xf32>
    %1303 = arith.addf %1299, %1302 : vector<2x128xf32>
    %cst_564 = arith.constant 5.000000e-01 : f32
    %1304 = vector.broadcast %cst_564 : f32 to vector<2x128xf32>
    %1305 = arith.mulf %1304, %1303 : vector<2x128xf32>
    %cst_565 = arith.constant 4.471500e-02 : f32
    %1306 = vector.broadcast %cst_565 : f32 to vector<2x128xf32>
    %1307 = arith.mulf %1306, %1303 : vector<2x128xf32>
    %1308 = arith.mulf %1307, %1303 : vector<2x128xf32>
    %1309 = arith.mulf %1308, %1303 : vector<2x128xf32>
    %1310 = arith.addf %1303, %1309 : vector<2x128xf32>
    %cst_566 = arith.constant 0.797884583 : f32
    %1311 = vector.broadcast %cst_566 : f32 to vector<2x128xf32>
    %1312 = arith.mulf %1311, %1310 : vector<2x128xf32>
    %1313 = math.tanh %1312 : vector<2x128xf32>
    %cst_567 = arith.constant 1.000000e+00 : f32
    %1314 = vector.broadcast %cst_567 : f32 to vector<2x128xf32>
    %1315 = arith.addf %1314, %1313 : vector<2x128xf32>
    %1316 = arith.mulf %1305, %1315 : vector<2x128xf32>
    %c29_568 = arith.constant 29 : index
    %c0_569 = arith.constant 0 : index
    %1317 = memref.load %arg3[%c29_568, %c0_569] : memref<32x4xf32, #tpu.memory_space<smem>>
    %1318 = vector.broadcast %1317 : f32 to vector<2x128xf32>
    %1319 = arith.mulf %1316, %1318 : vector<2x128xf32>
    %1320 = arith.addf %1276, %1319 : vector<2x128xf32>
    %c29_570 = arith.constant 29 : index
    %c1_571 = arith.constant 1 : index
    %1321 = memref.load %arg3[%c29_570, %c1_571] : memref<32x4xf32, #tpu.memory_space<smem>>
    %1322 = vector.broadcast %1321 : f32 to vector<2x128xf32>
    %1323 = arith.mulf %1316, %1322 : vector<2x128xf32>
    %1324 = arith.addf %1280, %1323 : vector<2x128xf32>
    %c29_572 = arith.constant 29 : index
    %c2_573 = arith.constant 2 : index
    %1325 = memref.load %arg3[%c29_572, %c2_573] : memref<32x4xf32, #tpu.memory_space<smem>>
    %1326 = vector.broadcast %1325 : f32 to vector<2x128xf32>
    %1327 = arith.mulf %1316, %1326 : vector<2x128xf32>
    %1328 = arith.addf %1284, %1327 : vector<2x128xf32>
    %c29_574 = arith.constant 29 : index
    %c3_575 = arith.constant 3 : index
    %1329 = memref.load %arg3[%c29_574, %c3_575] : memref<32x4xf32, #tpu.memory_space<smem>>
    %1330 = vector.broadcast %1329 : f32 to vector<2x128xf32>
    %1331 = arith.mulf %1316, %1330 : vector<2x128xf32>
    %1332 = arith.addf %1288, %1331 : vector<2x128xf32>
    %c0_576 = arith.constant 0 : index
    %c30 = arith.constant 30 : index
    %1333 = memref.load %arg2[%c0_576, %c30] : memref<4x32xf32, #tpu.memory_space<smem>>
    %1334 = vector.broadcast %1333 : f32 to vector<2x128xf32>
    %1335 = arith.mulf %2, %1334 : vector<2x128xf32>
    %c1_577 = arith.constant 1 : index
    %c30_578 = arith.constant 30 : index
    %1336 = memref.load %arg2[%c1_577, %c30_578] : memref<4x32xf32, #tpu.memory_space<smem>>
    %1337 = vector.broadcast %1336 : f32 to vector<2x128xf32>
    %1338 = arith.mulf %4, %1337 : vector<2x128xf32>
    %1339 = arith.addf %1335, %1338 : vector<2x128xf32>
    %c2_579 = arith.constant 2 : index
    %c30_580 = arith.constant 30 : index
    %1340 = memref.load %arg2[%c2_579, %c30_580] : memref<4x32xf32, #tpu.memory_space<smem>>
    %1341 = vector.broadcast %1340 : f32 to vector<2x128xf32>
    %1342 = arith.mulf %6, %1341 : vector<2x128xf32>
    %1343 = arith.addf %1339, %1342 : vector<2x128xf32>
    %c3_581 = arith.constant 3 : index
    %c30_582 = arith.constant 30 : index
    %1344 = memref.load %arg2[%c3_581, %c30_582] : memref<4x32xf32, #tpu.memory_space<smem>>
    %1345 = vector.broadcast %1344 : f32 to vector<2x128xf32>
    %1346 = arith.mulf %8, %1345 : vector<2x128xf32>
    %1347 = arith.addf %1343, %1346 : vector<2x128xf32>
    %cst_583 = arith.constant 5.000000e-01 : f32
    %1348 = vector.broadcast %cst_583 : f32 to vector<2x128xf32>
    %1349 = arith.mulf %1348, %1347 : vector<2x128xf32>
    %cst_584 = arith.constant 4.471500e-02 : f32
    %1350 = vector.broadcast %cst_584 : f32 to vector<2x128xf32>
    %1351 = arith.mulf %1350, %1347 : vector<2x128xf32>
    %1352 = arith.mulf %1351, %1347 : vector<2x128xf32>
    %1353 = arith.mulf %1352, %1347 : vector<2x128xf32>
    %1354 = arith.addf %1347, %1353 : vector<2x128xf32>
    %cst_585 = arith.constant 0.797884583 : f32
    %1355 = vector.broadcast %cst_585 : f32 to vector<2x128xf32>
    %1356 = arith.mulf %1355, %1354 : vector<2x128xf32>
    %1357 = math.tanh %1356 : vector<2x128xf32>
    %cst_586 = arith.constant 1.000000e+00 : f32
    %1358 = vector.broadcast %cst_586 : f32 to vector<2x128xf32>
    %1359 = arith.addf %1358, %1357 : vector<2x128xf32>
    %1360 = arith.mulf %1349, %1359 : vector<2x128xf32>
    %c30_587 = arith.constant 30 : index
    %c0_588 = arith.constant 0 : index
    %1361 = memref.load %arg3[%c30_587, %c0_588] : memref<32x4xf32, #tpu.memory_space<smem>>
    %1362 = vector.broadcast %1361 : f32 to vector<2x128xf32>
    %1363 = arith.mulf %1360, %1362 : vector<2x128xf32>
    %1364 = arith.addf %1320, %1363 : vector<2x128xf32>
    %c30_589 = arith.constant 30 : index
    %c1_590 = arith.constant 1 : index
    %1365 = memref.load %arg3[%c30_589, %c1_590] : memref<32x4xf32, #tpu.memory_space<smem>>
    %1366 = vector.broadcast %1365 : f32 to vector<2x128xf32>
    %1367 = arith.mulf %1360, %1366 : vector<2x128xf32>
    %1368 = arith.addf %1324, %1367 : vector<2x128xf32>
    %c30_591 = arith.constant 30 : index
    %c2_592 = arith.constant 2 : index
    %1369 = memref.load %arg3[%c30_591, %c2_592] : memref<32x4xf32, #tpu.memory_space<smem>>
    %1370 = vector.broadcast %1369 : f32 to vector<2x128xf32>
    %1371 = arith.mulf %1360, %1370 : vector<2x128xf32>
    %1372 = arith.addf %1328, %1371 : vector<2x128xf32>
    %c30_593 = arith.constant 30 : index
    %c3_594 = arith.constant 3 : index
    %1373 = memref.load %arg3[%c30_593, %c3_594] : memref<32x4xf32, #tpu.memory_space<smem>>
    %1374 = vector.broadcast %1373 : f32 to vector<2x128xf32>
    %1375 = arith.mulf %1360, %1374 : vector<2x128xf32>
    %1376 = arith.addf %1332, %1375 : vector<2x128xf32>
    %c0_595 = arith.constant 0 : index
    %c31 = arith.constant 31 : index
    %1377 = memref.load %arg2[%c0_595, %c31] : memref<4x32xf32, #tpu.memory_space<smem>>
    %1378 = vector.broadcast %1377 : f32 to vector<2x128xf32>
    %1379 = arith.mulf %2, %1378 : vector<2x128xf32>
    %c1_596 = arith.constant 1 : index
    %c31_597 = arith.constant 31 : index
    %1380 = memref.load %arg2[%c1_596, %c31_597] : memref<4x32xf32, #tpu.memory_space<smem>>
    %1381 = vector.broadcast %1380 : f32 to vector<2x128xf32>
    %1382 = arith.mulf %4, %1381 : vector<2x128xf32>
    %1383 = arith.addf %1379, %1382 : vector<2x128xf32>
    %c2_598 = arith.constant 2 : index
    %c31_599 = arith.constant 31 : index
    %1384 = memref.load %arg2[%c2_598, %c31_599] : memref<4x32xf32, #tpu.memory_space<smem>>
    %1385 = vector.broadcast %1384 : f32 to vector<2x128xf32>
    %1386 = arith.mulf %6, %1385 : vector<2x128xf32>
    %1387 = arith.addf %1383, %1386 : vector<2x128xf32>
    %c3_600 = arith.constant 3 : index
    %c31_601 = arith.constant 31 : index
    %1388 = memref.load %arg2[%c3_600, %c31_601] : memref<4x32xf32, #tpu.memory_space<smem>>
    %1389 = vector.broadcast %1388 : f32 to vector<2x128xf32>
    %1390 = arith.mulf %8, %1389 : vector<2x128xf32>
    %1391 = arith.addf %1387, %1390 : vector<2x128xf32>
    %cst_602 = arith.constant 5.000000e-01 : f32
    %1392 = vector.broadcast %cst_602 : f32 to vector<2x128xf32>
    %1393 = arith.mulf %1392, %1391 : vector<2x128xf32>
    %cst_603 = arith.constant 4.471500e-02 : f32
    %1394 = vector.broadcast %cst_603 : f32 to vector<2x128xf32>
    %1395 = arith.mulf %1394, %1391 : vector<2x128xf32>
    %1396 = arith.mulf %1395, %1391 : vector<2x128xf32>
    %1397 = arith.mulf %1396, %1391 : vector<2x128xf32>
    %1398 = arith.addf %1391, %1397 : vector<2x128xf32>
    %cst_604 = arith.constant 0.797884583 : f32
    %1399 = vector.broadcast %cst_604 : f32 to vector<2x128xf32>
    %1400 = arith.mulf %1399, %1398 : vector<2x128xf32>
    %1401 = math.tanh %1400 : vector<2x128xf32>
    %cst_605 = arith.constant 1.000000e+00 : f32
    %1402 = vector.broadcast %cst_605 : f32 to vector<2x128xf32>
    %1403 = arith.addf %1402, %1401 : vector<2x128xf32>
    %1404 = arith.mulf %1393, %1403 : vector<2x128xf32>
    %c31_606 = arith.constant 31 : index
    %c0_607 = arith.constant 0 : index
    %1405 = memref.load %arg3[%c31_606, %c0_607] : memref<32x4xf32, #tpu.memory_space<smem>>
    %1406 = vector.broadcast %1405 : f32 to vector<2x128xf32>
    %1407 = arith.mulf %1404, %1406 : vector<2x128xf32>
    %1408 = arith.addf %1364, %1407 : vector<2x128xf32>
    %c31_608 = arith.constant 31 : index
    %c1_609 = arith.constant 1 : index
    %1409 = memref.load %arg3[%c31_608, %c1_609] : memref<32x4xf32, #tpu.memory_space<smem>>
    %1410 = vector.broadcast %1409 : f32 to vector<2x128xf32>
    %1411 = arith.mulf %1404, %1410 : vector<2x128xf32>
    %1412 = arith.addf %1368, %1411 : vector<2x128xf32>
    %c31_610 = arith.constant 31 : index
    %c2_611 = arith.constant 2 : index
    %1413 = memref.load %arg3[%c31_610, %c2_611] : memref<32x4xf32, #tpu.memory_space<smem>>
    %1414 = vector.broadcast %1413 : f32 to vector<2x128xf32>
    %1415 = arith.mulf %1404, %1414 : vector<2x128xf32>
    %1416 = arith.addf %1372, %1415 : vector<2x128xf32>
    %c31_612 = arith.constant 31 : index
    %c3_613 = arith.constant 3 : index
    %1417 = memref.load %arg3[%c31_612, %c3_613] : memref<32x4xf32, #tpu.memory_space<smem>>
    %1418 = vector.broadcast %1417 : f32 to vector<2x128xf32>
    %1419 = arith.mulf %1404, %1418 : vector<2x128xf32>
    %1420 = arith.addf %1376, %1419 : vector<2x128xf32>
    %cst_614 = arith.constant 5.000000e-01 : f32
    %1421 = vector.broadcast %cst_614 : f32 to vector<2x128xf32>
    %1422 = arith.mulf %1421, %1408 : vector<2x128xf32>
    %1423 = math.tanh %1422 : vector<2x128xf32>
    %cst_615 = arith.constant 1.000000e+00 : f32
    %1424 = vector.broadcast %cst_615 : f32 to vector<2x128xf32>
    %1425 = arith.addf %1423, %1424 : vector<2x128xf32>
    %cst_616 = arith.constant 5.000000e-01 : f32
    %1426 = vector.broadcast %cst_616 : f32 to vector<2x128xf32>
    %1427 = arith.mulf %1426, %1425 : vector<2x128xf32>
    %1428 = arith.mulf %2, %1427 : vector<2x128xf32>
    %c0_617 = arith.constant 0 : index
    %c0_618 = arith.constant 0 : index
    %c0_619 = arith.constant 0 : index
    %1429 = vector.load %arg4[%c0_617, %c0_618, %c0_619] : memref<4x2x128xf32, #tpu.memory_space<vmem>>, vector<1x2x128xf32>
    %1430 = vector.shape_cast %1429 : vector<1x2x128xf32> to vector<2x128xf32>
    %1431 = vector.shape_cast %1428 : vector<2x128xf32> to vector<1x2x128xf32>
    tpu.vector_store %arg4[%c0_617, %c0_618, %c0_619], %1431 {strides = array<i32>} : memref<4x2x128xf32, #tpu.memory_space<vmem>>, vector<1x2x128xf32>,
    %cst_620 = arith.constant 5.000000e-01 : f32
    %1432 = vector.broadcast %cst_620 : f32 to vector<2x128xf32>
    %1433 = arith.mulf %1432, %1412 : vector<2x128xf32>
    %1434 = math.tanh %1433 : vector<2x128xf32>
    %cst_621 = arith.constant 1.000000e+00 : f32
    %1435 = vector.broadcast %cst_621 : f32 to vector<2x128xf32>
    %1436 = arith.addf %1434, %1435 : vector<2x128xf32>
    %cst_622 = arith.constant 5.000000e-01 : f32
    %1437 = vector.broadcast %cst_622 : f32 to vector<2x128xf32>
    %1438 = arith.mulf %1437, %1436 : vector<2x128xf32>
    %1439 = arith.mulf %4, %1438 : vector<2x128xf32>
    %c1_623 = arith.constant 1 : index
    %c0_624 = arith.constant 0 : index
    %c0_625 = arith.constant 0 : index
    %1440 = vector.load %arg4[%c1_623, %c0_624, %c0_625] : memref<4x2x128xf32, #tpu.memory_space<vmem>>, vector<1x2x128xf32>
    %1441 = vector.shape_cast %1440 : vector<1x2x128xf32> to vector<2x128xf32>
    %1442 = vector.shape_cast %1439 : vector<2x128xf32> to vector<1x2x128xf32>
    tpu.vector_store %arg4[%c1_623, %c0_624, %c0_625], %1442 {strides = array<i32>} : memref<4x2x128xf32, #tpu.memory_space<vmem>>, vector<1x2x128xf32>,
    %cst_626 = arith.constant 5.000000e-01 : f32
    %1443 = vector.broadcast %cst_626 : f32 to vector<2x128xf32>
    %1444 = arith.mulf %1443, %1416 : vector<2x128xf32>
    %1445 = math.tanh %1444 : vector<2x128xf32>
    %cst_627 = arith.constant 1.000000e+00 : f32
    %1446 = vector.broadcast %cst_627 : f32 to vector<2x128xf32>
    %1447 = arith.addf %1445, %1446 : vector<2x128xf32>
    %cst_628 = arith.constant 5.000000e-01 : f32
    %1448 = vector.broadcast %cst_628 : f32 to vector<2x128xf32>
    %1449 = arith.mulf %1448, %1447 : vector<2x128xf32>
    %1450 = arith.mulf %6, %1449 : vector<2x128xf32>
    %c2_629 = arith.constant 2 : index
    %c0_630 = arith.constant 0 : index
    %c0_631 = arith.constant 0 : index
    %1451 = vector.load %arg4[%c2_629, %c0_630, %c0_631] : memref<4x2x128xf32, #tpu.memory_space<vmem>>, vector<1x2x128xf32>
    %1452 = vector.shape_cast %1451 : vector<1x2x128xf32> to vector<2x128xf32>
    %1453 = vector.shape_cast %1450 : vector<2x128xf32> to vector<1x2x128xf32>
    tpu.vector_store %arg4[%c2_629, %c0_630, %c0_631], %1453 {strides = array<i32>} : memref<4x2x128xf32, #tpu.memory_space<vmem>>, vector<1x2x128xf32>,
    %cst_632 = arith.constant 5.000000e-01 : f32
    %1454 = vector.broadcast %cst_632 : f32 to vector<2x128xf32>
    %1455 = arith.mulf %1454, %1420 : vector<2x128xf32>
    %1456 = math.tanh %1455 : vector<2x128xf32>
    %cst_633 = arith.constant 1.000000e+00 : f32
    %1457 = vector.broadcast %cst_633 : f32 to vector<2x128xf32>
    %1458 = arith.addf %1456, %1457 : vector<2x128xf32>
    %cst_634 = arith.constant 5.000000e-01 : f32
    %1459 = vector.broadcast %cst_634 : f32 to vector<2x128xf32>
    %1460 = arith.mulf %1459, %1458 : vector<2x128xf32>
    %1461 = arith.mulf %8, %1460 : vector<2x128xf32>
    %c3_635 = arith.constant 3 : index
    %c0_636 = arith.constant 0 : index
    %c0_637 = arith.constant 0 : index
    %1462 = vector.load %arg4[%c3_635, %c0_636, %c0_637] : memref<4x2x128xf32, #tpu.memory_space<vmem>>, vector<1x2x128xf32>
    %1463 = vector.shape_cast %1462 : vector<1x2x128xf32> to vector<2x128xf32>
    %1464 = vector.shape_cast %1461 : vector<2x128xf32> to vector<1x2x128xf32>
    tpu.vector_store %arg4[%c3_635, %c0_636, %c0_637], %1464 {strides = array<i32>} : memref<4x2x128xf32, #tpu.memory_space<vmem>>, vector<1x2x128xf32>,
    return
  }
  func.func @transform_0(%arg0: i32) -> (i32, i32, i32) {
    %c0_i32 = arith.constant 0 : i32
    %c0_i32_0 = arith.constant 0 : i32
    %c0_i32_1 = arith.constant 0 : i32
    return %c0_i32, %arg0, %c0_i32_0 : i32, i32, i32
  }
  func.func @transform_1(%arg0: i32) -> (i32, i32) {
    %c0_i32 = arith.constant 0 : i32
    %c0_i32_0 = arith.constant 0 : i32
    %c0_i32_1 = arith.constant 0 : i32
    return %c0_i32, %c0_i32_0 : i32, i32
  }
  func.func @transform_2(%arg0: i32) -> (i32, i32) {
    %c0_i32 = arith.constant 0 : i32
    %c0_i32_0 = arith.constant 0 : i32
    %c0_i32_1 = arith.constant 0 : i32
    return %c0_i32, %c0_i32_0 : i32, i32
  }
  func.func @transform_3(%arg0: i32) -> (i32, i32, i32) {
    %c0_i32 = arith.constant 0 : i32
    %c0_i32_0 = arith.constant 0 : i32
    %c0_i32_1 = arith.constant 0 : i32
    return %c0_i32, %arg0, %c0_i32_0 : i32, i32, i32
  }
}

</mosaic_0001>

<llo_original>
// kernel: tpu_custom_call.1
$region0: #{tpu_custom_call.1}
  #allocation0 [shape = 'u32[]', space=smem, size = 0x4, offset = 0x4, fixed_abs, tag = 'smem constant byte address 0x4 - core index']
  #allocation1 [shape = 'u32[144,128]{1,0:T(1,128)}', space=vmem, size = 0x12000, scoped, tag = 'internal scratch']
  %s0 = inlined_call_operand.vmem [shape: f32[4,2,128], index: 0, kind: input, shape index: {}]
  %s1 = inlined_call_operand.vmem [shape: f32[4,32], index: 1, kind: input, shape index: {}]
  %s2 = inlined_call_operand.vmem [shape: f32[32,4], index: 2, kind: input, shape index: {}]
  %s3 = inlined_call_operand.hbm [shape: f32[4,2,128], index: 3, kind: output, shape index: {}]
  %s4 = sld [smem:[#allocation0]]
  $region30: #{tpu_custom_call.1} parent=0
    _
  %s6 = ssub.s32 1, %s4
  %s7 = scalar_select 0, %s6, %s4
  $region1: #{tpu_custom_call.1} parent=0
    #allocation2 [shape = 'u8[2048]{0}', space=smem, size = 0x800, scoped, tag = 'input window, operand 1, single buffered']
    #allocation3 [shape = 's32[1]{0}', space=sflag, size = 0x4, scoped, tag = 'scoped memory for tpu_custom_call.1']
    #allocation4 [shape = 's32[1]{0}', space=sflag, size = 0x4, scoped, tag = 'scoped memory for tpu_custom_call.1']
    #allocation5 [shape = 'u8[16384]{0}', space=smem, size = 0x4000, scoped, tag = 'input window, operand 2, single buffered']
    #allocation6 [shape = 's32[1]{0}', space=sflag, size = 0x4, scoped, tag = 'scoped memory for tpu_custom_call.1']
    #allocation7 [shape = 'u8[4096]{0}', space=vmem, size = 0x1000, scoped, tag = 'output window, operand 0, single buffered']
    %8 = vsyncpa [#allocation4], 0
    %9 = vsyncpa [#allocation6], 0
    %10 = vsyncpa [#allocation3], 0
    // Predicated region
    $region2: #{tpu_custom_call.1} parent=1 // pred_check
      _
    $region3: #{tpu_custom_call.1} parent=1 // pred_check_branch
      %12 = sbr.rel (0) target = $region5
    $region4: #{tpu_custom_call.1} parent=1 // pred_region
      _
    $region5: #{tpu_custom_call.1} parent=1 // pred_fallthru
      _
    // Predicated region
    $region6: #{tpu_custom_call.1} parent=1 // pred_check
      _
    $region7: #{tpu_custom_call.1} parent=1 // pred_check_branch
      %14 = sbr.rel (0) target = $region9
    $region8: #{tpu_custom_call.1} parent=1 // pred_region
      %s16 = ssub.s32 64, 64
      %17 = vsyncadd [#allocation4], %s16
      %s19 = sshll.u32 %s1, 4
      %s20 = int_to_ptr.vmem [resolvable:$true] %s19
      %22 = dma.vmem_to_smem %s20, 64, [#allocation2], [#allocation4]
    $region9: #{tpu_custom_call.1} parent=1 // pred_fallthru
      _
    // Predicated region
    $region10: #{tpu_custom_call.1} parent=1 // pred_check
      _
    $region11: #{tpu_custom_call.1} parent=1 // pred_check_branch
      %24 = sbr.rel (0) target = $region13
    $region12: #{tpu_custom_call.1} parent=1 // pred_region
      %s26 = ssub.s32 512, 512
      %27 = vsyncadd [#allocation6], %s26
      %s28 = sshll.u32 %s2, 4
      %s29 = int_to_ptr.vmem [resolvable:$true] %s28
      %34 = dma.vmem_to_smem %s29, 512, [#allocation5], [#allocation6], 128, 128, 8
    $region13: #{tpu_custom_call.1} parent=1 // pred_fallthru
      _
    // Predicated region
    $region14: #{tpu_custom_call.1} parent=1 // pred_check
      _
    $region15: #{tpu_custom_call.1} parent=1 // pred_check_branch
      %36 = sbr.rel (0) target = $region17
    $region16: #{tpu_custom_call.1} parent=1 // pred_region
      %37 = dma.done [#allocation4], 64
    $region17: #{tpu_custom_call.1} parent=1 // pred_fallthru
      _
    // Predicated region
    $region18: #{tpu_custom_call.1} parent=1 // pred_check
      _
    $region19: #{tpu_custom_call.1} parent=1 // pred_check_branch
      %39 = sbr.rel (0) target = $region21
    $region20: #{tpu_custom_call.1} parent=1 // pred_region
      %40 = dma.done [#allocation6], 512
    $region21: #{tpu_custom_call.1} parent=1 // pred_fallthru
      _
    %41 = sfence
    %v42 = vld [vmem:[%s0] sm:$0x3]
    %v43 = vld [vmem:[%s0 + $0x2] sm:$0x3]
    %v44 = vld [vmem:[%s0 + $0x4] sm:$0x3]
    %v45 = vld [vmem:[%s0 + $0x6] sm:$0x3]
    %s46 = sld [smem:[#allocation2]]
    %v47 = vstv %s46
    %v48 = vmul.f32 %v42, %v47
    %s49 = sld [smem:[#allocation2 + $0x80]]
    %v50 = vstv %s49
    %v51 = vmul.f32 %v43, %v50
    %v52 = vadd.f32 %v48, %v51
    %s53 = sld [smem:[#allocation2 + $0x100]]
    %v54 = vstv %s53
    %v55 = vmul.f32 %v44, %v54
    %v56 = vadd.f32 %v52, %v55
    %s57 = sld [smem:[#allocation2 + $0x180]]
    %v58 = vstv %s57
    %v59 = vmul.f32 %v45, %v58
    %v60 = vadd.f32 %v56, %v59
    %v61 = vmul.f32 %v60, 0.5
    %v62 = vmul.f32 %v60, 0.044715
    %v63 = vmul.f32 %v62, %v60
    %v64 = vmul.f32 %v63, %v60
    %v65 = vadd.f32 %v60, %v64
    %v66 = vmul.f32 %v65, 0.7978846
    %v67 = vtanh.pop %v66
    %v68 = vadd.f32 %v67, 1.0
    %v69 = vmul.f32 %v61, %v68
    %s70 = sld [smem:[#allocation5]]
    %v71 = vstv %s70
    %v72 = vmul.f32 %v69, %v71
    %v73 = vadd.f32 %v72, 0.0
    %s74 = sld [smem:[#allocation5 + $0x1]]
    %v75 = vstv %s74
    %v76 = vmul.f32 %v69, %v75
    %v77 = vadd.f32 %v76, 0.0
    %s78 = sld [smem:[#allocation5 + $0x2]]
    %v79 = vstv %s78
    %v80 = vmul.f32 %v69, %v79
    %v81 = vadd.f32 %v80, 0.0
    %s82 = sld [smem:[#allocation5 + $0x3]]
    %v83 = vstv %s82
    %v84 = vmul.f32 %v69, %v83
    %v85 = vadd.f32 %v84, 0.0
    %s86 = sld [smem:[#allocation2 + $0x1]]
    %v87 = vstv %s86
    %v88 = vmul.f32 %v42, %v87
    %s89 = sld [smem:[#allocation2 + $0x81]]
    %v90 = vstv %s89
    %v91 = vmul.f32 %v43, %v90
    %v92 = vadd.f32 %v88, %v91
    %s93 = sld [smem:[#allocation2 + $0x101]]
    %v94 = vstv %s93
    %v95 = vmul.f32 %v44, %v94
    %v96 = vadd.f32 %v92, %v95
    %s97 = sld [smem:[#allocation2 + $0x181]]
    %v98 = vstv %s97
    %v99 = vmul.f32 %v45, %v98
    %v100 = vadd.f32 %v96, %v99
    %v101 = vmul.f32 %v100, 0.5
    %v102 = vmul.f32 %v100, 0.044715
    %v103 = vmul.f32 %v102, %v100
    %v104 = vmul.f32 %v103, %v100
    %v105 = vadd.f32 %v100, %v104
    %v106 = vmul.f32 %v105, 0.7978846
    %v107 = vtanh.pop %v106
    %v108 = vadd.f32 %v107, 1.0
    %v109 = vmul.f32 %v101, %v108
    %s110 = sld [smem:[#allocation5 + $0x80]]
    %v111 = vstv %s110
    %v112 = vmul.f32 %v109, %v111
    %v113 = vadd.f32 %v73, %v112
    %s114 = sld [smem:[#allocation5 + $0x81]]
    %v115 = vstv %s114
    %v116 = vmul.f32 %v109, %v115
    %v117 = vadd.f32 %v77, %v116
    %s118 = sld [smem:[#allocation5 + $0x82]]
    %v119 = vstv %s118
    %v120 = vmul.f32 %v109, %v119
    %v121 = vadd.f32 %v81, %v120
    %s122 = sld [smem:[#allocation5 + $0x83]]
    %v123 = vstv %s122
    %v124 = vmul.f32 %v109, %v123
    %v125 = vadd.f32 %v85, %v124
    %s126 = sld [smem:[#allocation2 + $0x2]]
    %v127 = vstv %s126
    %v128 = vmul.f32 %v42, %v127
    %s129 = sld [smem:[#allocation2 + $0x82]]
    %v130 = vstv %s129
    %v131 = vmul.f32 %v43, %v130
    %v132 = vadd.f32 %v128, %v131
    %s133 = sld [smem:[#allocation2 + $0x102]]
    %v134 = vstv %s133
    %v135 = vmul.f32 %v44, %v134
    %v136 = vadd.f32 %v132, %v135
    %s137 = sld [smem:[#allocation2 + $0x182]]
    %v138 = vstv %s137
    %v139 = vmul.f32 %v45, %v138
    %v140 = vadd.f32 %v136, %v139
    %v141 = vmul.f32 %v140, 0.5
    %v142 = vmul.f32 %v140, 0.044715
    %v143 = vmul.f32 %v142, %v140
    %v144 = vmul.f32 %v143, %v140
    %v145 = vadd.f32 %v140, %v144
    %v146 = vmul.f32 %v145, 0.7978846
    %v147 = vtanh.pop %v146
    %v148 = vadd.f32 %v147, 1.0
    %v149 = vmul.f32 %v141, %v148
    %s150 = sld [smem:[#allocation5 + $0x100]]
    %v151 = vstv %s150
    %v152 = vmul.f32 %v149, %v151
    %v153 = vadd.f32 %v113, %v152
    %s154 = sld [smem:[#allocation5 + $0x101]]
    %v155 = vstv %s154
    %v156 = vmul.f32 %v149, %v155
    %v157 = vadd.f32 %v117, %v156
    %s158 = sld [smem:[#allocation5 + $0x102]]
    %v159 = vstv %s158
    %v160 = vmul.f32 %v149, %v159
    %v161 = vadd.f32 %v121, %v160
    %s162 = sld [smem:[#allocation5 + $0x103]]
    %v163 = vstv %s162
    %v164 = vmul.f32 %v149, %v163
    %v165 = vadd.f32 %v125, %v164
    %s166 = sld [smem:[#allocation2 + $0x3]]
    %v167 = vstv %s166
    %v168 = vmul.f32 %v42, %v167
    %s169 = sld [smem:[#allocation2 + $0x83]]
    %v170 = vstv %s169
    %v171 = vmul.f32 %v43, %v170
    %v172 = vadd.f32 %v168, %v171
    %s173 = sld [smem:[#allocation2 + $0x103]]
    %v174 = vstv %s173
    %v175 = vmul.f32 %v44, %v174
    %v176 = vadd.f32 %v172, %v175
    %s177 = sld [smem:[#allocation2 + $0x183]]
    %v178 = vstv %s177
    %v179 = vmul.f32 %v45, %v178
    %v180 = vadd.f32 %v176, %v179
    %v181 = vmul.f32 %v180, 0.5
    %v182 = vmul.f32 %v180, 0.044715
    %v183 = vmul.f32 %v182, %v180
    %v184 = vmul.f32 %v183, %v180
    %v185 = vadd.f32 %v180, %v184
    %v186 = vmul.f32 %v185, 0.7978846
    %v187 = vtanh.pop %v186
    %v188 = vadd.f32 %v187, 1.0
    %v189 = vmul.f32 %v181, %v188
    %s190 = sld [smem:[#allocation5 + $0x180]]
    %v191 = vstv %s190
    %v192 = vmul.f32 %v189, %v191
    %v193 = vadd.f32 %v153, %v192
    %s194 = sld [smem:[#allocation5 + $0x181]]
    %v195 = vstv %s194
    %v196 = vmul.f32 %v189, %v195
    %v197 = vadd.f32 %v157, %v196
    %s198 = sld [smem:[#allocation5 + $0x182]]
    %v199 = vstv %s198
    %v200 = vmul.f32 %v189, %v199
    %v201 = vadd.f32 %v161, %v200
    %s202 = sld [smem:[#allocation5 + $0x183]]
    %v203 = vstv %s202
    %v204 = vmul.f32 %v189, %v203
    %v205 = vadd.f32 %v165, %v204
    %s206 = sld [smem:[#allocation2 + $0x4]]
    %v207 = vstv %s206
    %v208 = vmul.f32 %v42, %v207
    %s209 = sld [smem:[#allocation2 + $0x84]]
    %v210 = vstv %s209
    %v211 = vmul.f32 %v43, %v210
    %v212 = vadd.f32 %v208, %v211
    %s213 = sld [smem:[#allocation2 + $0x104]]
    %v214 = vstv %s213
    %v215 = vmul.f32 %v44, %v214
    %v216 = vadd.f32 %v212, %v215
    %s217 = sld [smem:[#allocation2 + $0x184]]
    %v218 = vstv %s217
    %v219 = vmul.f32 %v45, %v218
    %v220 = vadd.f32 %v216, %v219
    %v221 = vmul.f32 %v220, 0.5
    %v222 = vmul.f32 %v220, 0.044715
    %v223 = vmul.f32 %v222, %v220
    %v224 = vmul.f32 %v223, %v220
    %v225 = vadd.f32 %v220, %v224
    %v226 = vmul.f32 %v225, 0.7978846
    %v227 = vtanh.pop %v226
    %v228 = vadd.f32 %v227, 1.0
    %v229 = vmul.f32 %v221, %v228
    %s230 = sld [smem:[#allocation5 + $0x200]]
    %v231 = vstv %s230
    %v232 = vmul.f32 %v229, %v231
    %v233 = vadd.f32 %v193, %v232
    %s234 = sld [smem:[#allocation5 + $0x201]]
    %v235 = vstv %s234
    %v236 = vmul.f32 %v229, %v235
    %v237 = vadd.f32 %v197, %v236
    %s238 = sld [smem:[#allocation5 + $0x202]]
    %v239 = vstv %s238
    %v240 = vmul.f32 %v229, %v239
    %v241 = vadd.f32 %v201, %v240
    %s242 = sld [smem:[#allocation5 + $0x203]]
    %v243 = vstv %s242
    %v244 = vmul.f32 %v229, %v243
    %v245 = vadd.f32 %v205, %v244
    %s246 = sld [smem:[#allocation2 + $0x5]]
    %v247 = vstv %s246
    %v248 = vmul.f32 %v42, %v247
    %s249 = sld [smem:[#allocation2 + $0x85]]
    %v250 = vstv %s249
    %v251 = vmul.f32 %v43, %v250
    %v252 = vadd.f32 %v248, %v251
    %s253 = sld [smem:[#allocation2 + $0x105]]
    %v254 = vstv %s253
    %v255 = vmul.f32 %v44, %v254
    %v256 = vadd.f32 %v252, %v255
    %s257 = sld [smem:[#allocation2 + $0x185]]
    %v258 = vstv %s257
    %v259 = vmul.f32 %v45, %v258
    %v260 = vadd.f32 %v256, %v259
    %v261 = vmul.f32 %v260, 0.5
    %v262 = vmul.f32 %v260, 0.044715
    %v263 = vmul.f32 %v262, %v260
    %v264 = vmul.f32 %v263, %v260
    %v265 = vadd.f32 %v260, %v264
    %v266 = vmul.f32 %v265, 0.7978846
    %v267 = vtanh.pop %v266
    %v268 = vadd.f32 %v267, 1.0
    %v269 = vmul.f32 %v261, %v268
    %s270 = sld [smem:[#allocation5 + $0x280]]
    %v271 = vstv %s270
    %v272 = vmul.f32 %v269, %v271
    %v273 = vadd.f32 %v233, %v272
    %s274 = sld [smem:[#allocation5 + $0x281]]
    %v275 = vstv %s274
    %v276 = vmul.f32 %v269, %v275
    %v277 = vadd.f32 %v237, %v276
    %s278 = sld [smem:[#allocation5 + $0x282]]
    %v279 = vstv %s278
    %v280 = vmul.f32 %v269, %v279
    %v281 = vadd.f32 %v241, %v280
    %s282 = sld [smem:[#allocation5 + $0x283]]
    %v283 = vstv %s282
    %v284 = vmul.f32 %v269, %v283
    %v285 = vadd.f32 %v245, %v284
    %s286 = sld [smem:[#allocation2 + $0x6]]
    %v287 = vstv %s286
    %v288 = vmul.f32 %v42, %v287
    %s289 = sld [smem:[#allocation2 + $0x86]]
    %v290 = vstv %s289
    %v291 = vmul.f32 %v43, %v290
    %v292 = vadd.f32 %v288, %v291
    %s293 = sld [smem:[#allocation2 + $0x106]]
    %v294 = vstv %s293
    %v295 = vmul.f32 %v44, %v294
    %v296 = vadd.f32 %v292, %v295
    %s297 = sld [smem:[#allocation2 + $0x186]]
    %v298 = vstv %s297
    %v299 = vmul.f32 %v45, %v298
    %v300 = vadd.f32 %v296, %v299
    %v301 = vmul.f32 %v300, 0.5
    %v302 = vmul.f32 %v300, 0.044715
    %v303 = vmul.f32 %v302, %v300
    %v304 = vmul.f32 %v303, %v300
    %v305 = vadd.f32 %v300, %v304
    %v306 = vmul.f32 %v305, 0.7978846
    %v307 = vtanh.pop %v306
    %v308 = vadd.f32 %v307, 1.0
    %v309 = vmul.f32 %v301, %v308
    %s310 = sld [smem:[#allocation5 + $0x300]]
    %v311 = vstv %s310
    %v312 = vmul.f32 %v309, %v311
    %v313 = vadd.f32 %v273, %v312
    %s314 = sld [smem:[#allocation5 + $0x301]]
    %v315 = vstv %s314
    %v316 = vmul.f32 %v309, %v315
    %v317 = vadd.f32 %v277, %v316
    %s318 = sld [smem:[#allocation5 + $0x302]]
    %v319 = vstv %s318
    %v320 = vmul.f32 %v309, %v319
    %v321 = vadd.f32 %v281, %v320
    %s322 = sld [smem:[#allocation5 + $0x303]]
    %v323 = vstv %s322
    %v324 = vmul.f32 %v309, %v323
    %v325 = vadd.f32 %v285, %v324
    %s326 = sld [smem:[#allocation2 + $0x7]]
    %v327 = vstv %s326
    %v328 = vmul.f32 %v42, %v327
    %s329 = sld [smem:[#allocation2 + $0x87]]
    %v330 = vstv %s329
    %v331 = vmul.f32 %v43, %v330
    %v332 = vadd.f32 %v328, %v331
    %s333 = sld [smem:[#allocation2 + $0x107]]
    %v334 = vstv %s333
    %v335 = vmul.f32 %v44, %v334
    %v336 = vadd.f32 %v332, %v335
    %s337 = sld [smem:[#allocation2 + $0x187]]
    %v338 = vstv %s337
    %v339 = vmul.f32 %v45, %v338
    %v340 = vadd.f32 %v336, %v339
    %v341 = vmul.f32 %v340, 0.5
    %v342 = vmul.f32 %v340, 0.044715
    %v343 = vmul.f32 %v342, %v340
    %v344 = vmul.f32 %v343, %v340
    %v345 = vadd.f32 %v340, %v344
    %v346 = vmul.f32 %v345, 0.7978846
    %v347 = vtanh.pop %v346
    %v348 = vadd.f32 %v347, 1.0
    %v349 = vmul.f32 %v341, %v348
    %s350 = sld [smem:[#allocation5 + $0x380]]
    %v351 = vstv %s350
    %v352 = vmul.f32 %v349, %v351
    %v353 = vadd.f32 %v313, %v352
    %s354 = sld [smem:[#allocation5 + $0x381]]
    %v355 = vstv %s354
    %v356 = vmul.f32 %v349, %v355
    %v357 = vadd.f32 %v317, %v356
    %s358 = sld [smem:[#allocation5 + $0x382]]
    %v359 = vstv %s358
    %v360 = vmul.f32 %v349, %v359
    %v361 = vadd.f32 %v321, %v360
    %s362 = sld [smem:[#allocation5 + $0x383]]
    %v363 = vstv %s362
    %v364 = vmul.f32 %v349, %v363
    %v365 = vadd.f32 %v325, %v364
    %s366 = sld [smem:[#allocation2 + $0x8]]
    %v367 = vstv %s366
    %v368 = vmul.f32 %v42, %v367
    %s369 = sld [smem:[#allocation2 + $0x88]]
    %v370 = vstv %s369
    %v371 = vmul.f32 %v43, %v370
    %v372 = vadd.f32 %v368, %v371
    %s373 = sld [smem:[#allocation2 + $0x108]]
    %v374 = vstv %s373
    %v375 = vmul.f32 %v44, %v374
    %v376 = vadd.f32 %v372, %v375
    %s377 = sld [smem:[#allocation2 + $0x188]]
    %v378 = vstv %s377
    %v379 = vmul.f32 %v45, %v378
    %v380 = vadd.f32 %v376, %v379
    %v381 = vmul.f32 %v380, 0.5
    %v382 = vmul.f32 %v380, 0.044715
    %v383 = vmul.f32 %v382, %v380
    %v384 = vmul.f32 %v383, %v380
    %v385 = vadd.f32 %v380, %v384
    %v386 = vmul.f32 %v385, 0.7978846
    %v387 = vtanh.pop %v386
    %v388 = vadd.f32 %v387, 1.0
    %v389 = vmul.f32 %v381, %v388
    %s390 = sld [smem:[#allocation5 + $0x400]]
    %v391 = vstv %s390
    %v392 = vmul.f32 %v389, %v391
    %v393 = vadd.f32 %v353, %v392
    %s394 = sld [smem:[#allocation5 + $0x401]]
    %v395 = vstv %s394
    %v396 = vmul.f32 %v389, %v395
    %v397 = vadd.f32 %v357, %v396
    %s398 = sld [smem:[#allocation5 + $0x402]]
    %v399 = vstv %s398
    %v400 = vmul.f32 %v389, %v399
    %v401 = vadd.f32 %v361, %v400
    %s402 = sld [smem:[#allocation5 + $0x403]]
    %v403 = vstv %s402
    %v404 = vmul.f32 %v389, %v403
    %v405 = vadd.f32 %v365, %v404
    %s406 = sld [smem:[#allocation2 + $0x9]]
    %v407 = vstv %s406
    %v408 = vmul.f32 %v42, %v407
    %s409 = sld [smem:[#allocation2 + $0x89]]
    %v410 = vstv %s409
    %v411 = vmul.f32 %v43, %v410
    %v412 = vadd.f32 %v408, %v411
    %s413 = sld [smem:[#allocation2 + $0x109]]
    %v414 = vstv %s413
    %v415 = vmul.f32 %v44, %v414
    %v416 = vadd.f32 %v412, %v415
    %s417 = sld [smem:[#allocation2 + $0x189]]
    %v418 = vstv %s417
    %v419 = vmul.f32 %v45, %v418
    %v420 = vadd.f32 %v416, %v419
    %v421 = vmul.f32 %v420, 0.5
    %v422 = vmul.f32 %v420, 0.044715
    %v423 = vmul.f32 %v422, %v420
    %v424 = vmul.f32 %v423, %v420
    %v425 = vadd.f32 %v420, %v424
    %v426 = vmul.f32 %v425, 0.7978846
    %v427 = vtanh.pop %v426
    %v428 = vadd.f32 %v427, 1.0
    %v429 = vmul.f32 %v421, %v428
    %s430 = sld [smem:[#allocation5 + $0x480]]
    %v431 = vstv %s430
    %v432 = vmul.f32 %v429, %v431
    %v433 = vadd.f32 %v393, %v432
    %s434 = sld [smem:[#allocation5 + $0x481]]
    %v435 = vstv %s434
    %v436 = vmul.f32 %v429, %v435
    %v437 = vadd.f32 %v397, %v436
    %s438 = sld [smem:[#allocation5 + $0x482]]
    %v439 = vstv %s438
    %v440 = vmul.f32 %v429, %v439
    %v441 = vadd.f32 %v401, %v440
    %s442 = sld [smem:[#allocation5 + $0x483]]
    %v443 = vstv %s442
    %v444 = vmul.f32 %v429, %v443
    %v445 = vadd.f32 %v405, %v444
    %s446 = sld [smem:[#allocation2 + $0xa]]
    %v447 = vstv %s446
    %v448 = vmul.f32 %v42, %v447
    %s449 = sld [smem:[#allocation2 + $0x8a]]
    %v450 = vstv %s449
    %v451 = vmul.f32 %v43, %v450
    %v452 = vadd.f32 %v448, %v451
    %s453 = sld [smem:[#allocation2 + $0x10a]]
    %v454 = vstv %s453
    %v455 = vmul.f32 %v44, %v454
    %v456 = vadd.f32 %v452, %v455
    %s457 = sld [smem:[#allocation2 + $0x18a]]
    %v458 = vstv %s457
    %v459 = vmul.f32 %v45, %v458
    %v460 = vadd.f32 %v456, %v459
    %v461 = vmul.f32 %v460, 0.5
    %v462 = vmul.f32 %v460, 0.044715
    %v463 = vmul.f32 %v462, %v460
    %v464 = vmul.f32 %v463, %v460
    %v465 = vadd.f32 %v460, %v464
    %v466 = vmul.f32 %v465, 0.7978846
    %v467 = vtanh.pop %v466
    %v468 = vadd.f32 %v467, 1.0
    %v469 = vmul.f32 %v461, %v468
    %s470 = sld [smem:[#allocation5 + $0x500]]
    %v471 = vstv %s470
    %v472 = vmul.f32 %v469, %v471
    %v473 = vadd.f32 %v433, %v472
    %s474 = sld [smem:[#allocation5 + $0x501]]
    %v475 = vstv %s474
    %v476 = vmul.f32 %v469, %v475
    %v477 = vadd.f32 %v437, %v476
    %s478 = sld [smem:[#allocation5 + $0x502]]
    %v479 = vstv %s478
    %v480 = vmul.f32 %v469, %v479
    %v481 = vadd.f32 %v441, %v480
    %s482 = sld [smem:[#allocation5 + $0x503]]
    %v483 = vstv %s482
    %v484 = vmul.f32 %v469, %v483
    %v485 = vadd.f32 %v445, %v484
    %s486 = sld [smem:[#allocation2 + $0xb]]
    %v487 = vstv %s486
    %v488 = vmul.f32 %v42, %v487
    %s489 = sld [smem:[#allocation2 + $0x8b]]
    %v490 = vstv %s489
    %v491 = vmul.f32 %v43, %v490
    %v492 = vadd.f32 %v488, %v491
    %s493 = sld [smem:[#allocation2 + $0x10b]]
    %v494 = vstv %s493
    %v495 = vmul.f32 %v44, %v494
    %v496 = vadd.f32 %v492, %v495
    %s497 = sld [smem:[#allocation2 + $0x18b]]
    %v498 = vstv %s497
    %v499 = vmul.f32 %v45, %v498
    %v500 = vadd.f32 %v496, %v499
    %v501 = vmul.f32 %v500, 0.5
    %v502 = vmul.f32 %v500, 0.044715
    %v503 = vmul.f32 %v502, %v500
    %v504 = vmul.f32 %v503, %v500
    %v505 = vadd.f32 %v500, %v504
    %v506 = vmul.f32 %v505, 0.7978846
    %v507 = vtanh.pop %v506
    %v508 = vadd.f32 %v507, 1.0
    %v509 = vmul.f32 %v501, %v508
    %s510 = sld [smem:[#allocation5 + $0x580]]
    %v511 = vstv %s510
    %v512 = vmul.f32 %v509, %v511
    %v513 = vadd.f32 %v473, %v512
    %s514 = sld [smem:[#allocation5 + $0x581]]
    %v515 = vstv %s514
    %v516 = vmul.f32 %v509, %v515
    %v517 = vadd.f32 %v477, %v516
    %s518 = sld [smem:[#allocation5 + $0x582]]
    %v519 = vstv %s518
    %v520 = vmul.f32 %v509, %v519
    %v521 = vadd.f32 %v481, %v520
    %s522 = sld [smem:[#allocation5 + $0x583]]
    %v523 = vstv %s522
    %v524 = vmul.f32 %v509, %v523
    %v525 = vadd.f32 %v485, %v524
    %s526 = sld [smem:[#allocation2 + $0xc]]
    %v527 = vstv %s526
    %v528 = vmul.f32 %v42, %v527
    %s529 = sld [smem:[#allocation2 + $0x8c]]
    %v530 = vstv %s529
    %v531 = vmul.f32 %v43, %v530
    %v532 = vadd.f32 %v528, %v531
    %s533 = sld [smem:[#allocation2 + $0x10c]]
    %v534 = vstv %s533
    %v535 = vmul.f32 %v44, %v534
    %v536 = vadd.f32 %v532, %v535
    %s537 = sld [smem:[#allocation2 + $0x18c]]
    %v538 = vstv %s537
    %v539 = vmul.f32 %v45, %v538
    %v540 = vadd.f32 %v536, %v539
    %v541 = vmul.f32 %v540, 0.5
    %v542 = vmul.f32 %v540, 0.044715
    %v543 = vmul.f32 %v542, %v540
    %v544 = vmul.f32 %v543, %v540
    %v545 = vadd.f32 %v540, %v544
    %v546 = vmul.f32 %v545, 0.7978846
    %v547 = vtanh.pop %v546
    %v548 = vadd.f32 %v547, 1.0
    %v549 = vmul.f32 %v541, %v548
    %s550 = sld [smem:[#allocation5 + $0x600]]
    %v551 = vstv %s550
    %v552 = vmul.f32 %v549, %v551
    %v553 = vadd.f32 %v513, %v552
    %s554 = sld [smem:[#allocation5 + $0x601]]
    %v555 = vstv %s554
    %v556 = vmul.f32 %v549, %v555
    %v557 = vadd.f32 %v517, %v556
    %s558 = sld [smem:[#allocation5 + $0x602]]
    %v559 = vstv %s558
    %v560 = vmul.f32 %v549, %v559
    %v561 = vadd.f32 %v521, %v560
    %s562 = sld [smem:[#allocation5 + $0x603]]
    %v563 = vstv %s562
    %v564 = vmul.f32 %v549, %v563
    %v565 = vadd.f32 %v525, %v564
    %s566 = sld [smem:[#allocation2 + $0xd]]
    %v567 = vstv %s566
    %v568 = vmul.f32 %v42, %v567
    %s569 = sld [smem:[#allocation2 + $0x8d]]
    %v570 = vstv %s569
    %v571 = vmul.f32 %v43, %v570
    %v572 = vadd.f32 %v568, %v571
    %s573 = sld [smem:[#allocation2 + $0x10d]]
    %v574 = vstv %s573
    %v575 = vmul.f32 %v44, %v574
    %v576 = vadd.f32 %v572, %v575
    %s577 = sld [smem:[#allocation2 + $0x18d]]
    %v578 = vstv %s577
    %v579 = vmul.f32 %v45, %v578
    %v580 = vadd.f32 %v576, %v579
    %v581 = vmul.f32 %v580, 0.5
    %v582 = vmul.f32 %v580, 0.044715
    %v583 = vmul.f32 %v582, %v580
    %v584 = vmul.f32 %v583, %v580
    %v585 = vadd.f32 %v580, %v584
    %v586 = vmul.f32 %v585, 0.7978846
    %v587 = vtanh.pop %v586
    %v588 = vadd.f32 %v587, 1.0
    %v589 = vmul.f32 %v581, %v588
    %s590 = sld [smem:[#allocation5 + $0x680]]
    %v591 = vstv %s590
    %v592 = vmul.f32 %v589, %v591
    %v593 = vadd.f32 %v553, %v592
    %s594 = sld [smem:[#allocation5 + $0x681]]
    %v595 = vstv %s594
    %v596 = vmul.f32 %v589, %v595
    %v597 = vadd.f32 %v557, %v596
    %s598 = sld [smem:[#allocation5 + $0x682]]
    %v599 = vstv %s598
    %v600 = vmul.f32 %v589, %v599
    %v601 = vadd.f32 %v561, %v600
    %s602 = sld [smem:[#allocation5 + $0x683]]
    %v603 = vstv %s602
    %v604 = vmul.f32 %v589, %v603
    %v605 = vadd.f32 %v565, %v604
    %s606 = sld [smem:[#allocation2 + $0xe]]
    %v607 = vstv %s606
    %v608 = vmul.f32 %v42, %v607
    %s609 = sld [smem:[#allocation2 + $0x8e]]
    %v610 = vstv %s609
    %v611 = vmul.f32 %v43, %v610
    %v612 = vadd.f32 %v608, %v611
    %s613 = sld [smem:[#allocation2 + $0x10e]]
    %v614 = vstv %s613
    %v615 = vmul.f32 %v44, %v614
    %v616 = vadd.f32 %v612, %v615
    %s617 = sld [smem:[#allocation2 + $0x18e]]
    %v618 = vstv %s617
    %v619 = vmul.f32 %v45, %v618
    %v620 = vadd.f32 %v616, %v619
    %v621 = vmul.f32 %v620, 0.5
    %v622 = vmul.f32 %v620, 0.044715
    %v623 = vmul.f32 %v622, %v620
    %v624 = vmul.f32 %v623, %v620
    %v625 = vadd.f32 %v620, %v624
    %v626 = vmul.f32 %v625, 0.7978846
    %v627 = vtanh.pop %v626
    %v628 = vadd.f32 %v627, 1.0
    %v629 = vmul.f32 %v621, %v628
    %s630 = sld [smem:[#allocation5 + $0x700]]
    %v631 = vstv %s630
    %v632 = vmul.f32 %v629, %v631
    %v633 = vadd.f32 %v593, %v632
    %s634 = sld [smem:[#allocation5 + $0x701]]
    %v635 = vstv %s634
    %v636 = vmul.f32 %v629, %v635
    %v637 = vadd.f32 %v597, %v636
    %s638 = sld [smem:[#allocation5 + $0x702]]
    %v639 = vstv %s638
    %v640 = vmul.f32 %v629, %v639
    %v641 = vadd.f32 %v601, %v640
    %s642 = sld [smem:[#allocation5 + $0x703]]
    %v643 = vstv %s642
    %v644 = vmul.f32 %v629, %v643
    %v645 = vadd.f32 %v605, %v644
    %s646 = sld [smem:[#allocation2 + $0xf]]
    %v647 = vstv %s646
    %v648 = vmul.f32 %v42, %v647
    %s649 = sld [smem:[#allocation2 + $0x8f]]
    %v650 = vstv %s649
    %v651 = vmul.f32 %v43, %v650
    %v652 = vadd.f32 %v648, %v651
    %s653 = sld [smem:[#allocation2 + $0x10f]]
    %v654 = vstv %s653
    %v655 = vmul.f32 %v44, %v654
    %v656 = vadd.f32 %v652, %v655
    %s657 = sld [smem:[#allocation2 + $0x18f]]
    %v658 = vstv %s657
    %v659 = vmul.f32 %v45, %v658
    %v660 = vadd.f32 %v656, %v659
    %v661 = vmul.f32 %v660, 0.5
    %v662 = vmul.f32 %v660, 0.044715
    %v663 = vmul.f32 %v662, %v660
    %v664 = vmul.f32 %v663, %v660
    %v665 = vadd.f32 %v660, %v664
    %v666 = vmul.f32 %v665, 0.7978846
    %v667 = vtanh.pop %v666
    %v668 = vadd.f32 %v667, 1.0
    %v669 = vmul.f32 %v661, %v668
    %s670 = sld [smem:[#allocation5 + $0x780]]
    %v671 = vstv %s670
    %v672 = vmul.f32 %v669, %v671
    %v673 = vadd.f32 %v633, %v672
    %s674 = sld [smem:[#allocation5 + $0x781]]
    %v675 = vstv %s674
    %v676 = vmul.f32 %v669, %v675
    %v677 = vadd.f32 %v637, %v676
    %s678 = sld [smem:[#allocation5 + $0x782]]
    %v679 = vstv %s678
    %v680 = vmul.f32 %v669, %v679
    %v681 = vadd.f32 %v641, %v680
    %s682 = sld [smem:[#allocation5 + $0x783]]
    %v683 = vstv %s682
    %v684 = vmul.f32 %v669, %v683
    %v685 = vadd.f32 %v645, %v684
    %s686 = sld [smem:[#allocation2 + $0x10]]
    %v687 = vstv %s686
    %v688 = vmul.f32 %v42, %v687
    %s689 = sld [smem:[#allocation2 + $0x90]]
    %v690 = vstv %s689
    %v691 = vmul.f32 %v43, %v690
    %v692 = vadd.f32 %v688, %v691
    %s693 = sld [smem:[#allocation2 + $0x110]]
    %v694 = vstv %s693
    %v695 = vmul.f32 %v44, %v694
    %v696 = vadd.f32 %v692, %v695
    %s697 = sld [smem:[#allocation2 + $0x190]]
    %v698 = vstv %s697
    %v699 = vmul.f32 %v45, %v698
    %v700 = vadd.f32 %v696, %v699
    %v701 = vmul.f32 %v700, 0.5
    %v702 = vmul.f32 %v700, 0.044715
    %v703 = vmul.f32 %v702, %v700
    %v704 = vmul.f32 %v703, %v700
    %v705 = vadd.f32 %v700, %v704
    %v706 = vmul.f32 %v705, 0.7978846
    %v707 = vtanh.pop %v706
    %v708 = vadd.f32 %v707, 1.0
    %v709 = vmul.f32 %v701, %v708
    %s710 = sld [smem:[#allocation5 + $0x800]]
    %v711 = vstv %s710
    %v712 = vmul.f32 %v709, %v711
    %v713 = vadd.f32 %v673, %v712
    %s714 = sld [smem:[#allocation5 + $0x801]]
    %v715 = vstv %s714
    %v716 = vmul.f32 %v709, %v715
    %v717 = vadd.f32 %v677, %v716
    %s718 = sld [smem:[#allocation5 + $0x802]]
    %v719 = vstv %s718
    %v720 = vmul.f32 %v709, %v719
    %v721 = vadd.f32 %v681, %v720
    %s722 = sld [smem:[#allocation5 + $0x803]]
    %v723 = vstv %s722
    %v724 = vmul.f32 %v709, %v723
    %v725 = vadd.f32 %v685, %v724
    %s726 = sld [smem:[#allocation2 + $0x11]]
    %v727 = vstv %s726
    %v728 = vmul.f32 %v42, %v727
    %s729 = sld [smem:[#allocation2 + $0x91]]
    %v730 = vstv %s729
    %v731 = vmul.f32 %v43, %v730
    %v732 = vadd.f32 %v728, %v731
    %s733 = sld [smem:[#allocation2 + $0x111]]
    %v734 = vstv %s733
    %v735 = vmul.f32 %v44, %v734
    %v736 = vadd.f32 %v732, %v735
    %s737 = sld [smem:[#allocation2 + $0x191]]
    %v738 = vstv %s737
    %v739 = vmul.f32 %v45, %v738
    %v740 = vadd.f32 %v736, %v739
    %v741 = vmul.f32 %v740, 0.5
    %v742 = vmul.f32 %v740, 0.044715
    %v743 = vmul.f32 %v742, %v740
    %v744 = vmul.f32 %v743, %v740
    %v745 = vadd.f32 %v740, %v744
    %v746 = vmul.f32 %v745, 0.7978846
    %v747 = vtanh.pop %v746
    %v748 = vadd.f32 %v747, 1.0
    %v749 = vmul.f32 %v741, %v748
    %s750 = sld [smem:[#allocation5 + $0x880]]
    %v751 = vstv %s750
    %v752 = vmul.f32 %v749, %v751
    %v753 = vadd.f32 %v713, %v752
    %s754 = sld [smem:[#allocation5 + $0x881]]
    %v755 = vstv %s754
    %v756 = vmul.f32 %v749, %v755
    %v757 = vadd.f32 %v717, %v756
    %s758 = sld [smem:[#allocation5 + $0x882]]
    %v759 = vstv %s758
    %v760 = vmul.f32 %v749, %v759
    %v761 = vadd.f32 %v721, %v760
    %s762 = sld [smem:[#allocation5 + $0x883]]
    %v763 = vstv %s762
    %v764 = vmul.f32 %v749, %v763
    %v765 = vadd.f32 %v725, %v764
    %s766 = sld [smem:[#allocation2 + $0x12]]
    %v767 = vstv %s766
    %v768 = vmul.f32 %v42, %v767
    %s769 = sld [smem:[#allocation2 + $0x92]]
    %v770 = vstv %s769
    %v771 = vmul.f32 %v43, %v770
    %v772 = vadd.f32 %v768, %v771
    %s773 = sld [smem:[#allocation2 + $0x112]]
    %v774 = vstv %s773
    %v775 = vmul.f32 %v44, %v774
    %v776 = vadd.f32 %v772, %v775
    %s777 = sld [smem:[#allocation2 + $0x192]]
    %v778 = vstv %s777
    %v779 = vmul.f32 %v45, %v778
    %v780 = vadd.f32 %v776, %v779
    %v781 = vmul.f32 %v780, 0.5
    %v782 = vmul.f32 %v780, 0.044715
    %v783 = vmul.f32 %v782, %v780
    %v784 = vmul.f32 %v783, %v780
    %v785 = vadd.f32 %v780, %v784
    %v786 = vmul.f32 %v785, 0.7978846
    %v787 = vtanh.pop %v786
    %v788 = vadd.f32 %v787, 1.0
    %v789 = vmul.f32 %v781, %v788
    %s790 = sld [smem:[#allocation5 + $0x900]]
    %v791 = vstv %s790
    %v792 = vmul.f32 %v789, %v791
    %v793 = vadd.f32 %v753, %v792
    %s794 = sld [smem:[#allocation5 + $0x901]]
    %v795 = vstv %s794
    %v796 = vmul.f32 %v789, %v795
    %v797 = vadd.f32 %v757, %v796
    %s798 = sld [smem:[#allocation5 + $0x902]]
    %v799 = vstv %s798
    %v800 = vmul.f32 %v789, %v799
    %v801 = vadd.f32 %v761, %v800
    %s802 = sld [smem:[#allocation5 + $0x903]]
    %v803 = vstv %s802
    %v804 = vmul.f32 %v789, %v803
    %v805 = vadd.f32 %v765, %v804
    %s806 = sld [smem:[#allocation2 + $0x13]]
    %v807 = vstv %s806
    %v808 = vmul.f32 %v42, %v807
    %s809 = sld [smem:[#allocation2 + $0x93]]
    %v810 = vstv %s809
    %v811 = vmul.f32 %v43, %v810
    %v812 = vadd.f32 %v808, %v811
    %s813 = sld [smem:[#allocation2 + $0x113]]
    %v814 = vstv %s813
    %v815 = vmul.f32 %v44, %v814
    %v816 = vadd.f32 %v812, %v815
    %s817 = sld [smem:[#allocation2 + $0x193]]
    %v818 = vstv %s817
    %v819 = vmul.f32 %v45, %v818
    %v820 = vadd.f32 %v816, %v819
    %v821 = vmul.f32 %v820, 0.5
    %v822 = vmul.f32 %v820, 0.044715
    %v823 = vmul.f32 %v822, %v820
    %v824 = vmul.f32 %v823, %v820
    %v825 = vadd.f32 %v820, %v824
    %v826 = vmul.f32 %v825, 0.7978846
    %v827 = vtanh.pop %v826
    %v828 = vadd.f32 %v827, 1.0
    %v829 = vmul.f32 %v821, %v828
    %s830 = sld [smem:[#allocation5 + $0x980]]
    %v831 = vstv %s830
    %v832 = vmul.f32 %v829, %v831
    %v833 = vadd.f32 %v793, %v832
    %s834 = sld [smem:[#allocation5 + $0x981]]
    %v835 = vstv %s834
    %v836 = vmul.f32 %v829, %v835
    %v837 = vadd.f32 %v797, %v836
    %s838 = sld [smem:[#allocation5 + $0x982]]
    %v839 = vstv %s838
    %v840 = vmul.f32 %v829, %v839
    %v841 = vadd.f32 %v801, %v840
    %s842 = sld [smem:[#allocation5 + $0x983]]
    %v843 = vstv %s842
    %v844 = vmul.f32 %v829, %v843
    %v845 = vadd.f32 %v805, %v844
    %s846 = sld [smem:[#allocation2 + $0x14]]
    %v847 = vstv %s846
    %v848 = vmul.f32 %v42, %v847
    %s849 = sld [smem:[#allocation2 + $0x94]]
    %v850 = vstv %s849
    %v851 = vmul.f32 %v43, %v850
    %v852 = vadd.f32 %v848, %v851
    %s853 = sld [smem:[#allocation2 + $0x114]]
    %v854 = vstv %s853
    %v855 = vmul.f32 %v44, %v854
    %v856 = vadd.f32 %v852, %v855
    %s857 = sld [smem:[#allocation2 + $0x194]]
    %v858 = vstv %s857
    %v859 = vmul.f32 %v45, %v858
    %v860 = vadd.f32 %v856, %v859
    %v861 = vmul.f32 %v860, 0.5
    %v862 = vmul.f32 %v860, 0.044715
    %v863 = vmul.f32 %v862, %v860
    %v864 = vmul.f32 %v863, %v860
    %v865 = vadd.f32 %v860, %v864
    %v866 = vmul.f32 %v865, 0.7978846
    %v867 = vtanh.pop %v866
    %v868 = vadd.f32 %v867, 1.0
    %v869 = vmul.f32 %v861, %v868
    %s870 = sld [smem:[#allocation5 + $0xa00]]
    %v871 = vstv %s870
    %v872 = vmul.f32 %v869, %v871
    %v873 = vadd.f32 %v833, %v872
    %s874 = sld [smem:[#allocation5 + $0xa01]]
    %v875 = vstv %s874
    %v876 = vmul.f32 %v869, %v875
    %v877 = vadd.f32 %v837, %v876
    %s878 = sld [smem:[#allocation5 + $0xa02]]
    %v879 = vstv %s878
    %v880 = vmul.f32 %v869, %v879
    %v881 = vadd.f32 %v841, %v880
    %s882 = sld [smem:[#allocation5 + $0xa03]]
    %v883 = vstv %s882
    %v884 = vmul.f32 %v869, %v883
    %v885 = vadd.f32 %v845, %v884
    %s886 = sld [smem:[#allocation2 + $0x15]]
    %v887 = vstv %s886
    %v888 = vmul.f32 %v42, %v887
    %s889 = sld [smem:[#allocation2 + $0x95]]
    %v890 = vstv %s889
    %v891 = vmul.f32 %v43, %v890
    %v892 = vadd.f32 %v888, %v891
    %s893 = sld [smem:[#allocation2 + $0x115]]
    %v894 = vstv %s893
    %v895 = vmul.f32 %v44, %v894
    %v896 = vadd.f32 %v892, %v895
    %s897 = sld [smem:[#allocation2 + $0x195]]
    %v898 = vstv %s897
    %v899 = vmul.f32 %v45, %v898
    %v900 = vadd.f32 %v896, %v899
    %v901 = vmul.f32 %v900, 0.5
    %v902 = vmul.f32 %v900, 0.044715
    %v903 = vmul.f32 %v902, %v900
    %v904 = vmul.f32 %v903, %v900
    %v905 = vadd.f32 %v900, %v904
    %v906 = vmul.f32 %v905, 0.7978846
    %v907 = vtanh.pop %v906
    %v908 = vadd.f32 %v907, 1.0
    %v909 = vmul.f32 %v901, %v908
    %s910 = sld [smem:[#allocation5 + $0xa80]]
    %v911 = vstv %s910
    %v912 = vmul.f32 %v909, %v911
    %v913 = vadd.f32 %v873, %v912
    %s914 = sld [smem:[#allocation5 + $0xa81]]
    %v915 = vstv %s914
    %v916 = vmul.f32 %v909, %v915
    %v917 = vadd.f32 %v877, %v916
    %s918 = sld [smem:[#allocation5 + $0xa82]]
    %v919 = vstv %s918
    %v920 = vmul.f32 %v909, %v919
    %v921 = vadd.f32 %v881, %v920
    %s922 = sld [smem:[#allocation5 + $0xa83]]
    %v923 = vstv %s922
    %v924 = vmul.f32 %v909, %v923
    %v925 = vadd.f32 %v885, %v924
    %s926 = sld [smem:[#allocation2 + $0x16]]
    %v927 = vstv %s926
    %v928 = vmul.f32 %v42, %v927
    %s929 = sld [smem:[#allocation2 + $0x96]]
    %v930 = vstv %s929
    %v931 = vmul.f32 %v43, %v930
    %v932 = vadd.f32 %v928, %v931
    %s933 = sld [smem:[#allocation2 + $0x116]]
    %v934 = vstv %s933
    %v935 = vmul.f32 %v44, %v934
    %v936 = vadd.f32 %v932, %v935
    %s937 = sld [smem:[#allocation2 + $0x196]]
    %v938 = vstv %s937
    %v939 = vmul.f32 %v45, %v938
    %v940 = vadd.f32 %v936, %v939
    %v941 = vmul.f32 %v940, 0.5
    %v942 = vmul.f32 %v940, 0.044715
    %v943 = vmul.f32 %v942, %v940
    %v944 = vmul.f32 %v943, %v940
    %v945 = vadd.f32 %v940, %v944
    %v946 = vmul.f32 %v945, 0.7978846
    %v947 = vtanh.pop %v946
    %v948 = vadd.f32 %v947, 1.0
    %v949 = vmul.f32 %v941, %v948
    %s950 = sld [smem:[#allocation5 + $0xb00]]
    %v951 = vstv %s950
    %v952 = vmul.f32 %v949, %v951
    %v953 = vadd.f32 %v913, %v952
    %s954 = sld [smem:[#allocation5 + $0xb01]]
    %v955 = vstv %s954
    %v956 = vmul.f32 %v949, %v955
    %v957 = vadd.f32 %v917, %v956
    %s958 = sld [smem:[#allocation5 + $0xb02]]
    %v959 = vstv %s958
    %v960 = vmul.f32 %v949, %v959
    %v961 = vadd.f32 %v921, %v960
    %s962 = sld [smem:[#allocation5 + $0xb03]]
    %v963 = vstv %s962
    %v964 = vmul.f32 %v949, %v963
    %v965 = vadd.f32 %v925, %v964
    %s966 = sld [smem:[#allocation2 + $0x17]]
    %v967 = vstv %s966
    %v968 = vmul.f32 %v42, %v967
    %s969 = sld [smem:[#allocation2 + $0x97]]
    %v970 = vstv %s969
    %v971 = vmul.f32 %v43, %v970
    %v972 = vadd.f32 %v968, %v971
    %s973 = sld [smem:[#allocation2 + $0x117]]
    %v974 = vstv %s973
    %v975 = vmul.f32 %v44, %v974
    %v976 = vadd.f32 %v972, %v975
    %s977 = sld [smem:[#allocation2 + $0x197]]
    %v978 = vstv %s977
    %v979 = vmul.f32 %v45, %v978
    %v980 = vadd.f32 %v976, %v979
    %v981 = vmul.f32 %v980, 0.5
    %v982 = vmul.f32 %v980, 0.044715
    %v983 = vmul.f32 %v982, %v980
    %v984 = vmul.f32 %v983, %v980
    %v985 = vadd.f32 %v980, %v984
    %v986 = vmul.f32 %v985, 0.7978846
    %v987 = vtanh.pop %v986
    %v988 = vadd.f32 %v987, 1.0
    %v989 = vmul.f32 %v981, %v988
    %s990 = sld [smem:[#allocation5 + $0xb80]]
    %v991 = vstv %s990
    %v992 = vmul.f32 %v989, %v991
    %v993 = vadd.f32 %v953, %v992
    %s994 = sld [smem:[#allocation5 + $0xb81]]
    %v995 = vstv %s994
    %v996 = vmul.f32 %v989, %v995
    %v997 = vadd.f32 %v957, %v996
    %s998 = sld [smem:[#allocation5 + $0xb82]]
    %v999 = vstv %s998
    %v1000 = vmul.f32 %v989, %v999
    %v1001 = vadd.f32 %v961, %v1000
    %s1002 = sld [smem:[#allocation5 + $0xb83]]
    %v1003 = vstv %s1002
    %v1004 = vmul.f32 %v989, %v1003
    %v1005 = vadd.f32 %v965, %v1004
    %s1006 = sld [smem:[#allocation2 + $0x18]]
    %v1007 = vstv %s1006
    %v1008 = vmul.f32 %v42, %v1007
    %s1009 = sld [smem:[#allocation2 + $0x98]]
    %v1010 = vstv %s1009
    %v1011 = vmul.f32 %v43, %v1010
    %v1012 = vadd.f32 %v1008, %v1011
    %s1013 = sld [smem:[#allocation2 + $0x118]]
    %v1014 = vstv %s1013
    %v1015 = vmul.f32 %v44, %v1014
    %v1016 = vadd.f32 %v1012, %v1015
    %s1017 = sld [smem:[#allocation2 + $0x198]]
    %v1018 = vstv %s1017
    %v1019 = vmul.f32 %v45, %v1018
    %v1020 = vadd.f32 %v1016, %v1019
    %v1021 = vmul.f32 %v1020, 0.5
    %v1022 = vmul.f32 %v1020, 0.044715
    %v1023 = vmul.f32 %v1022, %v1020
    %v1024 = vmul.f32 %v1023, %v1020
    %v1025 = vadd.f32 %v1020, %v1024
    %v1026 = vmul.f32 %v1025, 0.7978846
    %v1027 = vtanh.pop %v1026
    %v1028 = vadd.f32 %v1027, 1.0
    %v1029 = vmul.f32 %v1021, %v1028
    %s1030 = sld [smem:[#allocation5 + $0xc00]]
    %v1031 = vstv %s1030
    %v1032 = vmul.f32 %v1029, %v1031
    %v1033 = vadd.f32 %v993, %v1032
    %s1034 = sld [smem:[#allocation5 + $0xc01]]
    %v1035 = vstv %s1034
    %v1036 = vmul.f32 %v1029, %v1035
    %v1037 = vadd.f32 %v997, %v1036
    %s1038 = sld [smem:[#allocation5 + $0xc02]]
    %v1039 = vstv %s1038
    %v1040 = vmul.f32 %v1029, %v1039
    %v1041 = vadd.f32 %v1001, %v1040
    %s1042 = sld [smem:[#allocation5 + $0xc03]]
    %v1043 = vstv %s1042
    %v1044 = vmul.f32 %v1029, %v1043
    %v1045 = vadd.f32 %v1005, %v1044
    %s1046 = sld [smem:[#allocation2 + $0x19]]
    %v1047 = vstv %s1046
    %v1048 = vmul.f32 %v42, %v1047
    %s1049 = sld [smem:[#allocation2 + $0x99]]
    %v1050 = vstv %s1049
    %v1051 = vmul.f32 %v43, %v1050
    %v1052 = vadd.f32 %v1048, %v1051
    %s1053 = sld [smem:[#allocation2 + $0x119]]
    %v1054 = vstv %s1053
    %v1055 = vmul.f32 %v44, %v1054
    %v1056 = vadd.f32 %v1052, %v1055
    %s1057 = sld [smem:[#allocation2 + $0x199]]
    %v1058 = vstv %s1057
    %v1059 = vmul.f32 %v45, %v1058
    %v1060 = vadd.f32 %v1056, %v1059
    %v1061 = vmul.f32 %v1060, 0.5
    %v1062 = vmul.f32 %v1060, 0.044715
    %v1063 = vmul.f32 %v1062, %v1060
    %v1064 = vmul.f32 %v1063, %v1060
    %v1065 = vadd.f32 %v1060, %v1064
    %v1066 = vmul.f32 %v1065, 0.7978846
    %v1067 = vtanh.pop %v1066
    %v1068 = vadd.f32 %v1067, 1.0
    %v1069 = vmul.f32 %v1061, %v1068
    %s1070 = sld [smem:[#allocation5 + $0xc80]]
    %v1071 = vstv %s1070
    %v1072 = vmul.f32 %v1069, %v1071
    %v1073 = vadd.f32 %v1033, %v1072
    %s1074 = sld [smem:[#allocation5 + $0xc81]]
    %v1075 = vstv %s1074
    %v1076 = vmul.f32 %v1069, %v1075
    %v1077 = vadd.f32 %v1037, %v1076
    %s1078 = sld [smem:[#allocation5 + $0xc82]]
    %v1079 = vstv %s1078
    %v1080 = vmul.f32 %v1069, %v1079
    %v1081 = vadd.f32 %v1041, %v1080
    %s1082 = sld [smem:[#allocation5 + $0xc83]]
    %v1083 = vstv %s1082
    %v1084 = vmul.f32 %v1069, %v1083
    %v1085 = vadd.f32 %v1045, %v1084
    %s1086 = sld [smem:[#allocation2 + $0x1a]]
    %v1087 = vstv %s1086
    %v1088 = vmul.f32 %v42, %v1087
    %s1089 = sld [smem:[#allocation2 + $0x9a]]
    %v1090 = vstv %s1089
    %v1091 = vmul.f32 %v43, %v1090
    %v1092 = vadd.f32 %v1088, %v1091
    %s1093 = sld [smem:[#allocation2 + $0x11a]]
    %v1094 = vstv %s1093
    %v1095 = vmul.f32 %v44, %v1094
    %v1096 = vadd.f32 %v1092, %v1095
    %s1097 = sld [smem:[#allocation2 + $0x19a]]
    %v1098 = vstv %s1097
    %v1099 = vmul.f32 %v45, %v1098
    %v1100 = vadd.f32 %v1096, %v1099
    %v1101 = vmul.f32 %v1100, 0.5
    %v1102 = vmul.f32 %v1100, 0.044715
    %v1103 = vmul.f32 %v1102, %v1100
    %v1104 = vmul.f32 %v1103, %v1100
    %v1105 = vadd.f32 %v1100, %v1104
    %v1106 = vmul.f32 %v1105, 0.7978846
    %v1107 = vtanh.pop %v1106
    %v1108 = vadd.f32 %v1107, 1.0
    %v1109 = vmul.f32 %v1101, %v1108
    %s1110 = sld [smem:[#allocation5 + $0xd00]]
    %v1111 = vstv %s1110
    %v1112 = vmul.f32 %v1109, %v1111
    %v1113 = vadd.f32 %v1073, %v1112
    %s1114 = sld [smem:[#allocation5 + $0xd01]]
    %v1115 = vstv %s1114
    %v1116 = vmul.f32 %v1109, %v1115
    %v1117 = vadd.f32 %v1077, %v1116
    %s1118 = sld [smem:[#allocation5 + $0xd02]]
    %v1119 = vstv %s1118
    %v1120 = vmul.f32 %v1109, %v1119
    %v1121 = vadd.f32 %v1081, %v1120
    %s1122 = sld [smem:[#allocation5 + $0xd03]]
    %v1123 = vstv %s1122
    %v1124 = vmul.f32 %v1109, %v1123
    %v1125 = vadd.f32 %v1085, %v1124
    %s1126 = sld [smem:[#allocation2 + $0x1b]]
    %v1127 = vstv %s1126
    %v1128 = vmul.f32 %v42, %v1127
    %s1129 = sld [smem:[#allocation2 + $0x9b]]
    %v1130 = vstv %s1129
    %v1131 = vmul.f32 %v43, %v1130
    %v1132 = vadd.f32 %v1128, %v1131
    %s1133 = sld [smem:[#allocation2 + $0x11b]]
    %v1134 = vstv %s1133
    %v1135 = vmul.f32 %v44, %v1134
    %v1136 = vadd.f32 %v1132, %v1135
    %s1137 = sld [smem:[#allocation2 + $0x19b]]
    %v1138 = vstv %s1137
    %v1139 = vmul.f32 %v45, %v1138
    %v1140 = vadd.f32 %v1136, %v1139
    %v1141 = vmul.f32 %v1140, 0.5
    %v1142 = vmul.f32 %v1140, 0.044715
    %v1143 = vmul.f32 %v1142, %v1140
    %v1144 = vmul.f32 %v1143, %v1140
    %v1145 = vadd.f32 %v1140, %v1144
    %v1146 = vmul.f32 %v1145, 0.7978846
    %v1147 = vtanh.pop %v1146
    %v1148 = vadd.f32 %v1147, 1.0
    %v1149 = vmul.f32 %v1141, %v1148
    %s1150 = sld [smem:[#allocation5 + $0xd80]]
    %v1151 = vstv %s1150
    %v1152 = vmul.f32 %v1149, %v1151
    %v1153 = vadd.f32 %v1113, %v1152
    %s1154 = sld [smem:[#allocation5 + $0xd81]]
    %v1155 = vstv %s1154
    %v1156 = vmul.f32 %v1149, %v1155
    %v1157 = vadd.f32 %v1117, %v1156
    %s1158 = sld [smem:[#allocation5 + $0xd82]]
    %v1159 = vstv %s1158
    %v1160 = vmul.f32 %v1149, %v1159
    %v1161 = vadd.f32 %v1121, %v1160
    %s1162 = sld [smem:[#allocation5 + $0xd83]]
    %v1163 = vstv %s1162
    %v1164 = vmul.f32 %v1149, %v1163
    %v1165 = vadd.f32 %v1125, %v1164
    %s1166 = sld [smem:[#allocation2 + $0x1c]]
    %v1167 = vstv %s1166
    %v1168 = vmul.f32 %v42, %v1167
    %s1169 = sld [smem:[#allocation2 + $0x9c]]
    %v1170 = vstv %s1169
    %v1171 = vmul.f32 %v43, %v1170
    %v1172 = vadd.f32 %v1168, %v1171
    %s1173 = sld [smem:[#allocation2 + $0x11c]]
    %v1174 = vstv %s1173
    %v1175 = vmul.f32 %v44, %v1174
    %v1176 = vadd.f32 %v1172, %v1175
    %s1177 = sld [smem:[#allocation2 + $0x19c]]
    %v1178 = vstv %s1177
    %v1179 = vmul.f32 %v45, %v1178
    %v1180 = vadd.f32 %v1176, %v1179
    %v1181 = vmul.f32 %v1180, 0.5
    %v1182 = vmul.f32 %v1180, 0.044715
    %v1183 = vmul.f32 %v1182, %v1180
    %v1184 = vmul.f32 %v1183, %v1180
    %v1185 = vadd.f32 %v1180, %v1184
    %v1186 = vmul.f32 %v1185, 0.7978846
    %v1187 = vtanh.pop %v1186
    %v1188 = vadd.f32 %v1187, 1.0
    %v1189 = vmul.f32 %v1181, %v1188
    %s1190 = sld [smem:[#allocation5 + $0xe00]]
    %v1191 = vstv %s1190
    %v1192 = vmul.f32 %v1189, %v1191
    %v1193 = vadd.f32 %v1153, %v1192
    %s1194 = sld [smem:[#allocation5 + $0xe01]]
    %v1195 = vstv %s1194
    %v1196 = vmul.f32 %v1189, %v1195
    %v1197 = vadd.f32 %v1157, %v1196
    %s1198 = sld [smem:[#allocation5 + $0xe02]]
    %v1199 = vstv %s1198
    %v1200 = vmul.f32 %v1189, %v1199
    %v1201 = vadd.f32 %v1161, %v1200
    %s1202 = sld [smem:[#allocation5 + $0xe03]]
    %v1203 = vstv %s1202
    %v1204 = vmul.f32 %v1189, %v1203
    %v1205 = vadd.f32 %v1165, %v1204
    %s1206 = sld [smem:[#allocation2 + $0x1d]]
    %v1207 = vstv %s1206
    %v1208 = vmul.f32 %v42, %v1207
    %s1209 = sld [smem:[#allocation2 + $0x9d]]
    %v1210 = vstv %s1209
    %v1211 = vmul.f32 %v43, %v1210
    %v1212 = vadd.f32 %v1208, %v1211
    %s1213 = sld [smem:[#allocation2 + $0x11d]]
    %v1214 = vstv %s1213
    %v1215 = vmul.f32 %v44, %v1214
    %v1216 = vadd.f32 %v1212, %v1215
    %s1217 = sld [smem:[#allocation2 + $0x19d]]
    %v1218 = vstv %s1217
    %v1219 = vmul.f32 %v45, %v1218
    %v1220 = vadd.f32 %v1216, %v1219
    %v1221 = vmul.f32 %v1220, 0.5
    %v1222 = vmul.f32 %v1220, 0.044715
    %v1223 = vmul.f32 %v1222, %v1220
    %v1224 = vmul.f32 %v1223, %v1220
    %v1225 = vadd.f32 %v1220, %v1224
    %v1226 = vmul.f32 %v1225, 0.7978846
    %v1227 = vtanh.pop %v1226
    %v1228 = vadd.f32 %v1227, 1.0
    %v1229 = vmul.f32 %v1221, %v1228
    %s1230 = sld [smem:[#allocation5 + $0xe80]]
    %v1231 = vstv %s1230
    %v1232 = vmul.f32 %v1229, %v1231
    %v1233 = vadd.f32 %v1193, %v1232
    %s1234 = sld [smem:[#allocation5 + $0xe81]]
    %v1235 = vstv %s1234
    %v1236 = vmul.f32 %v1229, %v1235
    %v1237 = vadd.f32 %v1197, %v1236
    %s1238 = sld [smem:[#allocation5 + $0xe82]]
    %v1239 = vstv %s1238
    %v1240 = vmul.f32 %v1229, %v1239
    %v1241 = vadd.f32 %v1201, %v1240
    %s1242 = sld [smem:[#allocation5 + $0xe83]]
    %v1243 = vstv %s1242
    %v1244 = vmul.f32 %v1229, %v1243
    %v1245 = vadd.f32 %v1205, %v1244
    %s1246 = sld [smem:[#allocation2 + $0x1e]]
    %v1247 = vstv %s1246
    %v1248 = vmul.f32 %v42, %v1247
    %s1249 = sld [smem:[#allocation2 + $0x9e]]
    %v1250 = vstv %s1249
    %v1251 = vmul.f32 %v43, %v1250
    %v1252 = vadd.f32 %v1248, %v1251
    %s1253 = sld [smem:[#allocation2 + $0x11e]]
    %v1254 = vstv %s1253
    %v1255 = vmul.f32 %v44, %v1254
    %v1256 = vadd.f32 %v1252, %v1255
    %s1257 = sld [smem:[#allocation2 + $0x19e]]
    %v1258 = vstv %s1257
    %v1259 = vmul.f32 %v45, %v1258
    %v1260 = vadd.f32 %v1256, %v1259
    %v1261 = vmul.f32 %v1260, 0.5
    %v1262 = vmul.f32 %v1260, 0.044715
    %v1263 = vmul.f32 %v1262, %v1260
    %v1264 = vmul.f32 %v1263, %v1260
    %v1265 = vadd.f32 %v1260, %v1264
    %v1266 = vmul.f32 %v1265, 0.7978846
    %v1267 = vtanh.pop %v1266
    %v1268 = vadd.f32 %v1267, 1.0
    %v1269 = vmul.f32 %v1261, %v1268
    %s1270 = sld [smem:[#allocation5 + $0xf00]]
    %v1271 = vstv %s1270
    %v1272 = vmul.f32 %v1269, %v1271
    %v1273 = vadd.f32 %v1233, %v1272
    %s1274 = sld [smem:[#allocation5 + $0xf01]]
    %v1275 = vstv %s1274
    %v1276 = vmul.f32 %v1269, %v1275
    %v1277 = vadd.f32 %v1237, %v1276
    %s1278 = sld [smem:[#allocation5 + $0xf02]]
    %v1279 = vstv %s1278
    %v1280 = vmul.f32 %v1269, %v1279
    %v1281 = vadd.f32 %v1241, %v1280
    %s1282 = sld [smem:[#allocation5 + $0xf03]]
    %v1283 = vstv %s1282
    %v1284 = vmul.f32 %v1269, %v1283
    %v1285 = vadd.f32 %v1245, %v1284
    %s1286 = sld [smem:[#allocation2 + $0x1f]]
    %v1287 = vstv %s1286
    %v1288 = vmul.f32 %v42, %v1287
    %s1289 = sld [smem:[#allocation2 + $0x9f]]
    %v1290 = vstv %s1289
    %v1291 = vmul.f32 %v43, %v1290
    %v1292 = vadd.f32 %v1288, %v1291
    %s1293 = sld [smem:[#allocation2 + $0x11f]]
    %v1294 = vstv %s1293
    %v1295 = vmul.f32 %v44, %v1294
    %v1296 = vadd.f32 %v1292, %v1295
    %s1297 = sld [smem:[#allocation2 + $0x19f]]
    %v1298 = vstv %s1297
    %v1299 = vmul.f32 %v45, %v1298
    %v1300 = vadd.f32 %v1296, %v1299
    %v1301 = vmul.f32 %v1300, 0.5
    %v1302 = vmul.f32 %v1300, 0.044715
    %v1303 = vmul.f32 %v1302, %v1300
    %v1304 = vmul.f32 %v1303, %v1300
    %v1305 = vadd.f32 %v1300, %v1304
    %v1306 = vmul.f32 %v1305, 0.7978846
    %v1307 = vtanh.pop %v1306
    %v1308 = vadd.f32 %v1307, 1.0
    %v1309 = vmul.f32 %v1301, %v1308
    %s1310 = sld [smem:[#allocation5 + $0xf80]]
    %v1311 = vstv %s1310
    %v1312 = vmul.f32 %v1309, %v1311
    %v1313 = vadd.f32 %v1273, %v1312
    %s1314 = sld [smem:[#allocation5 + $0xf81]]
    %v1315 = vstv %s1314
    %v1316 = vmul.f32 %v1309, %v1315
    %v1317 = vadd.f32 %v1277, %v1316
    %s1318 = sld [smem:[#allocation5 + $0xf82]]
    %v1319 = vstv %s1318
    %v1320 = vmul.f32 %v1309, %v1319
    %v1321 = vadd.f32 %v1281, %v1320
    %s1322 = sld [smem:[#allocation5 + $0xf83]]
    %v1323 = vstv %s1322
    %v1324 = vmul.f32 %v1309, %v1323
    %v1325 = vadd.f32 %v1285, %v1324
    %v1326 = vmul.f32 %v1313, 0.5
    %v1327 = vtanh.pop %v1326
    %v1328 = vadd.f32 %v1327, 1.0
    %v1329 = vmul.f32 %v1328, 0.5
    %v1330 = vmul.f32 %v42, %v1329
    %1331 = vst [vmem:[#allocation7] sm:$0x3] %v1330
    %v1332 = vmul.f32 %v1317, 0.5
    %v1333 = vtanh.pop %v1332
    %v1334 = vadd.f32 %v1333, 1.0
    %v1335 = vmul.f32 %v1334, 0.5
    %v1336 = vmul.f32 %v43, %v1335
    %s1337 = scalar_lea.vmem [#allocation7], 2
    %1338 = vst [vmem:[%s1337] sm:$0x3] %v1336
    %v1339 = vmul.f32 %v1321, 0.5
    %v1340 = vtanh.pop %v1339
    %v1341 = vadd.f32 %v1340, 1.0
    %v1342 = vmul.f32 %v1341, 0.5
    %v1343 = vmul.f32 %v44, %v1342
    %s1344 = scalar_lea.vmem [#allocation7], 4
    %1345 = vst [vmem:[%s1344] sm:$0x3] %v1343
    %v1346 = vmul.f32 %v1325, 0.5
    %v1347 = vtanh.pop %v1346
    %v1348 = vadd.f32 %v1347, 1.0
    %v1349 = vmul.f32 %v1348, 0.5
    %v1350 = vmul.f32 %v45, %v1349
    %s1351 = scalar_lea.vmem [#allocation7], 6
    %1352 = vst [vmem:[%s1351] sm:$0x3] %v1350
    // Predicated region
    $region22: #{tpu_custom_call.1} parent=1 // pred_check
      _
    $region23: #{tpu_custom_call.1} parent=1 // pred_check_branch
      %1354 = sbr.rel (0) target = $region25
    $region24: #{tpu_custom_call.1} parent=1 // pred_region
      %s1356 = ssub.s32 128, 128
      %1357 = vsyncadd [#allocation3], %s1356
      %s1358 = sshll.u32 [#allocation7], 4
      %s1359 = int_to_ptr.vmem [resolvable:$true] %s1358
      %1364 = dma.vmem_to_hbm [thread:$0]  %s1359, 128, %s3, [#allocation3], 32, 32, 2
    $region25: #{tpu_custom_call.1} parent=1 // pred_fallthru
      _
    // Predicated region
    $region26: #{tpu_custom_call.1} parent=1 // pred_check
      _
    $region27: #{tpu_custom_call.1} parent=1 // pred_check_branch
      %1366 = sbr.rel (0) target = $region29
    $region28: #{tpu_custom_call.1} parent=1 // pred_region
      %1367 = dma.done [#allocation3], 128
    $region29: #{tpu_custom_call.1} parent=1 // pred_fallthru
      _
    %1368 = vsyncpa [#allocation3], 1
    %1369 = vsyncpa [#allocation4], 1
    %1370 = vsyncpa [#allocation6], 1

</llo_original>
